<compile_context>
chip_gen: v7x
topology: tpu7x:2x2x1
jax: 0.10.0
libtpu: 0.0.40
codegen_flags: <defaults>
</compile_context>

<pallas_src>
import jax
import jax.numpy as jnp
import numpy as np
from jax import lax
from jax.experimental import pallas as pl
from jax.experimental.pallas import tpu as pltpu


def _round_up(x, m):
    return ((x + m - 1) // m) * m


def _vmem_capacity_bytes():
    """Physical VMEM of the current generation (conservative fallback)."""
    try:
        return int(pltpu.get_tpu_info().vmem_capacity_bytes)
    except Exception:
        return 64 * 1024 * 1024      # v7x-sized fallback is the safe choice


def _pick_tiling(S, ni, nj, vec_bytes, n_rc, budget_bytes):
    """Jointly pick (tile_i, s_block).

    Largest atom-i tile (multiple of 32, <= 512 sublanes, dividing ni) and the
    largest shift block dividing S such that the double-buffered output blocks
    fit `budget_bytes`.  Raises instead of silently overflowing VMEM.
    """
    per_pair = 3 * vec_bytes + 4 + 1            # vec + sod(f32) + level(int8)
    ti_cands = [t for t in range(32, min(ni, 512) + 1, 32) if ni % t == 0]
    ti_cands = sorted(ti_cands, reverse=True) or [ni]
    for ti in ti_cands:
        per_shift = ti * nj * per_pair + n_rc * ti * 4
        if 2 * per_shift > budget_bytes:
            continue
        best = 1
        for cand in range(1, S + 1):
            if S % cand == 0 and 2 * cand * per_shift <= budget_bytes:
                best = cand
        return ti, best
    raise ValueError(
        f"Neighbor output blocks do not fit the VMEM budget ({budget_bytes} B) "
        f"even at tile_i=32, s_block=1 (nj={nj}); reduce atom count or cutoffs.")


def _make_neighbor_kernel(ti, nj, s_block, rc2_list, big_sod=1e30):
    """Kernel closure over i-tile size, lane count, shift-block size, cutoffs^2."""
    n_rc = len(rc2_list)

    def kernel(sft_ref, zero_ref, cel_ref, pos_row_ref, pos_col_ref,
               vec_ref, sod_ref, level_ref, *counts_refs):
        b = pl.program_id(0)     # batch index        (parallel)
        it = pl.program_id(1)    # atom-i tile index  (parallel)
        sb = pl.program_id(2)    # shift-block index  (arbitrary: counts accum)

        # counts outputs are resident across the shift-block axis -> init once.
        @pl.when(sb == 0)
        def _():
            for cref in counts_refs:
                cref[...] = jnp.zeros_like(cref)

        # i == j pattern for the current i-tile (absolute atom indices), hoisted.
        i0 = it * ti
        ii = lax.broadcasted_iota(jnp.int32, (ti, nj), 0) + i0
        jj = lax.broadcasted_iota(jnp.int32, (ti, nj), 1)
        diag = ii == jj

        # hoisted loads: per-component position rows/cols and cell scalars.
        rows = [pos_row_ref[0, k] for k in range(3)]     # (1, nj)  lanes = j
        cols = [pos_col_ref[0, k] for k in range(3)]     # (ti, 1)  sublanes = i
        cel = [cel_ref[b, m] for m in range(9)]          # SMEM scalars

        def shift_step(sl, counts):
            sg = sb * s_block + sl                       # global shift index
            sod = jnp.zeros((ti, nj), jnp.float32)
            for k in range(3):                           # static unroll over xyz
                # shift displacement d_k = (sft[sg] @ cel[b])[k] (scalar math)
                d_k = (sft_ref[3 * sg + 0] * cel[0 * 3 + k]
                       + sft_ref[3 * sg + 1] * cel[1 * 3 + k]
                       + sft_ref[3 * sg + 2] * cel[2 * 3 + k])
                diff = (rows[k] + d_k) - cols[k]         # (ti, nj): vec_k[i, j]
                vec_ref[0, sl, k, :, :] = diff.astype(vec_ref.dtype)
                sod = sod + diff * diff
            sod_ref[0, sl, :, :] = sod

            # self-pair exclusion applied ONCE per shift: bias diagonal sod
            # past every cutoff at the zero shift.
            is_zero = zero_ref[sg] != 0
            sod_m = jnp.where(jnp.logical_and(diag, is_zero), big_sod, sod)

            # packed "cutoff level": number of (sorted, nested) cutoffs holding
            # the pair.  mask for rcs[idx] == (level >= n_rc - idx).
            level = jnp.zeros((ti, nj), jnp.int32)
            new_counts = []
            for idx in range(n_rc):
                mi = (sod_m <= rc2_list[idx]).astype(jnp.int32)
                level = level + mi
                # lane-axis (XLU) reduce -> per-atom neighbor count contribution
                new_counts.append(counts[idx]
                                  + jnp.sum(mi, axis=1, keepdims=True))
            level_ref[0, sl, :, :] = level.astype(jnp.int8)
            return tuple(new_counts)

        counts0 = tuple(jnp.zeros((ti, 1), jnp.int32) for _ in range(n_rc))
        if s_block <= 8:
            # small blocks: static unroll (full LLO visibility, tiny code)
            counts = counts0
            for sl in range(s_block):
                counts = shift_step(sl, counts)
        else:
            # large blocks: bounded live ranges, modest unroll
            counts = lax.fori_loop(0, s_block, shift_step, counts0, unroll=2)

        for idx in range(n_rc):
            counts_refs[idx][0, :, :] = counts_refs[idx][0, :, :] + counts[idx]

    return kernel


def masks_from_level(level, num_cutoffs):
    """Decode packed int8 level array into per-(sorted)-cutoff boolean masks."""
    return tuple(level >= (num_cutoffs - idx) for idx in range(num_cutoffs))


def neighbor_forward(pos_xyz, cel_mat, sft, rcs, *, vec_dtype=jnp.bfloat16,
                     s_block=None, tile_i=None, vmem_budget_bytes=None):
    """Pallas equivalent of Neighbor.forward.

    pos_xyz: (B, N, 3) f32 positions
    cel_mat: (B, 3, 3) f32 cell matrices (rows = lattice vectors)
    sft:     (S, 3) i32 periodic shift multipliers (must contain the zero shift)
    rcs:     cutoff radii (one Coo2Neighbor/Lil2Neighbor pair each; sorted internally)

    Returns (vec, sod, level, counts) where NI/NJ are padded atom counts:
      vec    : (B, S, 3, NI, NJ) vec_dtype -- coo2_vec_sod vectors (dense form)
      sod    : (B, S, NI, NJ)    f32       -- squared distances
      level  : (B, S, NI, NJ)    int8      -- packed cutoff masks (see masks_from_level)
      counts : tuple of K (B, N) int32     -- per-atom neighbor counts (LIL row lens)
    Padded rows/cols (index >= N) carry far-away sentinel data, excluded from masks.
    """
    B, N, _ = pos_xyz.shape
    S = sft.shape[0]
    rcs_sorted = tuple(sorted(float(rc) for rc in rcs))
    K = len(rcs_sorted)
    rc2_list = [rc * rc for rc in rcs_sorted]

    # lane/sublane padding: nj to 128 lanes; ni to 32 sublanes (LCM of the
    # f32 (8,128), bf16 (16,128) and int8 (32,128) native tiles).
    ni = _round_up(N, 32)
    nj = _round_up(N, 128)

    vec_bytes = jnp.dtype(vec_dtype).itemsize
    vmem_cap = _vmem_capacity_bytes()
    if vmem_budget_bytes is None:
        # ~44 MiB output-block budget on 128-MiB v5e/v6e, ~22 MiB on 64-MiB v7x
        vmem_budget_bytes = int(vmem_cap * 0.35)
    ti_auto, sb_auto = _pick_tiling(S, ni, nj, vec_bytes, K, vmem_budget_bytes)
    ti = tile_i if tile_i is not None else ti_auto
    s_block = s_block if s_block is not None else sb_auto
    assert ni % ti == 0 and ti % 32 == 0, "tile_i must be a mult of 32 dividing NI"
    assert S % s_block == 0, "s_block must divide the number of shifts"
    n_it = ni // ti
    n_sblk = S // s_block

    # actually enforce the budget on the compiler's scoped VMEM limit
    out_block_bytes = s_block * ti * nj * (3 * vec_bytes + 4 + 1) + K * ti * 4
    in_block_bytes = 3 * nj * 4 + 3 * ti * 4
    vmem_need = 2 * (out_block_bytes + in_block_bytes)          # double-buffered
    vmem_limit = max(16 << 20, _round_up(vmem_need + (4 << 20), 1 << 20))
    vmem_limit = min(vmem_limit, vmem_cap)

    # --- layout plumbing + tiny scalar tables (wrapper-side, cheap) ----------
    pos_t = jnp.transpose(pos_xyz, (0, 2, 1)).astype(jnp.float32)   # (B, 3, N)
    # far-away sentinels keep padded atoms outside every cutoff
    pos_row = jnp.full((B, 3, 1, nj), 1e8, jnp.float32)
    pos_row = pos_row.at[:, :, 0, :N].set(pos_t)                    # lanes = j
    pos_col = jnp.full((B, 3, ni, 1), -1e8, jnp.float32)
    pos_col = pos_col.at[:, :, :N, 0].set(pos_t)                    # sublanes = i

    sft_flat = sft.astype(jnp.float32).reshape(-1)                  # (3*S,) 1D SMEM
    zero = (jnp.sum(jnp.abs(sft), axis=-1) == 0).astype(jnp.int32)  # (S,)
    cel_flat = cel_mat.reshape(B, 9).astype(jnp.float32)            # (B, 9)

    out_shape = tuple(
        [jax.ShapeDtypeStruct((B, S, 3, ni, nj), vec_dtype),
         jax.ShapeDtypeStruct((B, S, ni, nj), jnp.float32),
         jax.ShapeDtypeStruct((B, S, ni, nj), jnp.int8)]
        + [jax.ShapeDtypeStruct((B, ni, 1), jnp.int32)] * K)

    smem_spec = pl.BlockSpec(memory_space=pltpu.MemorySpace.SMEM)
    in_specs = [
        smem_spec,                                                      # sft (flat)
        smem_spec,                                                      # zero flags
        smem_spec,                                                      # cell mats
        pl.BlockSpec((1, 3, 1, nj), lambda b, it, sb: (b, 0, 0, 0)),    # pos_row
        pl.BlockSpec((1, 3, ti, 1), lambda b, it, sb: (b, 0, it, 0)),   # pos_col
    ]
    out_specs = tuple(
        [pl.BlockSpec((1, s_block, 3, ti, nj),
                      lambda b, it, sb: (b, sb, 0, it, 0)),             # vec
         pl.BlockSpec((1, s_block, ti, nj),
                      lambda b, it, sb: (b, sb, it, 0)),                # sod
         pl.BlockSpec((1, s_block, ti, nj),
                      lambda b, it, sb: (b, sb, it, 0))]                # level
        + [pl.BlockSpec((1, ti, 1), lambda b, it, sb: (b, it, 0))] * K)  # counts

    kernel = _make_neighbor_kernel(ti, nj, s_block, rc2_list)
    outs = pl.pallas_call(
        kernel,
        out_shape=out_shape,
        grid=(B, n_it, n_sblk),
        in_specs=in_specs,
        out_specs=out_specs,
        compiler_params=pltpu.CompilerParams(
            dimension_semantics=("parallel", "parallel", "arbitrary"),
            vmem_limit_bytes=int(vmem_limit)),
    )(sft_flat, zero, cel_flat, pos_row, pos_col)

    vec, sod, level = outs[0], outs[1], outs[2]
    counts = tuple(c[:, :N, 0] for c in outs[3:])   # tiny slice/squeeze

    # TODO(synk): full coo_to_lil padded index lists / COO compaction require
    # dynamic-shape argsort/scatter with no clean static-shape Pallas TPU
    # equivalent; the packed level array + per-atom counts are the summary.
    return vec, sod, level, counts


if __name__ == "__main__":
    B, N, S = 2, 128, 3
    rcs = (2.0, 3.5)                      # one Coo2Neighbor/Lil2Neighbor per cutoff

    key = jax.random.PRNGKey(0)
    kp, _ = jax.random.split(key)
    box = jnp.array([6.0, 6.5], dtype=jnp.float32)
    pos = jax.random.uniform(kp, (B, N, 3), dtype=jnp.float32) * box[:, None, None]
    cel = jnp.stack([jnp.eye(3, dtype=jnp.float32) * box[b] for b in range(B)])
    sft = jnp.array([[0, 0, 0], [1, 0, 0], [-1, 0, 0]], dtype=jnp.int32)

    vec, sod, level, counts = neighbor_forward(pos, cel, sft, rcs)
    jax.block_until_ready((vec, sod, level, counts))

    # --- reference in plain JAX ---------------------------------------------
    sft_f = sft.astype(jnp.float32)
    disp = jnp.einsum('sm,bmk->bsk', sft_f, cel)                        # (B,S,3)
    q = pos[:, None, :, :] + disp[:, :, None, :]                        # (B,S,Nj,3)
    vec_ref = q[:, :, None, :, :] - pos[:, None, :, None, :]            # (B,S,Ni,Nj,3)
    sod_ref = jnp.sum(vec_ref ** 2, axis=-1)                            # (B,S,Ni,Nj)
    vec_ref_t = jnp.transpose(vec_ref, (0, 1, 4, 2, 3))                 # (B,S,3,Ni,Nj)

    # (padding is a no-op at N=128, but slice anyway for generality)
    vec_c = vec[:, :, :, :N, :N].astype(jnp.float32)
    sod_c = sod[:, :, :N, :N]
    level_c = level[:, :, :N, :N]

    # vec is stored in bf16 (arith in f32) -> looser tolerance on vec only
    np.testing.assert_allclose(np.asarray(vec_c), np.asarray(vec_ref_t),
                               rtol=1e-2, atol=2e-2)
    np.testing.assert_allclose(np.asarray(sod_c), np.asarray(sod_ref),
                               rtol=1e-5, atol=1e-4)

    diag = jnp.eye(N, dtype=bool)
    zero_shift = (jnp.sum(jnp.abs(sft), axis=-1) == 0)
    self_pair = diag[None, None] & zero_shift[None, :, None, None]
    masks = masks_from_level(level_c, len(rcs))
    for rc, m, c in zip(sorted(rcs), masks, counts):
        m_ref = (sod_ref <= rc * rc) & jnp.logical_not(self_pair)
        assert np.array_equal(np.asarray(m), np.asarray(m_ref))
        c_ref = jnp.sum(m_ref, axis=(1, 3))
        assert np.array_equal(np.asarray(c), np.asarray(c_ref))

    print("KERNEL_OK")
</pallas_src>

<mosaic_0001>
module attributes {stable_mosaic.version = 11 : i64} {
  func.func @kernel(%arg0: i32, %arg1: i32, %arg2: i32, %arg3: memref<9xf32, #tpu.memory_space<smem>>, %arg4: memref<3xi32, #tpu.memory_space<smem>>, %arg5: memref<2x9xf32, #tpu.memory_space<smem>>, %arg6: memref<1x3x1x128xf32, #tpu.memory_space<vmem>>, %arg7: memref<1x3x128x1xf32, #tpu.memory_space<vmem>>, %arg8: memref<1x3x3x128x128xbf16, #tpu.memory_space<vmem>>, %arg9: memref<1x3x128x128xf32, #tpu.memory_space<vmem>>, %arg10: memref<1x3x128x128xi8, #tpu.memory_space<vmem>>, %arg11: memref<1x128x1xi32, #tpu.memory_space<vmem>>, %arg12: memref<1x128x1xi32, #tpu.memory_space<vmem>>) attributes {dimension_semantics = [#tpu.dimension_semantics<parallel>, #tpu.dimension_semantics<parallel>, #tpu.dimension_semantics<arbitrary>], iteration_bounds = array<i64: 2, 1, 1>, scalar_prefetch = 0 : i64, scratch_operands = 0 : i64, tpu.core_type = #tpu.core_type<tc>, window_params = [{transform_indices = @transform_0, window_bounds = array<i64: 9>}, {transform_indices = @transform_1, window_bounds = array<i64: 3>}, {transform_indices = @transform_2, window_bounds = array<i64: 2, 9>}, {transform_indices = @transform_3, window_bounds = array<i64: 1, 3, 1, 128>}, {transform_indices = @transform_4, window_bounds = array<i64: 1, 3, 128, 1>}, {transform_indices = @transform_5, window_bounds = array<i64: 1, 3, 3, 128, 128>}, {transform_indices = @transform_6, window_bounds = array<i64: 1, 3, 128, 128>}, {transform_indices = @transform_7, window_bounds = array<i64: 1, 3, 128, 128>}, {transform_indices = @transform_8, window_bounds = array<i64: 1, 128, 1>}, {transform_indices = @transform_9, window_bounds = array<i64: 1, 128, 1>}]} {
    %c0_i32 = arith.constant 0 : i32
    %0 = arith.cmpi eq, %arg2, %c0_i32 : i32
    %1 = arith.extui %0 : i1 to i32
    %c0_i32_0 = arith.constant 0 : i32
    %2 = arith.cmpi ne, %1, %c0_i32_0 : i32
    scf.if %2 {
      %c0_i32_188 = arith.constant 0 : i32
      %401 = vector.broadcast %c0_i32_188 : i32 to vector<1x128x1xi32>
      %c0_189 = arith.constant 0 : index
      %c0_190 = arith.constant 0 : index
      %c0_191 = arith.constant 0 : index
      %402 = vector.load %arg11[%c0_189, %c0_190, %c0_191] : memref<1x128x1xi32, #tpu.memory_space<vmem>>, vector<1x128x1xi32>
      tpu.vector_store %arg11[%c0_189, %c0_190, %c0_191], %401 {strides = array<i32>} : memref<1x128x1xi32, #tpu.memory_space<vmem>>, vector<1x128x1xi32>,
      %c0_i32_192 = arith.constant 0 : i32
      %403 = vector.broadcast %c0_i32_192 : i32 to vector<1x128x1xi32>
      %c0_193 = arith.constant 0 : index
      %c0_194 = arith.constant 0 : index
      %c0_195 = arith.constant 0 : index
      %404 = vector.load %arg12[%c0_193, %c0_194, %c0_195] : memref<1x128x1xi32, #tpu.memory_space<vmem>>, vector<1x128x1xi32>
      tpu.vector_store %arg12[%c0_193, %c0_194, %c0_195], %403 {strides = array<i32>} : memref<1x128x1xi32, #tpu.memory_space<vmem>>, vector<1x128x1xi32>,
    } else {
    }
    %c128_i32 = arith.constant 128 : i32
    %3 = arith.muli %arg1, %c128_i32 : i32
    %4 = tpu.iota {dimensions = array<i32: 0>} : vector<128x128xi32>
    %5 = vector.broadcast %3 : i32 to vector<128x128xi32>
    %6 = arith.addi %4, %5 : vector<128x128xi32>
    %7 = tpu.iota {dimensions = array<i32: 1>} : vector<128x128xi32>
    %8 = arith.cmpi eq, %6, %7 : vector<128x128xi32>
    %c0 = arith.constant 0 : index
    %c0_1 = arith.constant 0 : index
    %c0_2 = arith.constant 0 : index
    %c0_3 = arith.constant 0 : index
    %9 = vector.load %arg6[%c0, %c0_1, %c0_2, %c0_3] : memref<1x3x1x128xf32, #tpu.memory_space<vmem>>, vector<1x1x1x128xf32>
    %10 = vector.shape_cast %9 : vector<1x1x1x128xf32> to vector<1x128xf32>
    %c0_4 = arith.constant 0 : index
    %c1 = arith.constant 1 : index
    %c0_5 = arith.constant 0 : index
    %c0_6 = arith.constant 0 : index
    %11 = vector.load %arg6[%c0_4, %c1, %c0_5, %c0_6] : memref<1x3x1x128xf32, #tpu.memory_space<vmem>>, vector<1x1x1x128xf32>
    %12 = vector.shape_cast %11 : vector<1x1x1x128xf32> to vector<1x128xf32>
    %c0_7 = arith.constant 0 : index
    %c2 = arith.constant 2 : index
    %c0_8 = arith.constant 0 : index
    %c0_9 = arith.constant 0 : index
    %13 = vector.load %arg6[%c0_7, %c2, %c0_8, %c0_9] : memref<1x3x1x128xf32, #tpu.memory_space<vmem>>, vector<1x1x1x128xf32>
    %14 = vector.shape_cast %13 : vector<1x1x1x128xf32> to vector<1x128xf32>
    %c0_10 = arith.constant 0 : index
    %c0_11 = arith.constant 0 : index
    %c0_12 = arith.constant 0 : index
    %c0_13 = arith.constant 0 : index
    %15 = vector.load %arg7[%c0_10, %c0_11, %c0_12, %c0_13] : memref<1x3x128x1xf32, #tpu.memory_space<vmem>>, vector<1x1x128x1xf32>
    %16 = vector.shape_cast %15 : vector<1x1x128x1xf32> to vector<128x1xf32>
    %c0_14 = arith.constant 0 : index
    %c1_15 = arith.constant 1 : index
    %c0_16 = arith.constant 0 : index
    %c0_17 = arith.constant 0 : index
    %17 = vector.load %arg7[%c0_14, %c1_15, %c0_16, %c0_17] : memref<1x3x128x1xf32, #tpu.memory_space<vmem>>, vector<1x1x128x1xf32>
    %18 = vector.shape_cast %17 : vector<1x1x128x1xf32> to vector<128x1xf32>
    %c0_18 = arith.constant 0 : index
    %c2_19 = arith.constant 2 : index
    %c0_20 = arith.constant 0 : index
    %c0_21 = arith.constant 0 : index
    %19 = vector.load %arg7[%c0_18, %c2_19, %c0_20, %c0_21] : memref<1x3x128x1xf32, #tpu.memory_space<vmem>>, vector<1x1x128x1xf32>
    %20 = vector.shape_cast %19 : vector<1x1x128x1xf32> to vector<128x1xf32>
    %21 = arith.index_cast %arg0 : i32 to index
    %c0_22 = arith.constant 0 : index
    %22 = memref.load %arg5[%21, %c0_22] : memref<2x9xf32, #tpu.memory_space<smem>>
    %23 = arith.index_cast %arg0 : i32 to index
    %c1_23 = arith.constant 1 : index
    %24 = memref.load %arg5[%23, %c1_23] : memref<2x9xf32, #tpu.memory_space<smem>>
    %25 = arith.index_cast %arg0 : i32 to index
    %c2_24 = arith.constant 2 : index
    %26 = memref.load %arg5[%25, %c2_24] : memref<2x9xf32, #tpu.memory_space<smem>>
    %27 = arith.index_cast %arg0 : i32 to index
    %c3 = arith.constant 3 : index
    %28 = memref.load %arg5[%27, %c3] : memref<2x9xf32, #tpu.memory_space<smem>>
    %29 = arith.index_cast %arg0 : i32 to index
    %c4 = arith.constant 4 : index
    %30 = memref.load %arg5[%29, %c4] : memref<2x9xf32, #tpu.memory_space<smem>>
    %31 = arith.index_cast %arg0 : i32 to index
    %c5 = arith.constant 5 : index
    %32 = memref.load %arg5[%31, %c5] : memref<2x9xf32, #tpu.memory_space<smem>>
    %33 = arith.index_cast %arg0 : i32 to index
    %c6 = arith.constant 6 : index
    %34 = memref.load %arg5[%33, %c6] : memref<2x9xf32, #tpu.memory_space<smem>>
    %35 = arith.index_cast %arg0 : i32 to index
    %c7 = arith.constant 7 : index
    %36 = memref.load %arg5[%35, %c7] : memref<2x9xf32, #tpu.memory_space<smem>>
    %37 = arith.index_cast %arg0 : i32 to index
    %c8 = arith.constant 8 : index
    %38 = memref.load %arg5[%37, %c8] : memref<2x9xf32, #tpu.memory_space<smem>>
    %c0_i32_25 = arith.constant 0 : i32
    %39 = vector.broadcast %c0_i32_25 : i32 to vector<128x1xi32>
    %c0_i32_26 = arith.constant 0 : i32
    %40 = vector.broadcast %c0_i32_26 : i32 to vector<128x1xi32>
    %c3_i32 = arith.constant 3 : i32
    %41 = arith.muli %arg2, %c3_i32 : i32
    %c0_i32_27 = arith.constant 0 : i32
    %42 = arith.addi %41, %c0_i32_27 : i32
    %cst = arith.constant 0.000000e+00 : f32
    %43 = vector.broadcast %cst : f32 to vector<128x128xf32>
    %c3_i32_28 = arith.constant 3 : i32
    %44 = arith.muli %c3_i32_28, %42 : i32
    %c0_i32_29 = arith.constant 0 : i32
    %45 = arith.addi %44, %c0_i32_29 : i32
    %46 = arith.index_cast %45 : i32 to index
    %47 = memref.load %arg3[%46] : memref<9xf32, #tpu.memory_space<smem>>
    %48 = arith.mulf %47, %22 : f32
    %c3_i32_30 = arith.constant 3 : i32
    %49 = arith.muli %c3_i32_30, %42 : i32
    %c1_i32 = arith.constant 1 : i32
    %50 = arith.addi %49, %c1_i32 : i32
    %51 = arith.index_cast %50 : i32 to index
    %52 = memref.load %arg3[%51] : memref<9xf32, #tpu.memory_space<smem>>
    %53 = arith.mulf %52, %28 : f32
    %54 = arith.addf %48, %53 : f32
    %c3_i32_31 = arith.constant 3 : i32
    %55 = arith.muli %c3_i32_31, %42 : i32
    %c2_i32 = arith.constant 2 : i32
    %56 = arith.addi %55, %c2_i32 : i32
    %57 = arith.index_cast %56 : i32 to index
    %58 = memref.load %arg3[%57] : memref<9xf32, #tpu.memory_space<smem>>
    %59 = arith.mulf %58, %34 : f32
    %60 = arith.addf %54, %59 : f32
    %61 = vector.broadcast %60 : f32 to vector<1x128xf32>
    %62 = arith.addf %10, %61 : vector<1x128xf32>
    %63 = vector.broadcast %62 : vector<1x128xf32> to vector<128x128xf32>
    %64 = vector.broadcast %16 : vector<128x1xf32> to vector<128x128xf32>
    %65 = arith.subf %63, %64 : vector<128x128xf32>
    %66 = arith.truncf %65 : vector<128x128xf32> to vector<128x128xbf16>
    %c0_32 = arith.constant 0 : index
    %c0_33 = arith.constant 0 : index
    %c0_34 = arith.constant 0 : index
    %c0_35 = arith.constant 0 : index
    %c0_36 = arith.constant 0 : index
    %67 = vector.load %arg8[%c0_32, %c0_33, %c0_34, %c0_35, %c0_36] : memref<1x3x3x128x128xbf16, #tpu.memory_space<vmem>>, vector<1x1x1x128x128xbf16>
    %68 = vector.shape_cast %67 : vector<1x1x1x128x128xbf16> to vector<128x128xbf16>
    %69 = vector.shape_cast %66 : vector<128x128xbf16> to vector<1x1x1x128x128xbf16>
    tpu.vector_store %arg8[%c0_32, %c0_33, %c0_34, %c0_35, %c0_36], %69 {strides = array<i32>} : memref<1x3x3x128x128xbf16, #tpu.memory_space<vmem>>, vector<1x1x1x128x128xbf16>,
    %70 = arith.mulf %65, %65 : vector<128x128xf32>
    %71 = arith.addf %43, %70 : vector<128x128xf32>
    %c3_i32_37 = arith.constant 3 : i32
    %72 = arith.muli %c3_i32_37, %42 : i32
    %c0_i32_38 = arith.constant 0 : i32
    %73 = arith.addi %72, %c0_i32_38 : i32
    %74 = arith.index_cast %73 : i32 to index
    %75 = memref.load %arg3[%74] : memref<9xf32, #tpu.memory_space<smem>>
    %76 = arith.mulf %75, %24 : f32
    %c3_i32_39 = arith.constant 3 : i32
    %77 = arith.muli %c3_i32_39, %42 : i32
    %c1_i32_40 = arith.constant 1 : i32
    %78 = arith.addi %77, %c1_i32_40 : i32
    %79 = arith.index_cast %78 : i32 to index
    %80 = memref.load %arg3[%79] : memref<9xf32, #tpu.memory_space<smem>>
    %81 = arith.mulf %80, %30 : f32
    %82 = arith.addf %76, %81 : f32
    %c3_i32_41 = arith.constant 3 : i32
    %83 = arith.muli %c3_i32_41, %42 : i32
    %c2_i32_42 = arith.constant 2 : i32
    %84 = arith.addi %83, %c2_i32_42 : i32
    %85 = arith.index_cast %84 : i32 to index
    %86 = memref.load %arg3[%85] : memref<9xf32, #tpu.memory_space<smem>>
    %87 = arith.mulf %86, %36 : f32
    %88 = arith.addf %82, %87 : f32
    %89 = vector.broadcast %88 : f32 to vector<1x128xf32>
    %90 = arith.addf %12, %89 : vector<1x128xf32>
    %91 = vector.broadcast %90 : vector<1x128xf32> to vector<128x128xf32>
    %92 = vector.broadcast %18 : vector<128x1xf32> to vector<128x128xf32>
    %93 = arith.subf %91, %92 : vector<128x128xf32>
    %94 = arith.truncf %93 : vector<128x128xf32> to vector<128x128xbf16>
    %c0_43 = arith.constant 0 : index
    %c0_44 = arith.constant 0 : index
    %c1_45 = arith.constant 1 : index
    %c0_46 = arith.constant 0 : index
    %c0_47 = arith.constant 0 : index
    %95 = vector.load %arg8[%c0_43, %c0_44, %c1_45, %c0_46, %c0_47] : memref<1x3x3x128x128xbf16, #tpu.memory_space<vmem>>, vector<1x1x1x128x128xbf16>
    %96 = vector.shape_cast %95 : vector<1x1x1x128x128xbf16> to vector<128x128xbf16>
    %97 = vector.shape_cast %94 : vector<128x128xbf16> to vector<1x1x1x128x128xbf16>
    tpu.vector_store %arg8[%c0_43, %c0_44, %c1_45, %c0_46, %c0_47], %97 {strides = array<i32>} : memref<1x3x3x128x128xbf16, #tpu.memory_space<vmem>>, vector<1x1x1x128x128xbf16>,
    %98 = arith.mulf %93, %93 : vector<128x128xf32>
    %99 = arith.addf %71, %98 : vector<128x128xf32>
    %c3_i32_48 = arith.constant 3 : i32
    %100 = arith.muli %c3_i32_48, %42 : i32
    %c0_i32_49 = arith.constant 0 : i32
    %101 = arith.addi %100, %c0_i32_49 : i32
    %102 = arith.index_cast %101 : i32 to index
    %103 = memref.load %arg3[%102] : memref<9xf32, #tpu.memory_space<smem>>
    %104 = arith.mulf %103, %26 : f32
    %c3_i32_50 = arith.constant 3 : i32
    %105 = arith.muli %c3_i32_50, %42 : i32
    %c1_i32_51 = arith.constant 1 : i32
    %106 = arith.addi %105, %c1_i32_51 : i32
    %107 = arith.index_cast %106 : i32 to index
    %108 = memref.load %arg3[%107] : memref<9xf32, #tpu.memory_space<smem>>
    %109 = arith.mulf %108, %32 : f32
    %110 = arith.addf %104, %109 : f32
    %c3_i32_52 = arith.constant 3 : i32
    %111 = arith.muli %c3_i32_52, %42 : i32
    %c2_i32_53 = arith.constant 2 : i32
    %112 = arith.addi %111, %c2_i32_53 : i32
    %113 = arith.index_cast %112 : i32 to index
    %114 = memref.load %arg3[%113] : memref<9xf32, #tpu.memory_space<smem>>
    %115 = arith.mulf %114, %38 : f32
    %116 = arith.addf %110, %115 : f32
    %117 = vector.broadcast %116 : f32 to vector<1x128xf32>
    %118 = arith.addf %14, %117 : vector<1x128xf32>
    %119 = vector.broadcast %118 : vector<1x128xf32> to vector<128x128xf32>
    %120 = vector.broadcast %20 : vector<128x1xf32> to vector<128x128xf32>
    %121 = arith.subf %119, %120 : vector<128x128xf32>
    %122 = arith.truncf %121 : vector<128x128xf32> to vector<128x128xbf16>
    %c0_54 = arith.constant 0 : index
    %c0_55 = arith.constant 0 : index
    %c2_56 = arith.constant 2 : index
    %c0_57 = arith.constant 0 : index
    %c0_58 = arith.constant 0 : index
    %123 = vector.load %arg8[%c0_54, %c0_55, %c2_56, %c0_57, %c0_58] : memref<1x3x3x128x128xbf16, #tpu.memory_space<vmem>>, vector<1x1x1x128x128xbf16>
    %124 = vector.shape_cast %123 : vector<1x1x1x128x128xbf16> to vector<128x128xbf16>
    %125 = vector.shape_cast %122 : vector<128x128xbf16> to vector<1x1x1x128x128xbf16>
    tpu.vector_store %arg8[%c0_54, %c0_55, %c2_56, %c0_57, %c0_58], %125 {strides = array<i32>} : memref<1x3x3x128x128xbf16, #tpu.memory_space<vmem>>, vector<1x1x1x128x128xbf16>,
    %126 = arith.mulf %121, %121 : vector<128x128xf32>
    %127 = arith.addf %99, %126 : vector<128x128xf32>
    %c0_59 = arith.constant 0 : index
    %c0_60 = arith.constant 0 : index
    %c0_61 = arith.constant 0 : index
    %c0_62 = arith.constant 0 : index
    %128 = vector.load %arg9[%c0_59, %c0_60, %c0_61, %c0_62] : memref<1x3x128x128xf32, #tpu.memory_space<vmem>>, vector<1x1x128x128xf32>
    %129 = vector.shape_cast %128 : vector<1x1x128x128xf32> to vector<128x128xf32>
    %130 = vector.shape_cast %127 : vector<128x128xf32> to vector<1x1x128x128xf32>
    tpu.vector_store %arg9[%c0_59, %c0_60, %c0_61, %c0_62], %130 {strides = array<i32>} : memref<1x3x128x128xf32, #tpu.memory_space<vmem>>, vector<1x1x128x128xf32>,
    %131 = arith.index_cast %42 : i32 to index
    %132 = memref.load %arg4[%131] : memref<3xi32, #tpu.memory_space<smem>>
    %c0_i32_63 = arith.constant 0 : i32
    %133 = arith.cmpi ne, %132, %c0_i32_63 : i32
    %134 = vector.broadcast %133 : i1 to vector<128x128xi1>
    %135 = arith.andi %8, %134 : vector<128x128xi1>
    %cst_64 = arith.constant 1.000000e+30 : f32
    %136 = vector.broadcast %cst_64 : f32 to vector<128x128xf32>
    %137 = arith.select %135, %136, %127 : vector<128x128xi1>, vector<128x128xf32>
    %c0_i32_65 = arith.constant 0 : i32
    %138 = vector.broadcast %c0_i32_65 : i32 to vector<128x128xi32>
    %cst_66 = arith.constant 4.000000e+00 : f32
    %139 = vector.broadcast %cst_66 : f32 to vector<128x128xf32>
    %140 = arith.cmpf ole, %137, %139 : vector<128x128xf32>
    %141 = arith.extui %140 : vector<128x128xi1> to vector<128x128xi32>
    %142 = arith.addi %138, %141 : vector<128x128xi32>
    %cst_67 = arith.constant dense<0> : vector<128xi32>
    %143 = vector.multi_reduction <add>, %141, %cst_67 [1] : vector<128x128xi32> to vector<128xi32>
    %144 = vector.shape_cast %143 : vector<128xi32> to vector<128x1xi32>
    %145 = arith.addi %39, %144 : vector<128x1xi32>
    %cst_68 = arith.constant 1.225000e+01 : f32
    %146 = vector.broadcast %cst_68 : f32 to vector<128x128xf32>
    %147 = arith.cmpf ole, %137, %146 : vector<128x128xf32>
    %148 = arith.extui %147 : vector<128x128xi1> to vector<128x128xi32>
    %149 = arith.addi %142, %148 : vector<128x128xi32>
    %cst_69 = arith.constant dense<0> : vector<128xi32>
    %150 = vector.multi_reduction <add>, %148, %cst_69 [1] : vector<128x128xi32> to vector<128xi32>
    %151 = vector.shape_cast %150 : vector<128xi32> to vector<128x1xi32>
    %152 = arith.addi %40, %151 : vector<128x1xi32>
    %153 = arith.trunci %149 : vector<128x128xi32> to vector<128x128xi8>
    %c0_70 = arith.constant 0 : index
    %c0_71 = arith.constant 0 : index
    %c0_72 = arith.constant 0 : index
    %c0_73 = arith.constant 0 : index
    %154 = vector.load %arg10[%c0_70, %c0_71, %c0_72, %c0_73] : memref<1x3x128x128xi8, #tpu.memory_space<vmem>>, vector<1x1x128x128xi8>
    %155 = vector.shape_cast %154 : vector<1x1x128x128xi8> to vector<128x128xi8>
    %156 = vector.shape_cast %153 : vector<128x128xi8> to vector<1x1x128x128xi8>
    tpu.vector_store %arg10[%c0_70, %c0_71, %c0_72, %c0_73], %156 {strides = array<i32>} : memref<1x3x128x128xi8, #tpu.memory_space<vmem>>, vector<1x1x128x128xi8>,
    %c3_i32_74 = arith.constant 3 : i32
    %157 = arith.muli %arg2, %c3_i32_74 : i32
    %c1_i32_75 = arith.constant 1 : i32
    %158 = arith.addi %157, %c1_i32_75 : i32
    %cst_76 = arith.constant 0.000000e+00 : f32
    %159 = vector.broadcast %cst_76 : f32 to vector<128x128xf32>
    %c3_i32_77 = arith.constant 3 : i32
    %160 = arith.muli %c3_i32_77, %158 : i32
    %c0_i32_78 = arith.constant 0 : i32
    %161 = arith.addi %160, %c0_i32_78 : i32
    %162 = arith.index_cast %161 : i32 to index
    %163 = memref.load %arg3[%162] : memref<9xf32, #tpu.memory_space<smem>>
    %164 = arith.mulf %163, %22 : f32
    %c3_i32_79 = arith.constant 3 : i32
    %165 = arith.muli %c3_i32_79, %158 : i32
    %c1_i32_80 = arith.constant 1 : i32
    %166 = arith.addi %165, %c1_i32_80 : i32
    %167 = arith.index_cast %166 : i32 to index
    %168 = memref.load %arg3[%167] : memref<9xf32, #tpu.memory_space<smem>>
    %169 = arith.mulf %168, %28 : f32
    %170 = arith.addf %164, %169 : f32
    %c3_i32_81 = arith.constant 3 : i32
    %171 = arith.muli %c3_i32_81, %158 : i32
    %c2_i32_82 = arith.constant 2 : i32
    %172 = arith.addi %171, %c2_i32_82 : i32
    %173 = arith.index_cast %172 : i32 to index
    %174 = memref.load %arg3[%173] : memref<9xf32, #tpu.memory_space<smem>>
    %175 = arith.mulf %174, %34 : f32
    %176 = arith.addf %170, %175 : f32
    %177 = vector.broadcast %176 : f32 to vector<1x128xf32>
    %178 = arith.addf %10, %177 : vector<1x128xf32>
    %179 = vector.broadcast %178 : vector<1x128xf32> to vector<128x128xf32>
    %180 = vector.broadcast %16 : vector<128x1xf32> to vector<128x128xf32>
    %181 = arith.subf %179, %180 : vector<128x128xf32>
    %182 = arith.truncf %181 : vector<128x128xf32> to vector<128x128xbf16>
    %c0_83 = arith.constant 0 : index
    %c1_84 = arith.constant 1 : index
    %c0_85 = arith.constant 0 : index
    %c0_86 = arith.constant 0 : index
    %c0_87 = arith.constant 0 : index
    %183 = vector.load %arg8[%c0_83, %c1_84, %c0_85, %c0_86, %c0_87] : memref<1x3x3x128x128xbf16, #tpu.memory_space<vmem>>, vector<1x1x1x128x128xbf16>
    %184 = vector.shape_cast %183 : vector<1x1x1x128x128xbf16> to vector<128x128xbf16>
    %185 = vector.shape_cast %182 : vector<128x128xbf16> to vector<1x1x1x128x128xbf16>
    tpu.vector_store %arg8[%c0_83, %c1_84, %c0_85, %c0_86, %c0_87], %185 {strides = array<i32>} : memref<1x3x3x128x128xbf16, #tpu.memory_space<vmem>>, vector<1x1x1x128x128xbf16>,
    %186 = arith.mulf %181, %181 : vector<128x128xf32>
    %187 = arith.addf %159, %186 : vector<128x128xf32>
    %c3_i32_88 = arith.constant 3 : i32
    %188 = arith.muli %c3_i32_88, %158 : i32
    %c0_i32_89 = arith.constant 0 : i32
    %189 = arith.addi %188, %c0_i32_89 : i32
    %190 = arith.index_cast %189 : i32 to index
    %191 = memref.load %arg3[%190] : memref<9xf32, #tpu.memory_space<smem>>
    %192 = arith.mulf %191, %24 : f32
    %c3_i32_90 = arith.constant 3 : i32
    %193 = arith.muli %c3_i32_90, %158 : i32
    %c1_i32_91 = arith.constant 1 : i32
    %194 = arith.addi %193, %c1_i32_91 : i32
    %195 = arith.index_cast %194 : i32 to index
    %196 = memref.load %arg3[%195] : memref<9xf32, #tpu.memory_space<smem>>
    %197 = arith.mulf %196, %30 : f32
    %198 = arith.addf %192, %197 : f32
    %c3_i32_92 = arith.constant 3 : i32
    %199 = arith.muli %c3_i32_92, %158 : i32
    %c2_i32_93 = arith.constant 2 : i32
    %200 = arith.addi %199, %c2_i32_93 : i32
    %201 = arith.index_cast %200 : i32 to index
    %202 = memref.load %arg3[%201] : memref<9xf32, #tpu.memory_space<smem>>
    %203 = arith.mulf %202, %36 : f32
    %204 = arith.addf %198, %203 : f32
    %205 = vector.broadcast %204 : f32 to vector<1x128xf32>
    %206 = arith.addf %12, %205 : vector<1x128xf32>
    %207 = vector.broadcast %206 : vector<1x128xf32> to vector<128x128xf32>
    %208 = vector.broadcast %18 : vector<128x1xf32> to vector<128x128xf32>
    %209 = arith.subf %207, %208 : vector<128x128xf32>
    %210 = arith.truncf %209 : vector<128x128xf32> to vector<128x128xbf16>
    %c0_94 = arith.constant 0 : index
    %c1_95 = arith.constant 1 : index
    %c1_96 = arith.constant 1 : index
    %c0_97 = arith.constant 0 : index
    %c0_98 = arith.constant 0 : index
    %211 = vector.load %arg8[%c0_94, %c1_95, %c1_96, %c0_97, %c0_98] : memref<1x3x3x128x128xbf16, #tpu.memory_space<vmem>>, vector<1x1x1x128x128xbf16>
    %212 = vector.shape_cast %211 : vector<1x1x1x128x128xbf16> to vector<128x128xbf16>
    %213 = vector.shape_cast %210 : vector<128x128xbf16> to vector<1x1x1x128x128xbf16>
    tpu.vector_store %arg8[%c0_94, %c1_95, %c1_96, %c0_97, %c0_98], %213 {strides = array<i32>} : memref<1x3x3x128x128xbf16, #tpu.memory_space<vmem>>, vector<1x1x1x128x128xbf16>,
    %214 = arith.mulf %209, %209 : vector<128x128xf32>
    %215 = arith.addf %187, %214 : vector<128x128xf32>
    %c3_i32_99 = arith.constant 3 : i32
    %216 = arith.muli %c3_i32_99, %158 : i32
    %c0_i32_100 = arith.constant 0 : i32
    %217 = arith.addi %216, %c0_i32_100 : i32
    %218 = arith.index_cast %217 : i32 to index
    %219 = memref.load %arg3[%218] : memref<9xf32, #tpu.memory_space<smem>>
    %220 = arith.mulf %219, %26 : f32
    %c3_i32_101 = arith.constant 3 : i32
    %221 = arith.muli %c3_i32_101, %158 : i32
    %c1_i32_102 = arith.constant 1 : i32
    %222 = arith.addi %221, %c1_i32_102 : i32
    %223 = arith.index_cast %222 : i32 to index
    %224 = memref.load %arg3[%223] : memref<9xf32, #tpu.memory_space<smem>>
    %225 = arith.mulf %224, %32 : f32
    %226 = arith.addf %220, %225 : f32
    %c3_i32_103 = arith.constant 3 : i32
    %227 = arith.muli %c3_i32_103, %158 : i32
    %c2_i32_104 = arith.constant 2 : i32
    %228 = arith.addi %227, %c2_i32_104 : i32
    %229 = arith.index_cast %228 : i32 to index
    %230 = memref.load %arg3[%229] : memref<9xf32, #tpu.memory_space<smem>>
    %231 = arith.mulf %230, %38 : f32
    %232 = arith.addf %226, %231 : f32
    %233 = vector.broadcast %232 : f32 to vector<1x128xf32>
    %234 = arith.addf %14, %233 : vector<1x128xf32>
    %235 = vector.broadcast %234 : vector<1x128xf32> to vector<128x128xf32>
    %236 = vector.broadcast %20 : vector<128x1xf32> to vector<128x128xf32>
    %237 = arith.subf %235, %236 : vector<128x128xf32>
    %238 = arith.truncf %237 : vector<128x128xf32> to vector<128x128xbf16>
    %c0_105 = arith.constant 0 : index
    %c1_106 = arith.constant 1 : index
    %c2_107 = arith.constant 2 : index
    %c0_108 = arith.constant 0 : index
    %c0_109 = arith.constant 0 : index
    %239 = vector.load %arg8[%c0_105, %c1_106, %c2_107, %c0_108, %c0_109] : memref<1x3x3x128x128xbf16, #tpu.memory_space<vmem>>, vector<1x1x1x128x128xbf16>
    %240 = vector.shape_cast %239 : vector<1x1x1x128x128xbf16> to vector<128x128xbf16>
    %241 = vector.shape_cast %238 : vector<128x128xbf16> to vector<1x1x1x128x128xbf16>
    tpu.vector_store %arg8[%c0_105, %c1_106, %c2_107, %c0_108, %c0_109], %241 {strides = array<i32>} : memref<1x3x3x128x128xbf16, #tpu.memory_space<vmem>>, vector<1x1x1x128x128xbf16>,
    %242 = arith.mulf %237, %237 : vector<128x128xf32>
    %243 = arith.addf %215, %242 : vector<128x128xf32>
    %c0_110 = arith.constant 0 : index
    %c1_111 = arith.constant 1 : index
    %c0_112 = arith.constant 0 : index
    %c0_113 = arith.constant 0 : index
    %244 = vector.load %arg9[%c0_110, %c1_111, %c0_112, %c0_113] : memref<1x3x128x128xf32, #tpu.memory_space<vmem>>, vector<1x1x128x128xf32>
    %245 = vector.shape_cast %244 : vector<1x1x128x128xf32> to vector<128x128xf32>
    %246 = vector.shape_cast %243 : vector<128x128xf32> to vector<1x1x128x128xf32>
    tpu.vector_store %arg9[%c0_110, %c1_111, %c0_112, %c0_113], %246 {strides = array<i32>} : memref<1x3x128x128xf32, #tpu.memory_space<vmem>>, vector<1x1x128x128xf32>,
    %247 = arith.index_cast %158 : i32 to index
    %248 = memref.load %arg4[%247] : memref<3xi32, #tpu.memory_space<smem>>
    %c0_i32_114 = arith.constant 0 : i32
    %249 = arith.cmpi ne, %248, %c0_i32_114 : i32
    %250 = vector.broadcast %249 : i1 to vector<128x128xi1>
    %251 = arith.andi %8, %250 : vector<128x128xi1>
    %cst_115 = arith.constant 1.000000e+30 : f32
    %252 = vector.broadcast %cst_115 : f32 to vector<128x128xf32>
    %253 = arith.select %251, %252, %243 : vector<128x128xi1>, vector<128x128xf32>
    %c0_i32_116 = arith.constant 0 : i32
    %254 = vector.broadcast %c0_i32_116 : i32 to vector<128x128xi32>
    %cst_117 = arith.constant 4.000000e+00 : f32
    %255 = vector.broadcast %cst_117 : f32 to vector<128x128xf32>
    %256 = arith.cmpf ole, %253, %255 : vector<128x128xf32>
    %257 = arith.extui %256 : vector<128x128xi1> to vector<128x128xi32>
    %258 = arith.addi %254, %257 : vector<128x128xi32>
    %cst_118 = arith.constant dense<0> : vector<128xi32>
    %259 = vector.multi_reduction <add>, %257, %cst_118 [1] : vector<128x128xi32> to vector<128xi32>
    %260 = vector.shape_cast %259 : vector<128xi32> to vector<128x1xi32>
    %261 = arith.addi %145, %260 : vector<128x1xi32>
    %cst_119 = arith.constant 1.225000e+01 : f32
    %262 = vector.broadcast %cst_119 : f32 to vector<128x128xf32>
    %263 = arith.cmpf ole, %253, %262 : vector<128x128xf32>
    %264 = arith.extui %263 : vector<128x128xi1> to vector<128x128xi32>
    %265 = arith.addi %258, %264 : vector<128x128xi32>
    %cst_120 = arith.constant dense<0> : vector<128xi32>
    %266 = vector.multi_reduction <add>, %264, %cst_120 [1] : vector<128x128xi32> to vector<128xi32>
    %267 = vector.shape_cast %266 : vector<128xi32> to vector<128x1xi32>
    %268 = arith.addi %152, %267 : vector<128x1xi32>
    %269 = arith.trunci %265 : vector<128x128xi32> to vector<128x128xi8>
    %c0_121 = arith.constant 0 : index
    %c1_122 = arith.constant 1 : index
    %c0_123 = arith.constant 0 : index
    %c0_124 = arith.constant 0 : index
    %270 = vector.load %arg10[%c0_121, %c1_122, %c0_123, %c0_124] : memref<1x3x128x128xi8, #tpu.memory_space<vmem>>, vector<1x1x128x128xi8>
    %271 = vector.shape_cast %270 : vector<1x1x128x128xi8> to vector<128x128xi8>
    %272 = vector.shape_cast %269 : vector<128x128xi8> to vector<1x1x128x128xi8>
    tpu.vector_store %arg10[%c0_121, %c1_122, %c0_123, %c0_124], %272 {strides = array<i32>} : memref<1x3x128x128xi8, #tpu.memory_space<vmem>>, vector<1x1x128x128xi8>,
    %c3_i32_125 = arith.constant 3 : i32
    %273 = arith.muli %arg2, %c3_i32_125 : i32
    %c2_i32_126 = arith.constant 2 : i32
    %274 = arith.addi %273, %c2_i32_126 : i32
    %cst_127 = arith.constant 0.000000e+00 : f32
    %275 = vector.broadcast %cst_127 : f32 to vector<128x128xf32>
    %c3_i32_128 = arith.constant 3 : i32
    %276 = arith.muli %c3_i32_128, %274 : i32
    %c0_i32_129 = arith.constant 0 : i32
    %277 = arith.addi %276, %c0_i32_129 : i32
    %278 = arith.index_cast %277 : i32 to index
    %279 = memref.load %arg3[%278] : memref<9xf32, #tpu.memory_space<smem>>
    %280 = arith.mulf %279, %22 : f32
    %c3_i32_130 = arith.constant 3 : i32
    %281 = arith.muli %c3_i32_130, %274 : i32
    %c1_i32_131 = arith.constant 1 : i32
    %282 = arith.addi %281, %c1_i32_131 : i32
    %283 = arith.index_cast %282 : i32 to index
    %284 = memref.load %arg3[%283] : memref<9xf32, #tpu.memory_space<smem>>
    %285 = arith.mulf %284, %28 : f32
    %286 = arith.addf %280, %285 : f32
    %c3_i32_132 = arith.constant 3 : i32
    %287 = arith.muli %c3_i32_132, %274 : i32
    %c2_i32_133 = arith.constant 2 : i32
    %288 = arith.addi %287, %c2_i32_133 : i32
    %289 = arith.index_cast %288 : i32 to index
    %290 = memref.load %arg3[%289] : memref<9xf32, #tpu.memory_space<smem>>
    %291 = arith.mulf %290, %34 : f32
    %292 = arith.addf %286, %291 : f32
    %293 = vector.broadcast %292 : f32 to vector<1x128xf32>
    %294 = arith.addf %10, %293 : vector<1x128xf32>
    %295 = vector.broadcast %294 : vector<1x128xf32> to vector<128x128xf32>
    %296 = vector.broadcast %16 : vector<128x1xf32> to vector<128x128xf32>
    %297 = arith.subf %295, %296 : vector<128x128xf32>
    %298 = arith.truncf %297 : vector<128x128xf32> to vector<128x128xbf16>
    %c0_134 = arith.constant 0 : index
    %c2_135 = arith.constant 2 : index
    %c0_136 = arith.constant 0 : index
    %c0_137 = arith.constant 0 : index
    %c0_138 = arith.constant 0 : index
    %299 = vector.load %arg8[%c0_134, %c2_135, %c0_136, %c0_137, %c0_138] : memref<1x3x3x128x128xbf16, #tpu.memory_space<vmem>>, vector<1x1x1x128x128xbf16>
    %300 = vector.shape_cast %299 : vector<1x1x1x128x128xbf16> to vector<128x128xbf16>
    %301 = vector.shape_cast %298 : vector<128x128xbf16> to vector<1x1x1x128x128xbf16>
    tpu.vector_store %arg8[%c0_134, %c2_135, %c0_136, %c0_137, %c0_138], %301 {strides = array<i32>} : memref<1x3x3x128x128xbf16, #tpu.memory_space<vmem>>, vector<1x1x1x128x128xbf16>,
    %302 = arith.mulf %297, %297 : vector<128x128xf32>
    %303 = arith.addf %275, %302 : vector<128x128xf32>
    %c3_i32_139 = arith.constant 3 : i32
    %304 = arith.muli %c3_i32_139, %274 : i32
    %c0_i32_140 = arith.constant 0 : i32
    %305 = arith.addi %304, %c0_i32_140 : i32
    %306 = arith.index_cast %305 : i32 to index
    %307 = memref.load %arg3[%306] : memref<9xf32, #tpu.memory_space<smem>>
    %308 = arith.mulf %307, %24 : f32
    %c3_i32_141 = arith.constant 3 : i32
    %309 = arith.muli %c3_i32_141, %274 : i32
    %c1_i32_142 = arith.constant 1 : i32
    %310 = arith.addi %309, %c1_i32_142 : i32
    %311 = arith.index_cast %310 : i32 to index
    %312 = memref.load %arg3[%311] : memref<9xf32, #tpu.memory_space<smem>>
    %313 = arith.mulf %312, %30 : f32
    %314 = arith.addf %308, %313 : f32
    %c3_i32_143 = arith.constant 3 : i32
    %315 = arith.muli %c3_i32_143, %274 : i32
    %c2_i32_144 = arith.constant 2 : i32
    %316 = arith.addi %315, %c2_i32_144 : i32
    %317 = arith.index_cast %316 : i32 to index
    %318 = memref.load %arg3[%317] : memref<9xf32, #tpu.memory_space<smem>>
    %319 = arith.mulf %318, %36 : f32
    %320 = arith.addf %314, %319 : f32
    %321 = vector.broadcast %320 : f32 to vector<1x128xf32>
    %322 = arith.addf %12, %321 : vector<1x128xf32>
    %323 = vector.broadcast %322 : vector<1x128xf32> to vector<128x128xf32>
    %324 = vector.broadcast %18 : vector<128x1xf32> to vector<128x128xf32>
    %325 = arith.subf %323, %324 : vector<128x128xf32>
    %326 = arith.truncf %325 : vector<128x128xf32> to vector<128x128xbf16>
    %c0_145 = arith.constant 0 : index
    %c2_146 = arith.constant 2 : index
    %c1_147 = arith.constant 1 : index
    %c0_148 = arith.constant 0 : index
    %c0_149 = arith.constant 0 : index
    %327 = vector.load %arg8[%c0_145, %c2_146, %c1_147, %c0_148, %c0_149] : memref<1x3x3x128x128xbf16, #tpu.memory_space<vmem>>, vector<1x1x1x128x128xbf16>
    %328 = vector.shape_cast %327 : vector<1x1x1x128x128xbf16> to vector<128x128xbf16>
    %329 = vector.shape_cast %326 : vector<128x128xbf16> to vector<1x1x1x128x128xbf16>
    tpu.vector_store %arg8[%c0_145, %c2_146, %c1_147, %c0_148, %c0_149], %329 {strides = array<i32>} : memref<1x3x3x128x128xbf16, #tpu.memory_space<vmem>>, vector<1x1x1x128x128xbf16>,
    %330 = arith.mulf %325, %325 : vector<128x128xf32>
    %331 = arith.addf %303, %330 : vector<128x128xf32>
    %c3_i32_150 = arith.constant 3 : i32
    %332 = arith.muli %c3_i32_150, %274 : i32
    %c0_i32_151 = arith.constant 0 : i32
    %333 = arith.addi %332, %c0_i32_151 : i32
    %334 = arith.index_cast %333 : i32 to index
    %335 = memref.load %arg3[%334] : memref<9xf32, #tpu.memory_space<smem>>
    %336 = arith.mulf %335, %26 : f32
    %c3_i32_152 = arith.constant 3 : i32
    %337 = arith.muli %c3_i32_152, %274 : i32
    %c1_i32_153 = arith.constant 1 : i32
    %338 = arith.addi %337, %c1_i32_153 : i32
    %339 = arith.index_cast %338 : i32 to index
    %340 = memref.load %arg3[%339] : memref<9xf32, #tpu.memory_space<smem>>
    %341 = arith.mulf %340, %32 : f32
    %342 = arith.addf %336, %341 : f32
    %c3_i32_154 = arith.constant 3 : i32
    %343 = arith.muli %c3_i32_154, %274 : i32
    %c2_i32_155 = arith.constant 2 : i32
    %344 = arith.addi %343, %c2_i32_155 : i32
    %345 = arith.index_cast %344 : i32 to index
    %346 = memref.load %arg3[%345] : memref<9xf32, #tpu.memory_space<smem>>
    %347 = arith.mulf %346, %38 : f32
    %348 = arith.addf %342, %347 : f32
    %349 = vector.broadcast %348 : f32 to vector<1x128xf32>
    %350 = arith.addf %14, %349 : vector<1x128xf32>
    %351 = vector.broadcast %350 : vector<1x128xf32> to vector<128x128xf32>
    %352 = vector.broadcast %20 : vector<128x1xf32> to vector<128x128xf32>
    %353 = arith.subf %351, %352 : vector<128x128xf32>
    %354 = arith.truncf %353 : vector<128x128xf32> to vector<128x128xbf16>
    %c0_156 = arith.constant 0 : index
    %c2_157 = arith.constant 2 : index
    %c2_158 = arith.constant 2 : index
    %c0_159 = arith.constant 0 : index
    %c0_160 = arith.constant 0 : index
    %355 = vector.load %arg8[%c0_156, %c2_157, %c2_158, %c0_159, %c0_160] : memref<1x3x3x128x128xbf16, #tpu.memory_space<vmem>>, vector<1x1x1x128x128xbf16>
    %356 = vector.shape_cast %355 : vector<1x1x1x128x128xbf16> to vector<128x128xbf16>
    %357 = vector.shape_cast %354 : vector<128x128xbf16> to vector<1x1x1x128x128xbf16>
    tpu.vector_store %arg8[%c0_156, %c2_157, %c2_158, %c0_159, %c0_160], %357 {strides = array<i32>} : memref<1x3x3x128x128xbf16, #tpu.memory_space<vmem>>, vector<1x1x1x128x128xbf16>,
    %358 = arith.mulf %353, %353 : vector<128x128xf32>
    %359 = arith.addf %331, %358 : vector<128x128xf32>
    %c0_161 = arith.constant 0 : index
    %c2_162 = arith.constant 2 : index
    %c0_163 = arith.constant 0 : index
    %c0_164 = arith.constant 0 : index
    %360 = vector.load %arg9[%c0_161, %c2_162, %c0_163, %c0_164] : memref<1x3x128x128xf32, #tpu.memory_space<vmem>>, vector<1x1x128x128xf32>
    %361 = vector.shape_cast %360 : vector<1x1x128x128xf32> to vector<128x128xf32>
    %362 = vector.shape_cast %359 : vector<128x128xf32> to vector<1x1x128x128xf32>
    tpu.vector_store %arg9[%c0_161, %c2_162, %c0_163, %c0_164], %362 {strides = array<i32>} : memref<1x3x128x128xf32, #tpu.memory_space<vmem>>, vector<1x1x128x128xf32>,
    %363 = arith.index_cast %274 : i32 to index
    %364 = memref.load %arg4[%363] : memref<3xi32, #tpu.memory_space<smem>>
    %c0_i32_165 = arith.constant 0 : i32
    %365 = arith.cmpi ne, %364, %c0_i32_165 : i32
    %366 = vector.broadcast %365 : i1 to vector<128x128xi1>
    %367 = arith.andi %8, %366 : vector<128x128xi1>
    %cst_166 = arith.constant 1.000000e+30 : f32
    %368 = vector.broadcast %cst_166 : f32 to vector<128x128xf32>
    %369 = arith.select %367, %368, %359 : vector<128x128xi1>, vector<128x128xf32>
    %c0_i32_167 = arith.constant 0 : i32
    %370 = vector.broadcast %c0_i32_167 : i32 to vector<128x128xi32>
    %cst_168 = arith.constant 4.000000e+00 : f32
    %371 = vector.broadcast %cst_168 : f32 to vector<128x128xf32>
    %372 = arith.cmpf ole, %369, %371 : vector<128x128xf32>
    %373 = arith.extui %372 : vector<128x128xi1> to vector<128x128xi32>
    %374 = arith.addi %370, %373 : vector<128x128xi32>
    %cst_169 = arith.constant dense<0> : vector<128xi32>
    %375 = vector.multi_reduction <add>, %373, %cst_169 [1] : vector<128x128xi32> to vector<128xi32>
    %376 = vector.shape_cast %375 : vector<128xi32> to vector<128x1xi32>
    %377 = arith.addi %261, %376 : vector<128x1xi32>
    %cst_170 = arith.constant 1.225000e+01 : f32
    %378 = vector.broadcast %cst_170 : f32 to vector<128x128xf32>
    %379 = arith.cmpf ole, %369, %378 : vector<128x128xf32>
    %380 = arith.extui %379 : vector<128x128xi1> to vector<128x128xi32>
    %381 = arith.addi %374, %380 : vector<128x128xi32>
    %cst_171 = arith.constant dense<0> : vector<128xi32>
    %382 = vector.multi_reduction <add>, %380, %cst_171 [1] : vector<128x128xi32> to vector<128xi32>
    %383 = vector.shape_cast %382 : vector<128xi32> to vector<128x1xi32>
    %384 = arith.addi %268, %383 : vector<128x1xi32>
    %385 = arith.trunci %381 : vector<128x128xi32> to vector<128x128xi8>
    %c0_172 = arith.constant 0 : index
    %c2_173 = arith.constant 2 : index
    %c0_174 = arith.constant 0 : index
    %c0_175 = arith.constant 0 : index
    %386 = vector.load %arg10[%c0_172, %c2_173, %c0_174, %c0_175] : memref<1x3x128x128xi8, #tpu.memory_space<vmem>>, vector<1x1x128x128xi8>
    %387 = vector.shape_cast %386 : vector<1x1x128x128xi8> to vector<128x128xi8>
    %388 = vector.shape_cast %385 : vector<128x128xi8> to vector<1x1x128x128xi8>
    tpu.vector_store %arg10[%c0_172, %c2_173, %c0_174, %c0_175], %388 {strides = array<i32>} : memref<1x3x128x128xi8, #tpu.memory_space<vmem>>, vector<1x1x128x128xi8>,
    %c0_176 = arith.constant 0 : index
    %c0_177 = arith.constant 0 : index
    %c0_178 = arith.constant 0 : index
    %389 = vector.load %arg11[%c0_176, %c0_177, %c0_178] : memref<1x128x1xi32, #tpu.memory_space<vmem>>, vector<1x128x1xi32>
    %390 = vector.shape_cast %389 : vector<1x128x1xi32> to vector<128x1xi32>
    %391 = arith.addi %390, %377 : vector<128x1xi32>
    %c0_179 = arith.constant 0 : index
    %c0_180 = arith.constant 0 : index
    %c0_181 = arith.constant 0 : index
    %392 = vector.load %arg11[%c0_179, %c0_180, %c0_181] : memref<1x128x1xi32, #tpu.memory_space<vmem>>, vector<1x128x1xi32>
    %393 = vector.shape_cast %392 : vector<1x128x1xi32> to vector<128x1xi32>
    %394 = vector.shape_cast %391 : vector<128x1xi32> to vector<1x128x1xi32>
    tpu.vector_store %arg11[%c0_179, %c0_180, %c0_181], %394 {strides = array<i32>} : memref<1x128x1xi32, #tpu.memory_space<vmem>>, vector<1x128x1xi32>,
    %c0_182 = arith.constant 0 : index
    %c0_183 = arith.constant 0 : index
    %c0_184 = arith.constant 0 : index
    %395 = vector.load %arg12[%c0_182, %c0_183, %c0_184] : memref<1x128x1xi32, #tpu.memory_space<vmem>>, vector<1x128x1xi32>
    %396 = vector.shape_cast %395 : vector<1x128x1xi32> to vector<128x1xi32>
    %397 = arith.addi %396, %384 : vector<128x1xi32>
    %c0_185 = arith.constant 0 : index
    %c0_186 = arith.constant 0 : index
    %c0_187 = arith.constant 0 : index
    %398 = vector.load %arg12[%c0_185, %c0_186, %c0_187] : memref<1x128x1xi32, #tpu.memory_space<vmem>>, vector<1x128x1xi32>
    %399 = vector.shape_cast %398 : vector<1x128x1xi32> to vector<128x1xi32>
    %400 = vector.shape_cast %397 : vector<128x1xi32> to vector<1x128x1xi32>
    tpu.vector_store %arg12[%c0_185, %c0_186, %c0_187], %400 {strides = array<i32>} : memref<1x128x1xi32, #tpu.memory_space<vmem>>, vector<1x128x1xi32>,
    return
  }
  func.func @transform_0(%arg0: i32, %arg1: i32, %arg2: i32) -> i32 {
    %c0_i32 = arith.constant 0 : i32
    %c0_i32_0 = arith.constant 0 : i32
    return %c0_i32 : i32
  }
  func.func @transform_1(%arg0: i32, %arg1: i32, %arg2: i32) -> i32 {
    %c0_i32 = arith.constant 0 : i32
    %c0_i32_0 = arith.constant 0 : i32
    return %c0_i32 : i32
  }
  func.func @transform_2(%arg0: i32, %arg1: i32, %arg2: i32) -> (i32, i32) {
    %c0_i32 = arith.constant 0 : i32
    %c0_i32_0 = arith.constant 0 : i32
    %c0_i32_1 = arith.constant 0 : i32
    return %c0_i32, %c0_i32_0 : i32, i32
  }
  func.func @transform_3(%arg0: i32, %arg1: i32, %arg2: i32) -> (i32, i32, i32, i32) {
    %c0_i32 = arith.constant 0 : i32
    %c0_i32_0 = arith.constant 0 : i32
    %c0_i32_1 = arith.constant 0 : i32
    %c0_i32_2 = arith.constant 0 : i32
    return %arg0, %c0_i32, %c0_i32_0, %c0_i32_1 : i32, i32, i32, i32
  }
  func.func @transform_4(%arg0: i32, %arg1: i32, %arg2: i32) -> (i32, i32, i32, i32) {
    %c0_i32 = arith.constant 0 : i32
    %c0_i32_0 = arith.constant 0 : i32
    %c0_i32_1 = arith.constant 0 : i32
    return %arg0, %c0_i32, %arg1, %c0_i32_0 : i32, i32, i32, i32
  }
  func.func @transform_5(%arg0: i32, %arg1: i32, %arg2: i32) -> (i32, i32, i32, i32, i32) {
    %c0_i32 = arith.constant 0 : i32
    %c0_i32_0 = arith.constant 0 : i32
    %c0_i32_1 = arith.constant 0 : i32
    return %arg0, %arg2, %c0_i32, %arg1, %c0_i32_0 : i32, i32, i32, i32, i32
  }
  func.func @transform_6(%arg0: i32, %arg1: i32, %arg2: i32) -> (i32, i32, i32, i32) {
    %c0_i32 = arith.constant 0 : i32
    %c0_i32_0 = arith.constant 0 : i32
    return %arg0, %arg2, %arg1, %c0_i32 : i32, i32, i32, i32
  }
  func.func @transform_7(%arg0: i32, %arg1: i32, %arg2: i32) -> (i32, i32, i32, i32) {
    %c0_i32 = arith.constant 0 : i32
    %c0_i32_0 = arith.constant 0 : i32
    return %arg0, %arg2, %arg1, %c0_i32 : i32, i32, i32, i32
  }
  func.func @transform_8(%arg0: i32, %arg1: i32, %arg2: i32) -> (i32, i32, i32) {
    %c0_i32 = arith.constant 0 : i32
    %c0_i32_0 = arith.constant 0 : i32
    return %arg0, %arg1, %c0_i32 : i32, i32, i32
  }
  func.func @transform_9(%arg0: i32, %arg1: i32, %arg2: i32) -> (i32, i32, i32) {
    %c0_i32 = arith.constant 0 : i32
    %c0_i32_0 = arith.constant 0 : i32
    return %arg0, %arg1, %c0_i32 : i32, i32, i32
  }
}

</mosaic_0001>

<llo_original>
// kernel: tpu_custom_call.1
$region0: #{tpu_custom_call.1}
  #allocation0 [shape = 'u32[]', space=smem, size = 0x4, offset = 0x4, fixed_abs, tag = 'smem constant byte address 0x4 - core index']
  #allocation1 [shape = 'u32[144,128]{1,0:T(1,128)}', space=vmem, size = 0x12000, scoped, tag = 'internal scratch']
  %s0 = inlined_call_operand.vmem [shape: f32[9], index: 0, kind: input, shape index: {}]
  %s1 = inlined_call_operand.vmem [shape: s32[3], index: 1, kind: input, shape index: {}]
  %s2 = inlined_call_operand.vmem [shape: f32[2,9], index: 2, kind: input, shape index: {}]
  %s3 = inlined_call_operand.vmem [shape: f32[2,3,1,128], index: 3, kind: input, shape index: {}]
  %s4 = inlined_call_operand.vmem [shape: f32[2,3,128,1], index: 4, kind: input, shape index: {}]
  %s5 = inlined_call_operand.hbm [shape: bf16[2,3,3,128,128], index: 5, kind: output, shape index: {0}]
  %s6 = inlined_call_operand.hbm [shape: f32[2,3,128,128], index: 6, kind: output, shape index: {1}]
  %s7 = inlined_call_operand.hbm [shape: s8[2,3,128,128], index: 7, kind: output, shape index: {2}]
  %s8 = inlined_call_operand.vmem [shape: s32[2,128,1], index: 8, kind: output, shape index: {3}]
  %s9 = inlined_call_operand.vmem [shape: s32[2,128,1], index: 9, kind: output, shape index: {4}]
  %10 = xla_tuple %s5, %s6, %s7, %s8, %s9
  %s11 = sld [smem:[#allocation0]]
  $region101: #{tpu_custom_call.1} parent=0
    _
  %s13 = ssub.s32 1, %s11
  %s14 = scalar_select 0, %s13, %s11
  $region1: #{tpu_custom_call.1} parent=0
    #allocation2 [shape = 'u8[512]{0}', space=smem, size = 0x200, scoped, tag = 'input window, operand 0, single buffered']
    #allocation3 [shape = 's32[2]{0}', space=sflag, size = 0x8, scoped, tag = 'scoped memory for tpu_custom_call.1']
    #allocation4 [shape = 's32[2]{0}', space=sflag, size = 0x8, scoped, tag = 'scoped memory for tpu_custom_call.1']
    #allocation5 [shape = 'u8[512]{0}', space=smem, size = 0x200, scoped, tag = 'input window, operand 1, single buffered']
    #allocation6 [shape = 's32[1]{0}', space=sflag, size = 0x4, scoped, tag = 'scoped memory for tpu_custom_call.1']
    #allocation7 [shape = 'u8[1024]{0}', space=smem, size = 0x400, scoped, tag = 'input window, operand 2, single buffered']
    #allocation8 [shape = 'u8[589824]{0}', space=vmem, size = 0x90000, scoped, tag = 'output window, operand 0']
    #allocation9 [shape = 'u8[393216]{0}', space=vmem, size = 0x60000, scoped, tag = 'output window, operand 1']
    #allocation10 [shape = 's32[2]{0}', space=sflag, size = 0x8, scoped, tag = 'scoped memory for tpu_custom_call.1']
    #allocation11 [shape = 'u8[98304]{0}', space=vmem, size = 0x18000, scoped, tag = 'output window, operand 2']
    %15 = vsyncpa [#allocation4], 0
    %16 = vsyncpa [#allocation6], 0
    %17 = vsyncpa [#allocation3], 0
    %s18 = scalar_lea.sflag [#allocation3], 1
    %19 = vsyncpa %s18, 0
    %20 = vsyncpa [#allocation10], 0
    %s21 = scalar_lea.sflag [#allocation10], 1
    %22 = vsyncpa %s21, 0
    loop: start=0, step=1, limit=4
    $region2: #{tpu_custom_call.1} parent=1 // loop_pre_header
      _
    $region3: #{tpu_custom_call.1} parent=1 // loop_header
      %s24 = sphi 0, %s28
      %p25 = scmp.ge.s32.totalorder %s24, 4
      %s31 = sphi 0, %s50
      %s32 = sphi 0, %s46
      %s33 = sphi 0, %s42
      %s34 = sphi 0, %s31
      %s35 = sphi 0, %s32
      %s36 = sphi 0, %s33
      %s37 = sphi 0, %s34
      %s38 = sphi 0, %s35
      %s39 = sphi 0, %s36
      %s51 = sphi 0, %s51
      %s53 = sphi 0, %s51
      %s54 = sphi 0, %s53
      %s68 = sphi 0, %s54
      %s72 = sphi 0, %s72
      %s74 = sphi 0, %s72
      %s75 = sphi 0, %s74
      %s89 = sphi 0, %s75
      %s93 = sphi 0, %s93
      %s95 = sphi 0, %s93
      %s96 = sphi 0, %s95
      %s110 = sphi 0, %s96
      %s116 = sphi 0, %s118
      %s119 = sphi 0, %s116
      %s120 = sphi 0, %s119
      %s136 = sphi 0, %s120
      %s144 = sphi 0, %s146
      %s147 = sphi 0, %s144
      %s148 = sphi 0, %s147
      %s164 = sphi 0, %s148
      %s174 = sphi 0, %s176
      %s177 = sphi 0, %s174
      %s178 = sphi 0, %s177
      %s194 = sphi 0, %s178
      %s204 = sphi 0, %s206
      %s207 = sphi 0, %s204
      %s208 = sphi 0, %s207
      %s224 = sphi 0, %s208
      %s234 = sphi 0, %s236
      %s237 = sphi 0, %s234
      %s238 = sphi 0, %s237
      %s254 = sphi 0, %s238
      %s262 = sphi 0, %s264
      %s265 = sphi 0, %s262
      %s266 = sphi 0, %s265
      %s282 = sphi 0, %s266
      %s290 = sphi 0, %s292
      %s293 = sphi 0, %s290
      %s294 = sphi 0, %s293
      %s310 = sphi 0, %s294
    $region4: #{tpu_custom_call.1} parent=1 // loop_header_branch
      %27 = sbr.rel (%p25) target = $region8
    $region5: #{tpu_custom_call.1} parent=1 // loop_body
      %s29 = ssub.s32 %s24, 1
      %s30 = ssub.s32 %s24, 2
      %s40 = sadd.s32 1, %s33
      %p41 = scmp.ge.s32.totalorder %s40, 1
      %s42 = scalar_select %p41, 0, %s40
      %s43 = sadd.s32 1, %s32
      %s44 = scalar_select %p41, %s43, %s32
      %p45 = scmp.ge.s32.totalorder %s44, 1
      %s46 = scalar_select %p45, 0, %s44
      %s47 = sadd.s32 1, %s31
      %s48 = scalar_select %p45, %s47, %s31
      %p49 = scmp.ge.s32.totalorder %s48, 2
      %s50 = scalar_select %p49, 0, %s48
      %s52 = sadd.s32 %s51, 1
      %p55 = scmp.eq.s32.totalorder %s24, 1
      %p56 = scmp.ne.s32.totalorder %s51, %s53
      %p57 = scmp.eq.s32.totalorder %s24, 0
      %p58 = por %p56, %p57
      %p59 = scmp.ne.s32.totalorder %s51, %s53
      %p60 = scmp.eq.s32.totalorder %s29, 1
      %p61 = por %p59, %p60
      %p62 = scmp.ne.s32.totalorder %s53, %s54
      %p63 = scmp.eq.s32.totalorder %s29, 0
      %p64 = por %p62, %p63
      %p65 = scmp.ne.s32.totalorder %s53, %s54
      %p66 = scmp.eq.s32.totalorder %s30, 1
      %p67 = por %p65, %p66
      %p69 = scmp.ne.s32.totalorder %s54, %s68
      %p70 = scmp.eq.s32.totalorder %s30, 0
      %p71 = por %p69, %p70
      %s73 = sadd.s32 %s72, 1
      %p76 = scmp.eq.s32.totalorder %s24, 1
      %p77 = scmp.ne.s32.totalorder %s72, %s74
      %p78 = scmp.eq.s32.totalorder %s24, 0
      %p79 = por %p77, %p78
      %p80 = scmp.ne.s32.totalorder %s72, %s74
      %p81 = scmp.eq.s32.totalorder %s29, 1
      %p82 = por %p80, %p81
      %p83 = scmp.ne.s32.totalorder %s74, %s75
      %p84 = scmp.eq.s32.totalorder %s29, 0
      %p85 = por %p83, %p84
      %p86 = scmp.ne.s32.totalorder %s74, %s75
      %p87 = scmp.eq.s32.totalorder %s30, 1
      %p88 = por %p86, %p87
      %p90 = scmp.ne.s32.totalorder %s75, %s89
      %p91 = scmp.eq.s32.totalorder %s30, 0
      %p92 = por %p90, %p91
      %s94 = sadd.s32 %s93, 1
      %p97 = scmp.eq.s32.totalorder %s24, 1
      %p98 = scmp.ne.s32.totalorder %s93, %s95
      %p99 = scmp.eq.s32.totalorder %s24, 0
      %p100 = por %p98, %p99
      %p101 = scmp.ne.s32.totalorder %s93, %s95
      %p102 = scmp.eq.s32.totalorder %s29, 1
      %p103 = por %p101, %p102
      %p104 = scmp.ne.s32.totalorder %s95, %s96
      %p105 = scmp.eq.s32.totalorder %s29, 0
      %p106 = por %p104, %p105
      %p107 = scmp.ne.s32.totalorder %s95, %s96
      %p108 = scmp.eq.s32.totalorder %s30, 1
      %p109 = por %p107, %p108
      %p111 = scmp.ne.s32.totalorder %s96, %s110
      %p112 = scmp.eq.s32.totalorder %s30, 0
      %p113 = por %p111, %p112
      %s114 = ssub.s32 %s31, %s50
      %p115 = scmp.eq.s32.totalorder %s114, 0
      %s117 = sadd.s32 %s116, 1
      %s118 = scalar_select %p115, %s116, %s117
      %p121 = pneg %p115
      %p122 = scmp.eq.s32.totalorder %s24, 1
      %p123 = por %p121, %p122
      %p124 = scmp.ne.s32.totalorder %s116, %s119
      %p125 = scmp.eq.s32.totalorder %s24, 0
      %p126 = por %p124, %p125
      %p127 = scmp.ne.s32.totalorder %s116, %s119
      %p128 = scmp.eq.s32.totalorder %s29, 1
      %p129 = por %p127, %p128
      %p130 = scmp.ne.s32.totalorder %s119, %s120
      %p131 = scmp.eq.s32.totalorder %s29, 0
      %p132 = por %p130, %p131
      %p133 = scmp.ne.s32.totalorder %s119, %s120
      %p134 = scmp.eq.s32.totalorder %s30, 1
      %p135 = por %p133, %p134
      %p137 = scmp.ne.s32.totalorder %s120, %s136
      %p138 = scmp.eq.s32.totalorder %s30, 0
      %p139 = por %p137, %p138
      %s140 = ssub.s32 %s31, %s50
      %s141 = ssub.s32 %s32, %s46
      %s142 = sor.u32 %s140, %s141
      %p143 = scmp.eq.s32.totalorder %s142, 0
      %s145 = sadd.s32 %s144, 1
      %s146 = scalar_select %p143, %s144, %s145
      %p149 = pneg %p143
      %p150 = scmp.eq.s32.totalorder %s24, 1
      %p151 = por %p149, %p150
      %p152 = scmp.ne.s32.totalorder %s144, %s147
      %p153 = scmp.eq.s32.totalorder %s24, 0
      %p154 = por %p152, %p153
      %p155 = scmp.ne.s32.totalorder %s144, %s147
      %p156 = scmp.eq.s32.totalorder %s29, 1
      %p157 = por %p155, %p156
      %p158 = scmp.ne.s32.totalorder %s147, %s148
      %p159 = scmp.eq.s32.totalorder %s29, 0
      %p160 = por %p158, %p159
      %p161 = scmp.ne.s32.totalorder %s147, %s148
      %p162 = scmp.eq.s32.totalorder %s30, 1
      %p163 = por %p161, %p162
      %p165 = scmp.ne.s32.totalorder %s148, %s164
      %p166 = scmp.eq.s32.totalorder %s30, 0
      %p167 = por %p165, %p166
      %s168 = ssub.s32 %s31, %s50
      %s169 = ssub.s32 %s33, %s42
      %s170 = sor.u32 %s168, %s169
      %s171 = ssub.s32 %s32, %s46
      %s172 = sor.u32 %s170, %s171
      %p173 = scmp.eq.s32.totalorder %s172, 0
      %s175 = sadd.s32 %s174, 1
      %s176 = scalar_select %p173, %s174, %s175
      %p179 = pneg %p173
      %p180 = scmp.eq.s32.totalorder %s24, 1
      %p181 = por %p179, %p180
      %p182 = scmp.ne.s32.totalorder %s174, %s177
      %p183 = scmp.eq.s32.totalorder %s24, 0
      %p184 = por %p182, %p183
      %p185 = scmp.ne.s32.totalorder %s174, %s177
      %p186 = scmp.eq.s32.totalorder %s29, 1
      %p187 = por %p185, %p186
      %p188 = scmp.ne.s32.totalorder %s177, %s178
      %p189 = scmp.eq.s32.totalorder %s29, 0
      %p190 = por %p188, %p189
      %p191 = scmp.ne.s32.totalorder %s177, %s178
      %p192 = scmp.eq.s32.totalorder %s30, 1
      %p193 = por %p191, %p192
      %p195 = scmp.ne.s32.totalorder %s178, %s194
      %p196 = scmp.eq.s32.totalorder %s30, 0
      %p197 = por %p195, %p196
      %s198 = ssub.s32 %s31, %s50
      %s199 = ssub.s32 %s33, %s42
      %s200 = sor.u32 %s198, %s199
      %s201 = ssub.s32 %s32, %s46
      %s202 = sor.u32 %s200, %s201
      %p203 = scmp.eq.s32.totalorder %s202, 0
      %s205 = sadd.s32 %s204, 1
      %s206 = scalar_select %p203, %s204, %s205
      %p209 = pneg %p203
      %p210 = scmp.eq.s32.totalorder %s24, 1
      %p211 = por %p209, %p210
      %p212 = scmp.ne.s32.totalorder %s204, %s207
      %p213 = scmp.eq.s32.totalorder %s24, 0
      %p214 = por %p212, %p213
      %p215 = scmp.ne.s32.totalorder %s204, %s207
      %p216 = scmp.eq.s32.totalorder %s29, 1
      %p217 = por %p215, %p216
      %p218 = scmp.ne.s32.totalorder %s207, %s208
      %p219 = scmp.eq.s32.totalorder %s29, 0
      %p220 = por %p218, %p219
      %p221 = scmp.ne.s32.totalorder %s207, %s208
      %p222 = scmp.eq.s32.totalorder %s30, 1
      %p223 = por %p221, %p222
      %p225 = scmp.ne.s32.totalorder %s208, %s224
      %p226 = scmp.eq.s32.totalorder %s30, 0
      %p227 = por %p225, %p226
      %s228 = ssub.s32 %s31, %s50
      %s229 = ssub.s32 %s33, %s42
      %s230 = sor.u32 %s228, %s229
      %s231 = ssub.s32 %s32, %s46
      %s232 = sor.u32 %s230, %s231
      %p233 = scmp.eq.s32.totalorder %s232, 0
      %s235 = sadd.s32 %s234, 1
      %s236 = scalar_select %p233, %s234, %s235
      %p239 = pneg %p233
      %p240 = scmp.eq.s32.totalorder %s24, 1
      %p241 = por %p239, %p240
      %p242 = scmp.ne.s32.totalorder %s234, %s237
      %p243 = scmp.eq.s32.totalorder %s24, 0
      %p244 = por %p242, %p243
      %p245 = scmp.ne.s32.totalorder %s234, %s237
      %p246 = scmp.eq.s32.totalorder %s29, 1
      %p247 = por %p245, %p246
      %p248 = scmp.ne.s32.totalorder %s237, %s238
      %p249 = scmp.eq.s32.totalorder %s29, 0
      %p250 = por %p248, %p249
      %p251 = scmp.ne.s32.totalorder %s237, %s238
      %p252 = scmp.eq.s32.totalorder %s30, 1
      %p253 = por %p251, %p252
      %p255 = scmp.ne.s32.totalorder %s238, %s254
      %p256 = scmp.eq.s32.totalorder %s30, 0
      %p257 = por %p255, %p256
      %s258 = ssub.s32 %s31, %s50
      %s259 = ssub.s32 %s32, %s46
      %s260 = sor.u32 %s258, %s259
      %p261 = scmp.eq.s32.totalorder %s260, 0
      %s263 = sadd.s32 %s262, 1
      %s264 = scalar_select %p261, %s262, %s263
      %p267 = pneg %p261
      %p268 = scmp.eq.s32.totalorder %s24, 1
      %p269 = por %p267, %p268
      %p270 = scmp.ne.s32.totalorder %s262, %s265
      %p271 = scmp.eq.s32.totalorder %s24, 0
      %p272 = por %p270, %p271
      %p273 = scmp.ne.s32.totalorder %s262, %s265
      %p274 = scmp.eq.s32.totalorder %s29, 1
      %p275 = por %p273, %p274
      %p276 = scmp.ne.s32.totalorder %s265, %s266
      %p277 = scmp.eq.s32.totalorder %s29, 0
      %p278 = por %p276, %p277
      %p279 = scmp.ne.s32.totalorder %s265, %s266
      %p280 = scmp.eq.s32.totalorder %s30, 1
      %p281 = por %p279, %p280
      %p283 = scmp.ne.s32.totalorder %s266, %s282
      %p284 = scmp.eq.s32.totalorder %s30, 0
      %p285 = por %p283, %p284
      %s286 = ssub.s32 %s31, %s50
      %s287 = ssub.s32 %s32, %s46
      %s288 = sor.u32 %s286, %s287
      %p289 = scmp.eq.s32.totalorder %s288, 0
      %s291 = sadd.s32 %s290, 1
      %s292 = scalar_select %p289, %s290, %s291
      %p295 = pneg %p289
      %p296 = scmp.eq.s32.totalorder %s24, 1
      %p297 = por %p295, %p296
      %p298 = scmp.ne.s32.totalorder %s290, %s293
      %p299 = scmp.eq.s32.totalorder %s24, 0
      %p300 = por %p298, %p299
      %p301 = scmp.ne.s32.totalorder %s290, %s293
      %p302 = scmp.eq.s32.totalorder %s29, 1
      %p303 = por %p301, %p302
      %p304 = scmp.ne.s32.totalorder %s293, %s294
      %p305 = scmp.eq.s32.totalorder %s29, 0
      %p306 = por %p304, %p305
      %p307 = scmp.ne.s32.totalorder %s293, %s294
      %p308 = scmp.eq.s32.totalorder %s30, 1
      %p309 = por %p307, %p308
      %p311 = scmp.ne.s32.totalorder %s294, %s310
      %p312 = scmp.eq.s32.totalorder %s30, 0
      %p313 = por %p311, %p312
      %p314 = scmp.le.s32.totalorder 1, %s24
      %p315 = scmp.lt.s32.totalorder %s24, 3
      %p316 = pnand %p314, %p315
      %p317 = pneg %p316
      // Predicated region
      $region9: #{tpu_custom_call.1} parent=5 // pred_check
        _
      $region10: #{tpu_custom_call.1} parent=5 // pred_check_branch
        %319 = sbr.rel (%p316) target = $region12
      $region11: #{tpu_custom_call.1} parent=5 // pred_region
        %s320 = ssub.s32 %s24, 1
        // Predicated region
        $region13: #{tpu_custom_call.1} parent=11 // pred_check
          %p321 = pneg %p64
        $region14: #{tpu_custom_call.1} parent=11 // pred_check_branch
          %323 = sbr.rel (%p321) target = $region16
        $region15: #{tpu_custom_call.1} parent=11 // pred_region
          %s325 = ssub.s32 16, 16
          %326 = vsyncadd [#allocation4], %s325
          %s328 = sshll.u32 %s0, 4
          %s329 = int_to_ptr.vmem [resolvable:$true] %s328
          %331 = dma.vmem_to_smem %s329, 16, [#allocation2], [#allocation4]
        $region16: #{tpu_custom_call.1} parent=11 // pred_fallthru
          _
        // Predicated region
        $region17: #{tpu_custom_call.1} parent=11 // pred_check
          %p332 = pneg %p85
        $region18: #{tpu_custom_call.1} parent=11 // pred_check_branch
          %334 = sbr.rel (%p332) target = $region20
        $region19: #{tpu_custom_call.1} parent=11 // pred_region
          %s336 = ssub.s32 16, 16
          %337 = vsyncadd [#allocation6], %s336
          %s339 = sshll.u32 %s1, 4
          %s340 = int_to_ptr.vmem [resolvable:$true] %s339
          %342 = dma.vmem_to_smem %s340, 16, [#allocation5], [#allocation6]
        $region20: #{tpu_custom_call.1} parent=11 // pred_fallthru
          _
        // Predicated region
        $region21: #{tpu_custom_call.1} parent=11 // pred_check
          %p343 = pneg %p106
        $region22: #{tpu_custom_call.1} parent=11 // pred_check_branch
          %345 = sbr.rel (%p343) target = $region24
        $region23: #{tpu_custom_call.1} parent=11 // pred_region
          %s347 = ssub.s32 32, 32
          %348 = vsyncadd [#allocation6], %s347
          %s350 = sshll.u32 %s2, 4
          %s351 = int_to_ptr.vmem [resolvable:$true] %s350
          %353 = dma.vmem_to_smem %s351, 32, [#allocation7], [#allocation6]
        $region24: #{tpu_custom_call.1} parent=11 // pred_fallthru
          _
      $region12: #{tpu_custom_call.1} parent=5 // pred_fallthru
        _
      %p354 = scmp.lt.s32.totalorder %s24, 2
      // Predicated region
      $region25: #{tpu_custom_call.1} parent=5 // pred_check
        %p355 = pneg %p354
      $region26: #{tpu_custom_call.1} parent=5 // pred_check_branch
        %357 = sbr.rel (%p355) target = $region28
      $region27: #{tpu_custom_call.1} parent=5 // pred_region
        // Predicated region
        $region29: #{tpu_custom_call.1} parent=27 // pred_check
          %p358 = pneg %p126
        $region30: #{tpu_custom_call.1} parent=27 // pred_check_branch
          %360 = sbr.rel (%p358) target = $region32
        $region31: #{tpu_custom_call.1} parent=27 // pred_region
          %p361 = scmp.lt.s32.totalorder %s31, 1
          %s362 = scalar_select %p361, %s31, 1
          %s363 = smul.addr %s362, 3
          %s364 = scalar_lea.vmem %s3, %s363
        $region32: #{tpu_custom_call.1} parent=27 // pred_fallthru
          _
        // Predicated region
        $region33: #{tpu_custom_call.1} parent=27 // pred_check
          %p365 = pneg %p154
        $region34: #{tpu_custom_call.1} parent=27 // pred_check_branch
          %367 = sbr.rel (%p365) target = $region36
        $region35: #{tpu_custom_call.1} parent=27 // pred_region
          %s368 = smul.u32 16, %s32
          %p369 = scmp.lt.s32.totalorder %s31, 1
          %s370 = scalar_select %p369, %s31, 1
          %p371 = scmp.lt.s32.totalorder %s368, 15
          %s372 = scalar_select %p371, %s368, 15
          %s373 = smul.addr %s370, 48
          %s374 = sadd.s32 %s372, %s373
          %s375 = smul.addr %s374, 8
          %s376 = scalar_lea.vmem %s4, %s375
          %s377 = smul.u32 16, %s32
        $region36: #{tpu_custom_call.1} parent=27 // pred_fallthru
          _
      $region28: #{tpu_custom_call.1} parent=5 // pred_fallthru
        _
      %p378 = scmp.le.s32.totalorder 1, %s24
      %p379 = scmp.lt.s32.totalorder %s24, 3
      %p380 = pnand %p378, %p379
      %p381 = pneg %p380
      // Predicated region
      $region37: #{tpu_custom_call.1} parent=5 // pred_check
        _
      $region38: #{tpu_custom_call.1} parent=5 // pred_check_branch
        %383 = sbr.rel (%p380) target = $region40
      $region39: #{tpu_custom_call.1} parent=5 // pred_region
        %s384 = ssub.s32 %s24, 1
        // Predicated region
        $region41: #{tpu_custom_call.1} parent=39 // pred_check
          %p385 = pneg %p64
        $region42: #{tpu_custom_call.1} parent=39 // pred_check_branch
          %387 = sbr.rel (%p385) target = $region44
        $region43: #{tpu_custom_call.1} parent=39 // pred_region
          %388 = dma.done [#allocation4], 16
        $region44: #{tpu_custom_call.1} parent=39 // pred_fallthru
          _
        // Predicated region
        $region45: #{tpu_custom_call.1} parent=39 // pred_check
          %p389 = pneg %p85
        $region46: #{tpu_custom_call.1} parent=39 // pred_check_branch
          %391 = sbr.rel (%p389) target = $region48
        $region47: #{tpu_custom_call.1} parent=39 // pred_region
          %392 = dma.done [#allocation6], 16
        $region48: #{tpu_custom_call.1} parent=39 // pred_fallthru
          _
        // Predicated region
        $region49: #{tpu_custom_call.1} parent=39 // pred_check
          %p393 = pneg %p106
        $region50: #{tpu_custom_call.1} parent=39 // pred_check_branch
          %395 = sbr.rel (%p393) target = $region52
        $region51: #{tpu_custom_call.1} parent=39 // pred_region
          %396 = dma.done [#allocation6], 32
        $region52: #{tpu_custom_call.1} parent=39 // pred_fallthru
          _
        %397 = sfence
        %p398 = pneg %p64
        %p399 = pneg %p61
        %p400 = pneg %p85
        %p401 = pneg %p82
        %p402 = pneg %p106
        %p403 = pneg %p103
        %p404 = scmp.lt.s32.totalorder %s34, 1
        %s405 = scalar_select %p404, %s34, 1
        %s406 = smul.addr %s405, 3
        %s407 = scalar_lea.vmem %s3, %s406
        %p408 = pneg %p132
        %p409 = pneg %p129
        %s410 = smul.u32 16, %s35
        %p411 = scmp.lt.s32.totalorder %s34, 1
        %s412 = scalar_select %p411, %s34, 1
        %p413 = scmp.lt.s32.totalorder %s410, 15
        %s414 = scalar_select %p413, %s410, 15
        %s415 = smul.addr %s412, 48
        %s416 = sadd.s32 %s414, %s415
        %s417 = smul.addr %s416, 8
        %s418 = scalar_lea.vmem %s4, %s417
        %p419 = pneg %p160
        %p420 = pneg %p157
        %p421 = pneg %p190
        %p422 = pneg %p187
        %s423 = sand.u32 %s177, 1
        %s424 = scalar_lea.sflag [#allocation3], %s423
        %s425 = sand.u32 %s177, 1
        %s426 = smul.addr %s425, 576
        %s427 = scalar_lea.vmem [#allocation8], %s426
        %p428 = pneg %p220
        %p429 = pneg %p217
        %s430 = sand.u32 %s29, 1
        %s431 = scalar_lea.sflag [#allocation10], %s430
        %s432 = sand.u32 %s207, 1
        %s433 = smul.addr %s432, 384
        %s434 = scalar_lea.vmem [#allocation9], %s433
        %p435 = pneg %p250
        %p436 = pneg %p247
        %s437 = sand.u32 %s29, 1
        %s438 = scalar_lea.sflag [#allocation10], %s437
        %s439 = sand.u32 %s237, 1
        %s440 = smul.addr %s439, 96
        %s441 = scalar_lea.vmem [#allocation11], %s440
        %p442 = pneg %p278
        %p443 = pneg %p275
        %s444 = smul.u32 16, %s35
        %p445 = scmp.lt.s32.totalorder %s34, 1
        %s446 = scalar_select %p445, %s34, 1
        %p447 = scmp.lt.s32.totalorder %s444, 15
        %s448 = scalar_select %p447, %s444, 15
        %s449 = smul.addr %s446, 16
        %s450 = sadd.s32 %s448, %s449
        %s451 = smul.addr %s450, 8
        %s452 = scalar_lea.vmem %s8, %s451
        %p453 = pneg %p306
        %p454 = pneg %p303
        %s455 = smul.u32 16, %s35
        %p456 = scmp.lt.s32.totalorder %s34, 1
        %s457 = scalar_select %p456, %s34, 1
        %p458 = scmp.lt.s32.totalorder %s455, 15
        %s459 = scalar_select %p458, %s455, 15
        %s460 = smul.addr %s457, 16
        %s461 = sadd.s32 %s459, %s460
        %s462 = smul.addr %s461, 8
        %s463 = scalar_lea.vmem %s9, %s462
        %p464 = scmp.lt.s32.totalorder %s34, 1
        %s465 = scalar_select %p464, %s34, 1
        %s466 = smul.addr %s465, 3
        %s467 = scalar_lea.vmem %s3, %s466
        %s468 = smul.u32 16, %s35
        %p469 = scmp.lt.s32.totalorder %s34, 1
        %s470 = scalar_select %p469, %s34, 1
        %p471 = scmp.lt.s32.totalorder %s468, 15
        %s472 = scalar_select %p471, %s468, 15
        %s473 = smul.addr %s470, 48
        %s474 = sadd.s32 %s472, %s473
        %s475 = smul.addr %s474, 8
        %s476 = scalar_lea.vmem %s4, %s475
        %s477 = smul.u32 16, %s35
        %s478 = smul.u32 3, %s36
        %s479 = smul.u32 8, %s35
        %s480 = smul.u32 3, %s36
        %s481 = smul.u32 16, %s35
        %s482 = smul.u32 3, %s36
        %s483 = smul.u32 4, %s35
        %s484 = smul.u32 16, %s35
        %p485 = scmp.lt.s32.totalorder %s34, 1
        %s486 = scalar_select %p485, %s34, 1
        %p487 = scmp.lt.s32.totalorder %s484, 15
        %s488 = scalar_select %p487, %s484, 15
        %s489 = smul.addr %s486, 16
        %s490 = sadd.s32 %s488, %s489
        %s491 = smul.addr %s490, 8
        %s492 = scalar_lea.vmem %s8, %s491
        %s493 = smul.u32 16, %s35
        %s494 = smul.u32 16, %s35
        %p495 = scmp.lt.s32.totalorder %s34, 1
        %s496 = scalar_select %p495, %s34, 1
        %p497 = scmp.lt.s32.totalorder %s494, 15
        %s498 = scalar_select %p497, %s494, 15
        %s499 = smul.addr %s496, 16
        %s500 = sadd.s32 %s498, %s499
        %s501 = smul.addr %s500, 8
        %s502 = scalar_lea.vmem %s9, %s501
        %s503 = smul.u32 16, %s35
        %p504 = scmp.eq.s32.totalorder %s36, 0
        // Predicated region
        $region53: #{tpu_custom_call.1} parent=39 // pred_check
          %p505 = pneg %p504
        $region54: #{tpu_custom_call.1} parent=39 // pred_check_branch
          %507 = sbr.rel (%p505) target = $region56
        $region55: #{tpu_custom_call.1} parent=39 // pred_region
          %vm508 = vcmask 7168
          %509 = vst.msk [vmem:[%s492] sm:$0xff] %vm508, 0
          %510 = vst.msk [vmem:[%s492 + $0x8] sm:$0xff] %vm508, 0
          %511 = vst.msk [vmem:[%s492 + $0x10] sm:$0xff] %vm508, 0
          %512 = vst.msk [vmem:[%s492 + $0x18] sm:$0xff] %vm508, 0
          %513 = vst.msk [vmem:[%s492 + $0x20] sm:$0xff] %vm508, 0
          %514 = vst.msk [vmem:[%s492 + $0x28] sm:$0xff] %vm508, 0
          %515 = vst.msk [vmem:[%s492 + $0x30] sm:$0xff] %vm508, 0
          %516 = vst.msk [vmem:[%s492 + $0x38] sm:$0xff] %vm508, 0
          %517 = vst.msk [vmem:[%s492 + $0x40] sm:$0xff] %vm508, 0
          %518 = vst.msk [vmem:[%s492 + $0x48] sm:$0xff] %vm508, 0
          %519 = vst.msk [vmem:[%s492 + $0x50] sm:$0xff] %vm508, 0
          %520 = vst.msk [vmem:[%s492 + $0x58] sm:$0xff] %vm508, 0
          %521 = vst.msk [vmem:[%s492 + $0x60] sm:$0xff] %vm508, 0
          %522 = vst.msk [vmem:[%s492 + $0x68] sm:$0xff] %vm508, 0
          %523 = vst.msk [vmem:[%s492 + $0x70] sm:$0xff] %vm508, 0
          %524 = vst.msk [vmem:[%s492 + $0x78] sm:$0xff] %vm508, 0
          %525 = vst.msk [vmem:[%s502] sm:$0xff] %vm508, 0
          %526 = vst.msk [vmem:[%s502 + $0x8] sm:$0xff] %vm508, 0
          %527 = vst.msk [vmem:[%s502 + $0x10] sm:$0xff] %vm508, 0
          %528 = vst.msk [vmem:[%s502 + $0x18] sm:$0xff] %vm508, 0
          %529 = vst.msk [vmem:[%s502 + $0x20] sm:$0xff] %vm508, 0
          %530 = vst.msk [vmem:[%s502 + $0x28] sm:$0xff] %vm508, 0
          %531 = vst.msk [vmem:[%s502 + $0x30] sm:$0xff] %vm508, 0
          %532 = vst.msk [vmem:[%s502 + $0x38] sm:$0xff] %vm508, 0
          %533 = vst.msk [vmem:[%s502 + $0x40] sm:$0xff] %vm508, 0
          %534 = vst.msk [vmem:[%s502 + $0x48] sm:$0xff] %vm508, 0
          %535 = vst.msk [vmem:[%s502 + $0x50] sm:$0xff] %vm508, 0
          %536 = vst.msk [vmem:[%s502 + $0x58] sm:$0xff] %vm508, 0
          %537 = vst.msk [vmem:[%s502 + $0x60] sm:$0xff] %vm508, 0
          %538 = vst.msk [vmem:[%s502 + $0x68] sm:$0xff] %vm508, 0
          %539 = vst.msk [vmem:[%s502 + $0x70] sm:$0xff] %vm508, 0
          %540 = vst.msk [vmem:[%s502 + $0x78] sm:$0xff] %vm508, 0
        $region56: #{tpu_custom_call.1} parent=39 // pred_fallthru
          _
        %s541 = smul.u32 %s35, 128
        %v542 = vlaneseq
        %v543 = vshrl.u32 %v542, 7
        %v544 = vadd.s32 %v543, 8
        %v545 = vadd.s32 %v543, 16
        %v546 = vadd.s32 %v543, 24
        %v547 = vadd.s32 %v543, 32
        %v548 = vadd.s32 %v543, 40
        %v549 = vadd.s32 %v543, 48
        %v550 = vadd.s32 %v543, 56
        %v551 = vadd.s32 %v543, 64
        %v552 = vadd.s32 %v543, 72
        %v553 = vadd.s32 %v543, 80
        %v554 = vadd.s32 %v543, 88
        %v555 = vadd.s32 %v543, 96
        %v556 = vadd.s32 %v543, 104
        %v557 = vadd.s32 %v543, 112
        %v558 = vadd.s32 %v543, 120
        %v559 = vstv %s541
        %v560 = vadd.s32 %v543, %v559
        %v561 = vadd.s32 %v544, %v559
        %v562 = vadd.s32 %v545, %v559
        %v563 = vadd.s32 %v546, %v559
        %v564 = vadd.s32 %v547, %v559
        %v565 = vadd.s32 %v548, %v559
        %v566 = vadd.s32 %v549, %v559
        %v567 = vadd.s32 %v550, %v559
        %v568 = vadd.s32 %v551, %v559
        %v569 = vadd.s32 %v552, %v559
        %v570 = vadd.s32 %v553, %v559
        %v571 = vadd.s32 %v554, %v559
        %v572 = vadd.s32 %v555, %v559
        %v573 = vadd.s32 %v556, %v559
        %v574 = vadd.s32 %v557, %v559
        %v575 = vadd.s32 %v558, %v559
        %v576 = vlaneseq
        %v577 = vand.u32 %v576, 127
        %vm578 = vcmp.eq.s32.totalorder %v560, %v577
        %vm579 = vcmp.eq.s32.totalorder %v561, %v577
        %vm580 = vcmp.eq.s32.totalorder %v562, %v577
        %vm581 = vcmp.eq.s32.totalorder %v563, %v577
        %vm582 = vcmp.eq.s32.totalorder %v564, %v577
        %vm583 = vcmp.eq.s32.totalorder %v565, %v577
        %vm584 = vcmp.eq.s32.totalorder %v566, %v577
        %vm585 = vcmp.eq.s32.totalorder %v567, %v577
        %vm586 = vcmp.eq.s32.totalorder %v568, %v577
        %vm587 = vcmp.eq.s32.totalorder %v569, %v577
        %vm588 = vcmp.eq.s32.totalorder %v570, %v577
        %vm589 = vcmp.eq.s32.totalorder %v571, %v577
        %vm590 = vcmp.eq.s32.totalorder %v572, %v577
        %vm591 = vcmp.eq.s32.totalorder %v573, %v577
        %vm592 = vcmp.eq.s32.totalorder %v574, %v577
        %vm593 = vcmp.eq.s32.totalorder %v575, %v577
        %v594 = vld [vmem:[%s467] sm:$0x1]
        %s595 = scalar_lea.vmem %s467, 1
        %v596 = vld [vmem:[%s595] sm:$0x1]
        %s597 = scalar_lea.vmem %s467, 2
        %v598 = vld [vmem:[%s597] sm:$0x1]
        %v599 = vld [vmem:[%s476] sm:$0xff]
        %v600 = vld [vmem:[%s476 + $0x8] sm:$0xff]
        %v601 = vld [vmem:[%s476 + $0x10] sm:$0xff]
        %v602 = vld [vmem:[%s476 + $0x18] sm:$0xff]
        %v603 = vld [vmem:[%s476 + $0x20] sm:$0xff]
        %v604 = vld [vmem:[%s476 + $0x28] sm:$0xff]
        %v605 = vld [vmem:[%s476 + $0x30] sm:$0xff]
        %v606 = vld [vmem:[%s476 + $0x38] sm:$0xff]
        %v607 = vld [vmem:[%s476 + $0x40] sm:$0xff]
        %v608 = vld [vmem:[%s476 + $0x48] sm:$0xff]
        %v609 = vld [vmem:[%s476 + $0x50] sm:$0xff]
        %v610 = vld [vmem:[%s476 + $0x58] sm:$0xff]
        %v611 = vld [vmem:[%s476 + $0x60] sm:$0xff]
        %v612 = vld [vmem:[%s476 + $0x68] sm:$0xff]
        %v613 = vld [vmem:[%s476 + $0x70] sm:$0xff]
        %v614 = vld [vmem:[%s476 + $0x78] sm:$0xff]
        %s615 = scalar_lea.vmem %s476, 128
        %v616 = vld [vmem:[%s615] sm:$0xff]
        %v617 = vld [vmem:[%s615 + $0x8] sm:$0xff]
        %v618 = vld [vmem:[%s615 + $0x10] sm:$0xff]
        %v619 = vld [vmem:[%s615 + $0x18] sm:$0xff]
        %v620 = vld [vmem:[%s615 + $0x20] sm:$0xff]
        %v621 = vld [vmem:[%s615 + $0x28] sm:$0xff]
        %v622 = vld [vmem:[%s615 + $0x30] sm:$0xff]
        %v623 = vld [vmem:[%s615 + $0x38] sm:$0xff]
        %v624 = vld [vmem:[%s615 + $0x40] sm:$0xff]
        %v625 = vld [vmem:[%s615 + $0x48] sm:$0xff]
        %v626 = vld [vmem:[%s615 + $0x50] sm:$0xff]
        %v627 = vld [vmem:[%s615 + $0x58] sm:$0xff]
        %v628 = vld [vmem:[%s615 + $0x60] sm:$0xff]
        %v629 = vld [vmem:[%s615 + $0x68] sm:$0xff]
        %v630 = vld [vmem:[%s615 + $0x70] sm:$0xff]
        %v631 = vld [vmem:[%s615 + $0x78] sm:$0xff]
        %s632 = scalar_lea.vmem %s476, 256
        %v633 = vld [vmem:[%s632] sm:$0xff]
        %v634 = vld [vmem:[%s632 + $0x8] sm:$0xff]
        %v635 = vld [vmem:[%s632 + $0x10] sm:$0xff]
        %v636 = vld [vmem:[%s632 + $0x18] sm:$0xff]
        %v637 = vld [vmem:[%s632 + $0x20] sm:$0xff]
        %v638 = vld [vmem:[%s632 + $0x28] sm:$0xff]
        %v639 = vld [vmem:[%s632 + $0x30] sm:$0xff]
        %v640 = vld [vmem:[%s632 + $0x38] sm:$0xff]
        %v641 = vld [vmem:[%s632 + $0x40] sm:$0xff]
        %v642 = vld [vmem:[%s632 + $0x48] sm:$0xff]
        %v643 = vld [vmem:[%s632 + $0x50] sm:$0xff]
        %v644 = vld [vmem:[%s632 + $0x58] sm:$0xff]
        %v645 = vld [vmem:[%s632 + $0x60] sm:$0xff]
        %v646 = vld [vmem:[%s632 + $0x68] sm:$0xff]
        %v647 = vld [vmem:[%s632 + $0x70] sm:$0xff]
        %v648 = vld [vmem:[%s632 + $0x78] sm:$0xff]
        %s649 = smul.u32 %s34, 128
        %s650 = sld [smem:[#allocation7 + %s649]]
        %s651 = sadd.s32 %s649, 1
        %s652 = sld [smem:[#allocation7 + %s651]]
        %s653 = sadd.s32 %s649, 2
        %s654 = sld [smem:[#allocation7 + %s653]]
        %s655 = sadd.s32 %s649, 3
        %s656 = sld [smem:[#allocation7 + %s655]]
        %s657 = sadd.s32 %s649, 4
        %s658 = sld [smem:[#allocation7 + %s657]]
        %s659 = sadd.s32 %s649, 5
        %s660 = sld [smem:[#allocation7 + %s659]]
        %s661 = sadd.s32 %s649, 6
        %s662 = sld [smem:[#allocation7 + %s661]]
        %s663 = sadd.s32 %s649, 7
        %s664 = sld [smem:[#allocation7 + %s663]]
        %s665 = sadd.s32 %s649, 8
        %s666 = sld [smem:[#allocation7 + %s665]]
        %s667 = smul.u32 %s36, 3
        %s668 = smul.u32 %s36, 9
        %s669 = sld [smem:[#allocation2 + %s668]]
        %s670 = smul.f32 %s669, %s650
        %s671 = sadd.s32 %s668, 1
        %s672 = sld [smem:[#allocation2 + %s671]]
        %s673 = smul.f32 %s672, %s656
        %s674 = sadd.f32 %s670, %s673
        %s675 = sadd.s32 %s668, 2
        %s676 = sld [smem:[#allocation2 + %s675]]
        %s677 = smul.f32 %s676, %s662
        %s678 = sadd.f32 %s674, %s677
        %v679 = vstv %s678
        %v680 = vadd.f32 %v594, %v679
        %v682 = vlaneseq
        %v683 = vshrl.u32 %v682, 7
        %v684 = vsub.s32 0, %v683
        %v685 = vrot.slane %v680, %v684
        %688 = vset.pattern.permute.xlu0 0
        %689 = vperm.xlu0 %688, %v599
        %v690 = vpop.permute.xlu0 %689
        %693 = vset.pattern.permute.xlu0 0
        %694 = vperm.xlu0 %693, %v600
        %v695 = vpop.permute.xlu0 %694
        %698 = vset.pattern.permute.xlu0 0
        %699 = vperm.xlu0 %698, %v601
        %v700 = vpop.permute.xlu0 %699
        %703 = vset.pattern.permute.xlu0 0
        %704 = vperm.xlu0 %703, %v602
        %v705 = vpop.permute.xlu0 %704
        %708 = vset.pattern.permute.xlu0 0
        %709 = vperm.xlu0 %708, %v603
        %v710 = vpop.permute.xlu0 %709
        %713 = vset.pattern.permute.xlu0 0
        %714 = vperm.xlu0 %713, %v604
        %v715 = vpop.permute.xlu0 %714
        %718 = vset.pattern.permute.xlu0 0
        %719 = vperm.xlu0 %718, %v605
        %v720 = vpop.permute.xlu0 %719
        %723 = vset.pattern.permute.xlu0 0
        %724 = vperm.xlu0 %723, %v606
        %v725 = vpop.permute.xlu0 %724
        %728 = vset.pattern.permute.xlu0 0
        %729 = vperm.xlu0 %728, %v607
        %v730 = vpop.permute.xlu0 %729
        %733 = vset.pattern.permute.xlu0 0
        %734 = vperm.xlu0 %733, %v608
        %v735 = vpop.permute.xlu0 %734
        %738 = vset.pattern.permute.xlu0 0
        %739 = vperm.xlu0 %738, %v609
        %v740 = vpop.permute.xlu0 %739
        %743 = vset.pattern.permute.xlu0 0
        %744 = vperm.xlu0 %743, %v610
        %v745 = vpop.permute.xlu0 %744
        %748 = vset.pattern.permute.xlu0 0
        %749 = vperm.xlu0 %748, %v611
        %v750 = vpop.permute.xlu0 %749
        %753 = vset.pattern.permute.xlu0 0
        %754 = vperm.xlu0 %753, %v612
        %v755 = vpop.permute.xlu0 %754
        %758 = vset.pattern.permute.xlu0 0
        %759 = vperm.xlu0 %758, %v613
        %v760 = vpop.permute.xlu0 %759
        %763 = vset.pattern.permute.xlu0 0
        %764 = vperm.xlu0 %763, %v614
        %v765 = vpop.permute.xlu0 %764
        %v767 = vsub.f32 %v685, %v690
        %v768 = vsub.f32 %v685, %v695
        %v769 = vsub.f32 %v685, %v700
        %v770 = vsub.f32 %v685, %v705
        %v771 = vsub.f32 %v685, %v710
        %v772 = vsub.f32 %v685, %v715
        %v773 = vsub.f32 %v685, %v720
        %v774 = vsub.f32 %v685, %v725
        %v775 = vsub.f32 %v685, %v730
        %v776 = vsub.f32 %v685, %v735
        %v777 = vsub.f32 %v685, %v740
        %v778 = vsub.f32 %v685, %v745
        %v779 = vsub.f32 %v685, %v750
        %v780 = vsub.f32 %v685, %v755
        %v781 = vsub.f32 %v685, %v760
        %v782 = vsub.f32 %v685, %v765
        %v783 = vpack.c.bf16 %v768, %v767
        %v784 = vpack.c.bf16 %v770, %v769
        %v785 = vpack.c.bf16 %v772, %v771
        %v786 = vpack.c.bf16 %v774, %v773
        %v787 = vpack.c.bf16 %v776, %v775
        %v788 = vpack.c.bf16 %v778, %v777
        %v789 = vpack.c.bf16 %v780, %v779
        %v790 = vpack.c.bf16 %v782, %v781
        %791 = vst [vmem:[%s427] sm:$0xff] %v783
        %792 = vst [vmem:[%s427 + $0x8] sm:$0xff] %v784
        %793 = vst [vmem:[%s427 + $0x10] sm:$0xff] %v785
        %794 = vst [vmem:[%s427 + $0x18] sm:$0xff] %v786
        %795 = vst [vmem:[%s427 + $0x20] sm:$0xff] %v787
        %796 = vst [vmem:[%s427 + $0x28] sm:$0xff] %v788
        %797 = vst [vmem:[%s427 + $0x30] sm:$0xff] %v789
        %798 = vst [vmem:[%s427 + $0x38] sm:$0xff] %v790
        %v799 = vmul.f32 %v767, %v767
        %v800 = vmul.f32 %v768, %v768
        %v801 = vmul.f32 %v769, %v769
        %v802 = vmul.f32 %v770, %v770
        %v803 = vmul.f32 %v771, %v771
        %v804 = vmul.f32 %v772, %v772
        %v805 = vmul.f32 %v773, %v773
        %v806 = vmul.f32 %v774, %v774
        %v807 = vmul.f32 %v775, %v775
        %v808 = vmul.f32 %v776, %v776
        %v809 = vmul.f32 %v777, %v777
        %v810 = vmul.f32 %v778, %v778
        %v811 = vmul.f32 %v779, %v779
        %v812 = vmul.f32 %v780, %v780
        %v813 = vmul.f32 %v781, %v781
        %v814 = vmul.f32 %v782, %v782
        %v815 = vadd.f32 %v799, 0.0
        %v816 = vadd.f32 %v800, 0.0
        %v817 = vadd.f32 %v801, 0.0
        %v818 = vadd.f32 %v802, 0.0
        %v819 = vadd.f32 %v803, 0.0
        %v820 = vadd.f32 %v804, 0.0
        %v821 = vadd.f32 %v805, 0.0
        %v822 = vadd.f32 %v806, 0.0
        %v823 = vadd.f32 %v807, 0.0
        %v824 = vadd.f32 %v808, 0.0
        %v825 = vadd.f32 %v809, 0.0
        %v826 = vadd.f32 %v810, 0.0
        %v827 = vadd.f32 %v811, 0.0
        %v828 = vadd.f32 %v812, 0.0
        %v829 = vadd.f32 %v813, 0.0
        %v830 = vadd.f32 %v814, 0.0
        %s831 = sld [smem:[#allocation2 + %s668]]
        %s832 = smul.f32 %s831, %s652
        %s833 = sld [smem:[#allocation2 + %s671]]
        %s834 = smul.f32 %s833, %s658
        %s835 = sadd.f32 %s832, %s834
        %s836 = sld [smem:[#allocation2 + %s675]]
        %s837 = smul.f32 %s836, %s664
        %s838 = sadd.f32 %s835, %s837
        %v839 = vstv %s838
        %v840 = vadd.f32 %v596, %v839
        %v842 = vlaneseq
        %v843 = vshrl.u32 %v842, 7
        %v844 = vsub.s32 0, %v843
        %v845 = vrot.slane %v840, %v844
        %848 = vset.pattern.permute.xlu0 0
        %849 = vperm.xlu0 %848, %v616
        %v850 = vpop.permute.xlu0 %849
        %853 = vset.pattern.permute.xlu0 0
        %854 = vperm.xlu0 %853, %v617
        %v855 = vpop.permute.xlu0 %854
        %858 = vset.pattern.permute.xlu0 0
        %859 = vperm.xlu0 %858, %v618
        %v860 = vpop.permute.xlu0 %859
        %863 = vset.pattern.permute.xlu0 0
        %864 = vperm.xlu0 %863, %v619
        %v865 = vpop.permute.xlu0 %864
        %868 = vset.pattern.permute.xlu0 0
        %869 = vperm.xlu0 %868, %v620
        %v870 = vpop.permute.xlu0 %869
        %873 = vset.pattern.permute.xlu0 0
        %874 = vperm.xlu0 %873, %v621
        %v875 = vpop.permute.xlu0 %874
        %878 = vset.pattern.permute.xlu0 0
        %879 = vperm.xlu0 %878, %v622
        %v880 = vpop.permute.xlu0 %879
        %883 = vset.pattern.permute.xlu0 0
        %884 = vperm.xlu0 %883, %v623
        %v885 = vpop.permute.xlu0 %884
        %888 = vset.pattern.permute.xlu0 0
        %889 = vperm.xlu0 %888, %v624
        %v890 = vpop.permute.xlu0 %889
        %893 = vset.pattern.permute.xlu0 0
        %894 = vperm.xlu0 %893, %v625
        %v895 = vpop.permute.xlu0 %894
        %898 = vset.pattern.permute.xlu0 0
        %899 = vperm.xlu0 %898, %v626
        %v900 = vpop.permute.xlu0 %899
        %903 = vset.pattern.permute.xlu0 0
        %904 = vperm.xlu0 %903, %v627
        %v905 = vpop.permute.xlu0 %904
        %908 = vset.pattern.permute.xlu0 0
        %909 = vperm.xlu0 %908, %v628
        %v910 = vpop.permute.xlu0 %909
        %913 = vset.pattern.permute.xlu0 0
        %914 = vperm.xlu0 %913, %v629
        %v915 = vpop.permute.xlu0 %914
        %918 = vset.pattern.permute.xlu0 0
        %919 = vperm.xlu0 %918, %v630
        %v920 = vpop.permute.xlu0 %919
        %923 = vset.pattern.permute.xlu0 0
        %924 = vperm.xlu0 %923, %v631
        %v925 = vpop.permute.xlu0 %924
        %v927 = vsub.f32 %v845, %v850
        %v928 = vsub.f32 %v845, %v855
        %v929 = vsub.f32 %v845, %v860
        %v930 = vsub.f32 %v845, %v865
        %v931 = vsub.f32 %v845, %v870
        %v932 = vsub.f32 %v845, %v875
        %v933 = vsub.f32 %v845, %v880
        %v934 = vsub.f32 %v845, %v885
        %v935 = vsub.f32 %v845, %v890
        %v936 = vsub.f32 %v845, %v895
        %v937 = vsub.f32 %v845, %v900
        %v938 = vsub.f32 %v845, %v905
        %v939 = vsub.f32 %v845, %v910
        %v940 = vsub.f32 %v845, %v915
        %v941 = vsub.f32 %v845, %v920
        %v942 = vsub.f32 %v845, %v925
        %v943 = vpack.c.bf16 %v928, %v927
        %v944 = vpack.c.bf16 %v930, %v929
        %v945 = vpack.c.bf16 %v932, %v931
        %v946 = vpack.c.bf16 %v934, %v933
        %v947 = vpack.c.bf16 %v936, %v935
        %v948 = vpack.c.bf16 %v938, %v937
        %v949 = vpack.c.bf16 %v940, %v939
        %v950 = vpack.c.bf16 %v942, %v941
        %s951 = scalar_lea.vmem %s427, 64 [#allocation8]
        %952 = vst [vmem:[%s951] sm:$0xff] %v943
        %953 = vst [vmem:[%s951 + $0x8] sm:$0xff] %v944
        %954 = vst [vmem:[%s951 + $0x10] sm:$0xff] %v945
        %955 = vst [vmem:[%s951 + $0x18] sm:$0xff] %v946
        %956 = vst [vmem:[%s951 + $0x20] sm:$0xff] %v947
        %957 = vst [vmem:[%s951 + $0x28] sm:$0xff] %v948
        %958 = vst [vmem:[%s951 + $0x30] sm:$0xff] %v949
        %959 = vst [vmem:[%s951 + $0x38] sm:$0xff] %v950
        %v960 = vmul.f32 %v927, %v927
        %v961 = vmul.f32 %v928, %v928
        %v962 = vmul.f32 %v929, %v929
        %v963 = vmul.f32 %v930, %v930
        %v964 = vmul.f32 %v931, %v931
        %v965 = vmul.f32 %v932, %v932
        %v966 = vmul.f32 %v933, %v933
        %v967 = vmul.f32 %v934, %v934
        %v968 = vmul.f32 %v935, %v935
        %v969 = vmul.f32 %v936, %v936
        %v970 = vmul.f32 %v937, %v937
        %v971 = vmul.f32 %v938, %v938
        %v972 = vmul.f32 %v939, %v939
        %v973 = vmul.f32 %v940, %v940
        %v974 = vmul.f32 %v941, %v941
        %v975 = vmul.f32 %v942, %v942
        %v976 = vadd.f32 %v815, %v960
        %v977 = vadd.f32 %v816, %v961
        %v978 = vadd.f32 %v817, %v962
        %v979 = vadd.f32 %v818, %v963
        %v980 = vadd.f32 %v819, %v964
        %v981 = vadd.f32 %v820, %v965
        %v982 = vadd.f32 %v821, %v966
        %v983 = vadd.f32 %v822, %v967
        %v984 = vadd.f32 %v823, %v968
        %v985 = vadd.f32 %v824, %v969
        %v986 = vadd.f32 %v825, %v970
        %v987 = vadd.f32 %v826, %v971
        %v988 = vadd.f32 %v827, %v972
        %v989 = vadd.f32 %v828, %v973
        %v990 = vadd.f32 %v829, %v974
        %v991 = vadd.f32 %v830, %v975
        %s992 = sld [smem:[#allocation2 + %s668]]
        %s993 = smul.f32 %s992, %s654
        %s994 = sld [smem:[#allocation2 + %s671]]
        %s995 = smul.f32 %s994, %s660
        %s996 = sadd.f32 %s993, %s995
        %s997 = sld [smem:[#allocation2 + %s675]]
        %s998 = smul.f32 %s997, %s666
        %s999 = sadd.f32 %s996, %s998
        %v1000 = vstv %s999
        %v1001 = vadd.f32 %v598, %v1000
        %v1003 = vlaneseq
        %v1004 = vshrl.u32 %v1003, 7
        %v1005 = vsub.s32 0, %v1004
        %v1006 = vrot.slane %v1001, %v1005
        %1009 = vset.pattern.permute.xlu0 0
        %1010 = vperm.xlu0 %1009, %v633
        %v1011 = vpop.permute.xlu0 %1010
        %1014 = vset.pattern.permute.xlu0 0
        %1015 = vperm.xlu0 %1014, %v634
        %v1016 = vpop.permute.xlu0 %1015
        %1019 = vset.pattern.permute.xlu0 0
        %1020 = vperm.xlu0 %1019, %v635
        %v1021 = vpop.permute.xlu0 %1020
        %1024 = vset.pattern.permute.xlu0 0
        %1025 = vperm.xlu0 %1024, %v636
        %v1026 = vpop.permute.xlu0 %1025
        %1029 = vset.pattern.permute.xlu0 0
        %1030 = vperm.xlu0 %1029, %v637
        %v1031 = vpop.permute.xlu0 %1030
        %1034 = vset.pattern.permute.xlu0 0
        %1035 = vperm.xlu0 %1034, %v638
        %v1036 = vpop.permute.xlu0 %1035
        %1039 = vset.pattern.permute.xlu0 0
        %1040 = vperm.xlu0 %1039, %v639
        %v1041 = vpop.permute.xlu0 %1040
        %1044 = vset.pattern.permute.xlu0 0
        %1045 = vperm.xlu0 %1044, %v640
        %v1046 = vpop.permute.xlu0 %1045
        %1049 = vset.pattern.permute.xlu0 0
        %1050 = vperm.xlu0 %1049, %v641
        %v1051 = vpop.permute.xlu0 %1050
        %1054 = vset.pattern.permute.xlu0 0
        %1055 = vperm.xlu0 %1054, %v642
        %v1056 = vpop.permute.xlu0 %1055
        %1059 = vset.pattern.permute.xlu0 0
        %1060 = vperm.xlu0 %1059, %v643
        %v1061 = vpop.permute.xlu0 %1060
        %1064 = vset.pattern.permute.xlu0 0
        %1065 = vperm.xlu0 %1064, %v644
        %v1066 = vpop.permute.xlu0 %1065
        %1069 = vset.pattern.permute.xlu0 0
        %1070 = vperm.xlu0 %1069, %v645
        %v1071 = vpop.permute.xlu0 %1070
        %1074 = vset.pattern.permute.xlu0 0
        %1075 = vperm.xlu0 %1074, %v646
        %v1076 = vpop.permute.xlu0 %1075
        %1079 = vset.pattern.permute.xlu0 0
        %1080 = vperm.xlu0 %1079, %v647
        %v1081 = vpop.permute.xlu0 %1080
        %1084 = vset.pattern.permute.xlu0 0
        %1085 = vperm.xlu0 %1084, %v648
        %v1086 = vpop.permute.xlu0 %1085
        %v1088 = vsub.f32 %v1006, %v1011
        %v1089 = vsub.f32 %v1006, %v1016
        %v1090 = vsub.f32 %v1006, %v1021
        %v1091 = vsub.f32 %v1006, %v1026
        %v1092 = vsub.f32 %v1006, %v1031
        %v1093 = vsub.f32 %v1006, %v1036
        %v1094 = vsub.f32 %v1006, %v1041
        %v1095 = vsub.f32 %v1006, %v1046
        %v1096 = vsub.f32 %v1006, %v1051
        %v1097 = vsub.f32 %v1006, %v1056
        %v1098 = vsub.f32 %v1006, %v1061
        %v1099 = vsub.f32 %v1006, %v1066
        %v1100 = vsub.f32 %v1006, %v1071
        %v1101 = vsub.f32 %v1006, %v1076
        %v1102 = vsub.f32 %v1006, %v1081
        %v1103 = vsub.f32 %v1006, %v1086
        %v1104 = vpack.c.bf16 %v1089, %v1088
        %v1105 = vpack.c.bf16 %v1091, %v1090
        %v1106 = vpack.c.bf16 %v1093, %v1092
        %v1107 = vpack.c.bf16 %v1095, %v1094
        %v1108 = vpack.c.bf16 %v1097, %v1096
        %v1109 = vpack.c.bf16 %v1099, %v1098
        %v1110 = vpack.c.bf16 %v1101, %v1100
        %v1111 = vpack.c.bf16 %v1103, %v1102
        %s1112 = scalar_lea.vmem %s427, 128 [#allocation8]
        %1113 = vst [vmem:[%s1112] sm:$0xff] %v1104
        %1114 = vst [vmem:[%s1112 + $0x8] sm:$0xff] %v1105
        %1115 = vst [vmem:[%s1112 + $0x10] sm:$0xff] %v1106
        %1116 = vst [vmem:[%s1112 + $0x18] sm:$0xff] %v1107
        %1117 = vst [vmem:[%s1112 + $0x20] sm:$0xff] %v1108
        %1118 = vst [vmem:[%s1112 + $0x28] sm:$0xff] %v1109
        %1119 = vst [vmem:[%s1112 + $0x30] sm:$0xff] %v1110
        %1120 = vst [vmem:[%s1112 + $0x38] sm:$0xff] %v1111
        %v1121 = vmul.f32 %v1088, %v1088
        %v1122 = vmul.f32 %v1089, %v1089
        %v1123 = vmul.f32 %v1090, %v1090
        %v1124 = vmul.f32 %v1091, %v1091
        %v1125 = vmul.f32 %v1092, %v1092
        %v1126 = vmul.f32 %v1093, %v1093
        %v1127 = vmul.f32 %v1094, %v1094
        %v1128 = vmul.f32 %v1095, %v1095
        %v1129 = vmul.f32 %v1096, %v1096
        %v1130 = vmul.f32 %v1097, %v1097
        %v1131 = vmul.f32 %v1098, %v1098
        %v1132 = vmul.f32 %v1099, %v1099
        %v1133 = vmul.f32 %v1100, %v1100
        %v1134 = vmul.f32 %v1101, %v1101
        %v1135 = vmul.f32 %v1102, %v1102
        %v1136 = vmul.f32 %v1103, %v1103
        %v1137 = vadd.f32 %v976, %v1121
        %v1138 = vadd.f32 %v977, %v1122
        %v1139 = vadd.f32 %v978, %v1123
        %v1140 = vadd.f32 %v979, %v1124
        %v1141 = vadd.f32 %v980, %v1125
        %v1142 = vadd.f32 %v981, %v1126
        %v1143 = vadd.f32 %v982, %v1127
        %v1144 = vadd.f32 %v983, %v1128
        %v1145 = vadd.f32 %v984, %v1129
        %v1146 = vadd.f32 %v985, %v1130
        %v1147 = vadd.f32 %v986, %v1131
        %v1148 = vadd.f32 %v987, %v1132
        %v1149 = vadd.f32 %v988, %v1133
        %v1150 = vadd.f32 %v989, %v1134
        %v1151 = vadd.f32 %v990, %v1135
        %v1152 = vadd.f32 %v991, %v1136
        %1153 = vst [vmem:[%s434] sm:$0xff] %v1137
        %1154 = vst [vmem:[%s434 + $0x8] sm:$0xff] %v1138
        %1155 = vst [vmem:[%s434 + $0x10] sm:$0xff] %v1139
        %1156 = vst [vmem:[%s434 + $0x18] sm:$0xff] %v1140
        %1157 = vst [vmem:[%s434 + $0x20] sm:$0xff] %v1141
        %1158 = vst [vmem:[%s434 + $0x28] sm:$0xff] %v1142
        %1159 = vst [vmem:[%s434 + $0x30] sm:$0xff] %v1143
        %1160 = vst [vmem:[%s434 + $0x38] sm:$0xff] %v1144
        %1161 = vst [vmem:[%s434 + $0x40] sm:$0xff] %v1145
        %1162 = vst [vmem:[%s434 + $0x48] sm:$0xff] %v1146
        %1163 = vst [vmem:[%s434 + $0x50] sm:$0xff] %v1147
        %1164 = vst [vmem:[%s434 + $0x58] sm:$0xff] %v1148
        %1165 = vst [vmem:[%s434 + $0x60] sm:$0xff] %v1149
        %1166 = vst [vmem:[%s434 + $0x68] sm:$0xff] %v1150
        %1167 = vst [vmem:[%s434 + $0x70] sm:$0xff] %v1151
        %1168 = vst [vmem:[%s434 + $0x78] sm:$0xff] %v1152
        %s1169 = sld [smem:[#allocation5 + %s667]]
        %p1170 = scmp.ne.s32.totalorder %s1169, 0
        %s1171 = scalar_select %p1170, 1, 0
        %v1172 = vstv %s1171
        %vm1173 = vcmp.eq.s32.totalorder %v1172, 1
        %vm1174 = vmand %vm578, %vm1173
        %vm1175 = vmand %vm579, %vm1173
        %vm1176 = vmand %vm580, %vm1173
        %vm1177 = vmand %vm581, %vm1173
        %vm1178 = vmand %vm582, %vm1173
        %vm1179 = vmand %vm583, %vm1173
        %vm1180 = vmand %vm584, %vm1173
        %vm1181 = vmand %vm585, %vm1173
        %vm1182 = vmand %vm586, %vm1173
        %vm1183 = vmand %vm587, %vm1173
        %vm1184 = vmand %vm588, %vm1173
        %vm1185 = vmand %vm589, %vm1173
        %vm1186 = vmand %vm590, %vm1173
        %vm1187 = vmand %vm591, %vm1173
        %vm1188 = vmand %vm592, %vm1173
        %vm1189 = vmand %vm593, %vm1173
        %v1190 = vsel %vm1174, 1e+30, %v1137
        %v1191 = vsel %vm1175, 1e+30, %v1138
        %v1192 = vsel %vm1176, 1e+30, %v1139
        %v1193 = vsel %vm1177, 1e+30, %v1140
        %v1194 = vsel %vm1178, 1e+30, %v1141
        %v1195 = vsel %vm1179, 1e+30, %v1142
        %v1196 = vsel %vm1180, 1e+30, %v1143
        %v1197 = vsel %vm1181, 1e+30, %v1144
        %v1198 = vsel %vm1182, 1e+30, %v1145
        %v1199 = vsel %vm1183, 1e+30, %v1146
        %v1200 = vsel %vm1184, 1e+30, %v1147
        %v1201 = vsel %vm1185, 1e+30, %v1148
        %v1202 = vsel %vm1186, 1e+30, %v1149
        %v1203 = vsel %vm1187, 1e+30, %v1150
        %v1204 = vsel %vm1188, 1e+30, %v1151
        %v1205 = vsel %vm1189, 1e+30, %v1152
        %vm1206 = vcmp.le.f32.partialorder %v1190, 4.0
        %vm1207 = vcmp.le.f32.partialorder %v1191, 4.0
        %vm1208 = vcmp.le.f32.partialorder %v1192, 4.0
        %vm1209 = vcmp.le.f32.partialorder %v1193, 4.0
        %vm1210 = vcmp.le.f32.partialorder %v1194, 4.0
        %vm1211 = vcmp.le.f32.partialorder %v1195, 4.0
        %vm1212 = vcmp.le.f32.partialorder %v1196, 4.0
        %vm1213 = vcmp.le.f32.partialorder %v1197, 4.0
        %vm1214 = vcmp.le.f32.partialorder %v1198, 4.0
        %vm1215 = vcmp.le.f32.partialorder %v1199, 4.0
        %vm1216 = vcmp.le.f32.partialorder %v1200, 4.0
        %vm1217 = vcmp.le.f32.partialorder %v1201, 4.0
        %vm1218 = vcmp.le.f32.partialorder %v1202, 4.0
        %vm1219 = vcmp.le.f32.partialorder %v1203, 4.0
        %vm1220 = vcmp.le.f32.partialorder %v1204, 4.0
        %vm1221 = vcmp.le.f32.partialorder %v1205, 4.0
        %v1222 = vsel %vm1206, 1, 0
        %v1223 = vsel %vm1207, 1, 0
        %v1224 = vsel %vm1208, 1, 0
        %v1225 = vsel %vm1209, 1, 0
        %v1226 = vsel %vm1210, 1, 0
        %v1227 = vsel %vm1211, 1, 0
        %v1228 = vsel %vm1212, 1, 0
        %v1229 = vsel %vm1213, 1, 0
        %v1230 = vsel %vm1214, 1, 0
        %v1231 = vsel %vm1215, 1, 0
        %v1232 = vsel %vm1216, 1, 0
        %v1233 = vsel %vm1217, 1, 0
        %v1234 = vsel %vm1218, 1, 0
        %v1235 = vsel %vm1219, 1, 0
        %v1236 = vsel %vm1220, 1, 0
        %v1237 = vsel %vm1221, 1, 0
        %v1238 = vand.u32 %v1222, 65535
        %v1239 = vshrl.u32 %v1222, 16
        %v1240 = vcvt.s32.f32 %v1238
        %v1241 = vcvt.s32.f32 %v1239
        %1242 = vadd.xlane.f32.xlu0 %v1240
        %v1243 = vpop.xlane.xlu0 %1242
        %1244 = vadd.xlane.f32.xlu0 %v1241
        %v1245 = vpop.xlane.xlu0 %1244
        %v1246 = vcvt.f32.s32 %v1243
        %v1247 = vcvt.f32.s32 %v1245
        %v1248 = vshll.u32 %v1247, 16
        %v1249 = vadd.s32 %v1248, %v1246
        %v1250 = vand.u32 %v1223, 65535
        %v1251 = vshrl.u32 %v1223, 16
        %v1252 = vcvt.s32.f32 %v1250
        %v1253 = vcvt.s32.f32 %v1251
        %1254 = vadd.xlane.f32.xlu0 %v1252
        %v1255 = vpop.xlane.xlu0 %1254
        %1256 = vadd.xlane.f32.xlu0 %v1253
        %v1257 = vpop.xlane.xlu0 %1256
        %v1258 = vcvt.f32.s32 %v1255
        %v1259 = vcvt.f32.s32 %v1257
        %v1260 = vshll.u32 %v1259, 16
        %v1261 = vadd.s32 %v1260, %v1258
        %v1262 = vand.u32 %v1224, 65535
        %v1263 = vshrl.u32 %v1224, 16
        %v1264 = vcvt.s32.f32 %v1262
        %v1265 = vcvt.s32.f32 %v1263
        %1266 = vadd.xlane.f32.xlu0 %v1264
        %v1267 = vpop.xlane.xlu0 %1266
        %1268 = vadd.xlane.f32.xlu0 %v1265
        %v1269 = vpop.xlane.xlu0 %1268
        %v1270 = vcvt.f32.s32 %v1267
        %v1271 = vcvt.f32.s32 %v1269
        %v1272 = vshll.u32 %v1271, 16
        %v1273 = vadd.s32 %v1272, %v1270
        %v1274 = vand.u32 %v1225, 65535
        %v1275 = vshrl.u32 %v1225, 16
        %v1276 = vcvt.s32.f32 %v1274
        %v1277 = vcvt.s32.f32 %v1275
        %1278 = vadd.xlane.f32.xlu0 %v1276
        %v1279 = vpop.xlane.xlu0 %1278
        %1280 = vadd.xlane.f32.xlu0 %v1277
        %v1281 = vpop.xlane.xlu0 %1280
        %v1282 = vcvt.f32.s32 %v1279
        %v1283 = vcvt.f32.s32 %v1281
        %v1284 = vshll.u32 %v1283, 16
        %v1285 = vadd.s32 %v1284, %v1282
        %v1286 = vand.u32 %v1226, 65535
        %v1287 = vshrl.u32 %v1226, 16
        %v1288 = vcvt.s32.f32 %v1286
        %v1289 = vcvt.s32.f32 %v1287
        %1290 = vadd.xlane.f32.xlu0 %v1288
        %v1291 = vpop.xlane.xlu0 %1290
        %1292 = vadd.xlane.f32.xlu0 %v1289
        %v1293 = vpop.xlane.xlu0 %1292
        %v1294 = vcvt.f32.s32 %v1291
        %v1295 = vcvt.f32.s32 %v1293
        %v1296 = vshll.u32 %v1295, 16
        %v1297 = vadd.s32 %v1296, %v1294
        %v1298 = vand.u32 %v1227, 65535
        %v1299 = vshrl.u32 %v1227, 16
        %v1300 = vcvt.s32.f32 %v1298
        %v1301 = vcvt.s32.f32 %v1299
        %1302 = vadd.xlane.f32.xlu0 %v1300
        %v1303 = vpop.xlane.xlu0 %1302
        %1304 = vadd.xlane.f32.xlu0 %v1301
        %v1305 = vpop.xlane.xlu0 %1304
        %v1306 = vcvt.f32.s32 %v1303
        %v1307 = vcvt.f32.s32 %v1305
        %v1308 = vshll.u32 %v1307, 16
        %v1309 = vadd.s32 %v1308, %v1306
        %v1310 = vand.u32 %v1228, 65535
        %v1311 = vshrl.u32 %v1228, 16
        %v1312 = vcvt.s32.f32 %v1310
        %v1313 = vcvt.s32.f32 %v1311
        %1314 = vadd.xlane.f32.xlu0 %v1312
        %v1315 = vpop.xlane.xlu0 %1314
        %1316 = vadd.xlane.f32.xlu0 %v1313
        %v1317 = vpop.xlane.xlu0 %1316
        %v1318 = vcvt.f32.s32 %v1315
        %v1319 = vcvt.f32.s32 %v1317
        %v1320 = vshll.u32 %v1319, 16
        %v1321 = vadd.s32 %v1320, %v1318
        %v1322 = vand.u32 %v1229, 65535
        %v1323 = vshrl.u32 %v1229, 16
        %v1324 = vcvt.s32.f32 %v1322
        %v1325 = vcvt.s32.f32 %v1323
        %1326 = vadd.xlane.f32.xlu0 %v1324
        %v1327 = vpop.xlane.xlu0 %1326
        %1328 = vadd.xlane.f32.xlu0 %v1325
        %v1329 = vpop.xlane.xlu0 %1328
        %v1330 = vcvt.f32.s32 %v1327
        %v1331 = vcvt.f32.s32 %v1329
        %v1332 = vshll.u32 %v1331, 16
        %v1333 = vadd.s32 %v1332, %v1330
        %v1334 = vand.u32 %v1230, 65535
        %v1335 = vshrl.u32 %v1230, 16
        %v1336 = vcvt.s32.f32 %v1334
        %v1337 = vcvt.s32.f32 %v1335
        %1338 = vadd.xlane.f32.xlu0 %v1336
        %v1339 = vpop.xlane.xlu0 %1338
        %1340 = vadd.xlane.f32.xlu0 %v1337
        %v1341 = vpop.xlane.xlu0 %1340
        %v1342 = vcvt.f32.s32 %v1339
        %v1343 = vcvt.f32.s32 %v1341
        %v1344 = vshll.u32 %v1343, 16
        %v1345 = vadd.s32 %v1344, %v1342
        %v1346 = vand.u32 %v1231, 65535
        %v1347 = vshrl.u32 %v1231, 16
        %v1348 = vcvt.s32.f32 %v1346
        %v1349 = vcvt.s32.f32 %v1347
        %1350 = vadd.xlane.f32.xlu0 %v1348
        %v1351 = vpop.xlane.xlu0 %1350
        %1352 = vadd.xlane.f32.xlu0 %v1349
        %v1353 = vpop.xlane.xlu0 %1352
        %v1354 = vcvt.f32.s32 %v1351
        %v1355 = vcvt.f32.s32 %v1353
        %v1356 = vshll.u32 %v1355, 16
        %v1357 = vadd.s32 %v1356, %v1354
        %v1358 = vand.u32 %v1232, 65535
        %v1359 = vshrl.u32 %v1232, 16
        %v1360 = vcvt.s32.f32 %v1358
        %v1361 = vcvt.s32.f32 %v1359
        %1362 = vadd.xlane.f32.xlu0 %v1360
        %v1363 = vpop.xlane.xlu0 %1362
        %1364 = vadd.xlane.f32.xlu0 %v1361
        %v1365 = vpop.xlane.xlu0 %1364
        %v1366 = vcvt.f32.s32 %v1363
        %v1367 = vcvt.f32.s32 %v1365
        %v1368 = vshll.u32 %v1367, 16
        %v1369 = vadd.s32 %v1368, %v1366
        %v1370 = vand.u32 %v1233, 65535
        %v1371 = vshrl.u32 %v1233, 16
        %v1372 = vcvt.s32.f32 %v1370
        %v1373 = vcvt.s32.f32 %v1371
        %1374 = vadd.xlane.f32.xlu0 %v1372
        %v1375 = vpop.xlane.xlu0 %1374
        %1376 = vadd.xlane.f32.xlu0 %v1373
        %v1377 = vpop.xlane.xlu0 %1376
        %v1378 = vcvt.f32.s32 %v1375
        %v1379 = vcvt.f32.s32 %v1377
        %v1380 = vshll.u32 %v1379, 16
        %v1381 = vadd.s32 %v1380, %v1378
        %v1382 = vand.u32 %v1234, 65535
        %v1383 = vshrl.u32 %v1234, 16
        %v1384 = vcvt.s32.f32 %v1382
        %v1385 = vcvt.s32.f32 %v1383
        %1386 = vadd.xlane.f32.xlu0 %v1384
        %v1387 = vpop.xlane.xlu0 %1386
        %1388 = vadd.xlane.f32.xlu0 %v1385
        %v1389 = vpop.xlane.xlu0 %1388
        %v1390 = vcvt.f32.s32 %v1387
        %v1391 = vcvt.f32.s32 %v1389
        %v1392 = vshll.u32 %v1391, 16
        %v1393 = vadd.s32 %v1392, %v1390
        %v1394 = vand.u32 %v1235, 65535
        %v1395 = vshrl.u32 %v1235, 16
        %v1396 = vcvt.s32.f32 %v1394
        %v1397 = vcvt.s32.f32 %v1395
        %1398 = vadd.xlane.f32.xlu0 %v1396
        %v1399 = vpop.xlane.xlu0 %1398
        %1400 = vadd.xlane.f32.xlu0 %v1397
        %v1401 = vpop.xlane.xlu0 %1400
        %v1402 = vcvt.f32.s32 %v1399
        %v1403 = vcvt.f32.s32 %v1401
        %v1404 = vshll.u32 %v1403, 16
        %v1405 = vadd.s32 %v1404, %v1402
        %v1406 = vand.u32 %v1236, 65535
        %v1407 = vshrl.u32 %v1236, 16
        %v1408 = vcvt.s32.f32 %v1406
        %v1409 = vcvt.s32.f32 %v1407
        %1410 = vadd.xlane.f32.xlu0 %v1408
        %v1411 = vpop.xlane.xlu0 %1410
        %1412 = vadd.xlane.f32.xlu0 %v1409
        %v1413 = vpop.xlane.xlu0 %1412
        %v1414 = vcvt.f32.s32 %v1411
        %v1415 = vcvt.f32.s32 %v1413
        %v1416 = vshll.u32 %v1415, 16
        %v1417 = vadd.s32 %v1416, %v1414
        %v1418 = vand.u32 %v1237, 65535
        %v1419 = vshrl.u32 %v1237, 16
        %v1420 = vcvt.s32.f32 %v1418
        %v1421 = vcvt.s32.f32 %v1419
        %1422 = vadd.xlane.f32.xlu0 %v1420
        %v1423 = vpop.xlane.xlu0 %1422
        %1424 = vadd.xlane.f32.xlu0 %v1421
        %v1425 = vpop.xlane.xlu0 %1424
        %v1426 = vcvt.f32.s32 %v1423
        %v1427 = vcvt.f32.s32 %v1425
        %v1428 = vshll.u32 %v1427, 16
        %v1429 = vadd.s32 %v1428, %v1426
        %vm1430 = vcmp.le.f32.partialorder %v1190, 12.25
        %vm1431 = vcmp.le.f32.partialorder %v1191, 12.25
        %vm1432 = vcmp.le.f32.partialorder %v1192, 12.25
        %vm1433 = vcmp.le.f32.partialorder %v1193, 12.25
        %vm1434 = vcmp.le.f32.partialorder %v1194, 12.25
        %vm1435 = vcmp.le.f32.partialorder %v1195, 12.25
        %vm1436 = vcmp.le.f32.partialorder %v1196, 12.25
        %vm1437 = vcmp.le.f32.partialorder %v1197, 12.25
        %vm1438 = vcmp.le.f32.partialorder %v1198, 12.25
        %vm1439 = vcmp.le.f32.partialorder %v1199, 12.25
        %vm1440 = vcmp.le.f32.partialorder %v1200, 12.25
        %vm1441 = vcmp.le.f32.partialorder %v1201, 12.25
        %vm1442 = vcmp.le.f32.partialorder %v1202, 12.25
        %vm1443 = vcmp.le.f32.partialorder %v1203, 12.25
        %vm1444 = vcmp.le.f32.partialorder %v1204, 12.25
        %vm1445 = vcmp.le.f32.partialorder %v1205, 12.25
        %v1446 = vsel %vm1430, 1, 0
        %v1447 = vsel %vm1431, 1, 0
        %v1448 = vsel %vm1432, 1, 0
        %v1449 = vsel %vm1433, 1, 0
        %v1450 = vsel %vm1434, 1, 0
        %v1451 = vsel %vm1435, 1, 0
        %v1452 = vsel %vm1436, 1, 0
        %v1453 = vsel %vm1437, 1, 0
        %v1454 = vsel %vm1438, 1, 0
        %v1455 = vsel %vm1439, 1, 0
        %v1456 = vsel %vm1440, 1, 0
        %v1457 = vsel %vm1441, 1, 0
        %v1458 = vsel %vm1442, 1, 0
        %v1459 = vsel %vm1443, 1, 0
        %v1460 = vsel %vm1444, 1, 0
        %v1461 = vsel %vm1445, 1, 0
        %v1462 = vadd.s32 %v1222, %v1446
        %v1463 = vadd.s32 %v1223, %v1447
        %v1464 = vadd.s32 %v1224, %v1448
        %v1465 = vadd.s32 %v1225, %v1449
        %v1466 = vadd.s32 %v1226, %v1450
        %v1467 = vadd.s32 %v1227, %v1451
        %v1468 = vadd.s32 %v1228, %v1452
        %v1469 = vadd.s32 %v1229, %v1453
        %v1470 = vadd.s32 %v1230, %v1454
        %v1471 = vadd.s32 %v1231, %v1455
        %v1472 = vadd.s32 %v1232, %v1456
        %v1473 = vadd.s32 %v1233, %v1457
        %v1474 = vadd.s32 %v1234, %v1458
        %v1475 = vadd.s32 %v1235, %v1459
        %v1476 = vadd.s32 %v1236, %v1460
        %v1477 = vadd.s32 %v1237, %v1461
        %v1478 = vand.u32 %v1446, 65535
        %v1479 = vshrl.u32 %v1446, 16
        %v1480 = vcvt.s32.f32 %v1478
        %v1481 = vcvt.s32.f32 %v1479
        %1482 = vadd.xlane.f32.xlu0 %v1480
        %v1483 = vpop.xlane.xlu0 %1482
        %1484 = vadd.xlane.f32.xlu0 %v1481
        %v1485 = vpop.xlane.xlu0 %1484
        %v1486 = vcvt.f32.s32 %v1483
        %v1487 = vcvt.f32.s32 %v1485
        %v1488 = vshll.u32 %v1487, 16
        %v1489 = vadd.s32 %v1488, %v1486
        %v1490 = vand.u32 %v1447, 65535
        %v1491 = vshrl.u32 %v1447, 16
        %v1492 = vcvt.s32.f32 %v1490
        %v1493 = vcvt.s32.f32 %v1491
        %1494 = vadd.xlane.f32.xlu0 %v1492
        %v1495 = vpop.xlane.xlu0 %1494
        %1496 = vadd.xlane.f32.xlu0 %v1493
        %v1497 = vpop.xlane.xlu0 %1496
        %v1498 = vcvt.f32.s32 %v1495
        %v1499 = vcvt.f32.s32 %v1497
        %v1500 = vshll.u32 %v1499, 16
        %v1501 = vadd.s32 %v1500, %v1498
        %v1502 = vand.u32 %v1448, 65535
        %v1503 = vshrl.u32 %v1448, 16
        %v1504 = vcvt.s32.f32 %v1502
        %v1505 = vcvt.s32.f32 %v1503
        %1506 = vadd.xlane.f32.xlu0 %v1504
        %v1507 = vpop.xlane.xlu0 %1506
        %1508 = vadd.xlane.f32.xlu0 %v1505
        %v1509 = vpop.xlane.xlu0 %1508
        %v1510 = vcvt.f32.s32 %v1507
        %v1511 = vcvt.f32.s32 %v1509
        %v1512 = vshll.u32 %v1511, 16
        %v1513 = vadd.s32 %v1512, %v1510
        %v1514 = vand.u32 %v1449, 65535
        %v1515 = vshrl.u32 %v1449, 16
        %v1516 = vcvt.s32.f32 %v1514
        %v1517 = vcvt.s32.f32 %v1515
        %1518 = vadd.xlane.f32.xlu0 %v1516
        %v1519 = vpop.xlane.xlu0 %1518
        %1520 = vadd.xlane.f32.xlu0 %v1517
        %v1521 = vpop.xlane.xlu0 %1520
        %v1522 = vcvt.f32.s32 %v1519
        %v1523 = vcvt.f32.s32 %v1521
        %v1524 = vshll.u32 %v1523, 16
        %v1525 = vadd.s32 %v1524, %v1522
        %v1526 = vand.u32 %v1450, 65535
        %v1527 = vshrl.u32 %v1450, 16
        %v1528 = vcvt.s32.f32 %v1526
        %v1529 = vcvt.s32.f32 %v1527
        %1530 = vadd.xlane.f32.xlu0 %v1528
        %v1531 = vpop.xlane.xlu0 %1530
        %1532 = vadd.xlane.f32.xlu0 %v1529
        %v1533 = vpop.xlane.xlu0 %1532
        %v1534 = vcvt.f32.s32 %v1531
        %v1535 = vcvt.f32.s32 %v1533
        %v1536 = vshll.u32 %v1535, 16
        %v1537 = vadd.s32 %v1536, %v1534
        %v1538 = vand.u32 %v1451, 65535
        %v1539 = vshrl.u32 %v1451, 16
        %v1540 = vcvt.s32.f32 %v1538
        %v1541 = vcvt.s32.f32 %v1539
        %1542 = vadd.xlane.f32.xlu0 %v1540
        %v1543 = vpop.xlane.xlu0 %1542
        %1544 = vadd.xlane.f32.xlu0 %v1541
        %v1545 = vpop.xlane.xlu0 %1544
        %v1546 = vcvt.f32.s32 %v1543
        %v1547 = vcvt.f32.s32 %v1545
        %v1548 = vshll.u32 %v1547, 16
        %v1549 = vadd.s32 %v1548, %v1546
        %v1550 = vand.u32 %v1452, 65535
        %v1551 = vshrl.u32 %v1452, 16
        %v1552 = vcvt.s32.f32 %v1550
        %v1553 = vcvt.s32.f32 %v1551
        %1554 = vadd.xlane.f32.xlu0 %v1552
        %v1555 = vpop.xlane.xlu0 %1554
        %1556 = vadd.xlane.f32.xlu0 %v1553
        %v1557 = vpop.xlane.xlu0 %1556
        %v1558 = vcvt.f32.s32 %v1555
        %v1559 = vcvt.f32.s32 %v1557
        %v1560 = vshll.u32 %v1559, 16
        %v1561 = vadd.s32 %v1560, %v1558
        %v1562 = vand.u32 %v1453, 65535
        %v1563 = vshrl.u32 %v1453, 16
        %v1564 = vcvt.s32.f32 %v1562
        %v1565 = vcvt.s32.f32 %v1563
        %1566 = vadd.xlane.f32.xlu0 %v1564
        %v1567 = vpop.xlane.xlu0 %1566
        %1568 = vadd.xlane.f32.xlu0 %v1565
        %v1569 = vpop.xlane.xlu0 %1568
        %v1570 = vcvt.f32.s32 %v1567
        %v1571 = vcvt.f32.s32 %v1569
        %v1572 = vshll.u32 %v1571, 16
        %v1573 = vadd.s32 %v1572, %v1570
        %v1574 = vand.u32 %v1454, 65535
        %v1575 = vshrl.u32 %v1454, 16
        %v1576 = vcvt.s32.f32 %v1574
        %v1577 = vcvt.s32.f32 %v1575
        %1578 = vadd.xlane.f32.xlu0 %v1576
        %v1579 = vpop.xlane.xlu0 %1578
        %1580 = vadd.xlane.f32.xlu0 %v1577
        %v1581 = vpop.xlane.xlu0 %1580
        %v1582 = vcvt.f32.s32 %v1579
        %v1583 = vcvt.f32.s32 %v1581
        %v1584 = vshll.u32 %v1583, 16
        %v1585 = vadd.s32 %v1584, %v1582
        %v1586 = vand.u32 %v1455, 65535
        %v1587 = vshrl.u32 %v1455, 16
        %v1588 = vcvt.s32.f32 %v1586
        %v1589 = vcvt.s32.f32 %v1587
        %1590 = vadd.xlane.f32.xlu0 %v1588
        %v1591 = vpop.xlane.xlu0 %1590
        %1592 = vadd.xlane.f32.xlu0 %v1589
        %v1593 = vpop.xlane.xlu0 %1592
        %v1594 = vcvt.f32.s32 %v1591
        %v1595 = vcvt.f32.s32 %v1593
        %v1596 = vshll.u32 %v1595, 16
        %v1597 = vadd.s32 %v1596, %v1594
        %v1598 = vand.u32 %v1456, 65535
        %v1599 = vshrl.u32 %v1456, 16
        %v1600 = vcvt.s32.f32 %v1598
        %v1601 = vcvt.s32.f32 %v1599
        %1602 = vadd.xlane.f32.xlu0 %v1600
        %v1603 = vpop.xlane.xlu0 %1602
        %1604 = vadd.xlane.f32.xlu0 %v1601
        %v1605 = vpop.xlane.xlu0 %1604
        %v1606 = vcvt.f32.s32 %v1603
        %v1607 = vcvt.f32.s32 %v1605
        %v1608 = vshll.u32 %v1607, 16
        %v1609 = vadd.s32 %v1608, %v1606
        %v1610 = vand.u32 %v1457, 65535
        %v1611 = vshrl.u32 %v1457, 16
        %v1612 = vcvt.s32.f32 %v1610
        %v1613 = vcvt.s32.f32 %v1611
        %1614 = vadd.xlane.f32.xlu0 %v1612
        %v1615 = vpop.xlane.xlu0 %1614
        %1616 = vadd.xlane.f32.xlu0 %v1613
        %v1617 = vpop.xlane.xlu0 %1616
        %v1618 = vcvt.f32.s32 %v1615
        %v1619 = vcvt.f32.s32 %v1617
        %v1620 = vshll.u32 %v1619, 16
        %v1621 = vadd.s32 %v1620, %v1618
        %v1622 = vand.u32 %v1458, 65535
        %v1623 = vshrl.u32 %v1458, 16
        %v1624 = vcvt.s32.f32 %v1622
        %v1625 = vcvt.s32.f32 %v1623
        %1626 = vadd.xlane.f32.xlu0 %v1624
        %v1627 = vpop.xlane.xlu0 %1626
        %1628 = vadd.xlane.f32.xlu0 %v1625
        %v1629 = vpop.xlane.xlu0 %1628
        %v1630 = vcvt.f32.s32 %v1627
        %v1631 = vcvt.f32.s32 %v1629
        %v1632 = vshll.u32 %v1631, 16
        %v1633 = vadd.s32 %v1632, %v1630
        %v1634 = vand.u32 %v1459, 65535
        %v1635 = vshrl.u32 %v1459, 16
        %v1636 = vcvt.s32.f32 %v1634
        %v1637 = vcvt.s32.f32 %v1635
        %1638 = vadd.xlane.f32.xlu0 %v1636
        %v1639 = vpop.xlane.xlu0 %1638
        %1640 = vadd.xlane.f32.xlu0 %v1637
        %v1641 = vpop.xlane.xlu0 %1640
        %v1642 = vcvt.f32.s32 %v1639
        %v1643 = vcvt.f32.s32 %v1641
        %v1644 = vshll.u32 %v1643, 16
        %v1645 = vadd.s32 %v1644, %v1642
        %v1646 = vand.u32 %v1460, 65535
        %v1647 = vshrl.u32 %v1460, 16
        %v1648 = vcvt.s32.f32 %v1646
        %v1649 = vcvt.s32.f32 %v1647
        %1650 = vadd.xlane.f32.xlu0 %v1648
        %v1651 = vpop.xlane.xlu0 %1650
        %1652 = vadd.xlane.f32.xlu0 %v1649
        %v1653 = vpop.xlane.xlu0 %1652
        %v1654 = vcvt.f32.s32 %v1651
        %v1655 = vcvt.f32.s32 %v1653
        %v1656 = vshll.u32 %v1655, 16
        %v1657 = vadd.s32 %v1656, %v1654
        %v1658 = vand.u32 %v1461, 65535
        %v1659 = vshrl.u32 %v1461, 16
        %v1660 = vcvt.s32.f32 %v1658
        %v1661 = vcvt.s32.f32 %v1659
        %1662 = vadd.xlane.f32.xlu0 %v1660
        %v1663 = vpop.xlane.xlu0 %1662
        %1664 = vadd.xlane.f32.xlu0 %v1661
        %v1665 = vpop.xlane.xlu0 %1664
        %v1666 = vcvt.f32.s32 %v1663
        %v1667 = vcvt.f32.s32 %v1665
        %v1668 = vshll.u32 %v1667, 16
        %v1669 = vadd.s32 %v1668, %v1666
        %v1670 = vpack.c.b16 %v1463, %v1462
        %v1671 = vpack.c.b16 %v1465, %v1464
        %v1672 = vpack.c.b8 %v1671, %v1670
        %v1673 = vpack.c.b16 %v1467, %v1466
        %v1674 = vpack.c.b16 %v1469, %v1468
        %v1675 = vpack.c.b8 %v1674, %v1673
        %v1676 = vpack.c.b16 %v1471, %v1470
        %v1677 = vpack.c.b16 %v1473, %v1472
        %v1678 = vpack.c.b8 %v1677, %v1676
        %v1679 = vpack.c.b16 %v1475, %v1474
        %v1680 = vpack.c.b16 %v1477, %v1476
        %v1681 = vpack.c.b8 %v1680, %v1679
        %1682 = vst [vmem:[%s441] sm:$0xff] %v1672
        %1683 = vst [vmem:[%s441 + $0x8] sm:$0xff] %v1675
        %1684 = vst [vmem:[%s441 + $0x10] sm:$0xff] %v1678
        %1685 = vst [vmem:[%s441 + $0x18] sm:$0xff] %v1681
        %s1686 = sadd.s32 %s667, 1
        %s1687 = smul.u32 %s1686, 3
        %s1688 = sld [smem:[#allocation2 + %s1687]]
        %s1689 = smul.f32 %s1688, %s650
        %s1690 = sadd.s32 %s1687, 1
        %s1691 = sld [smem:[#allocation2 + %s1690]]
        %s1692 = smul.f32 %s1691, %s656
        %s1693 = sadd.f32 %s1689, %s1692
        %s1694 = sadd.s32 %s1687, 2
        %s1695 = sld [smem:[#allocation2 + %s1694]]
        %s1696 = smul.f32 %s1695, %s662
        %s1697 = sadd.f32 %s1693, %s1696
        %v1698 = vstv %s1697
        %v1699 = vadd.f32 %v594, %v1698
        %v1701 = vlaneseq
        %v1702 = vshrl.u32 %v1701, 7
        %v1703 = vsub.s32 0, %v1702
        %v1704 = vrot.slane %v1699, %v1703
        %v1706 = vsub.f32 %v1704, %v690
        %v1707 = vsub.f32 %v1704, %v695
        %v1708 = vsub.f32 %v1704, %v700
        %v1709 = vsub.f32 %v1704, %v705
        %v1710 = vsub.f32 %v1704, %v710
        %v1711 = vsub.f32 %v1704, %v715
        %v1712 = vsub.f32 %v1704, %v720
        %v1713 = vsub.f32 %v1704, %v725
        %v1714 = vsub.f32 %v1704, %v730
        %v1715 = vsub.f32 %v1704, %v735
        %v1716 = vsub.f32 %v1704, %v740
        %v1717 = vsub.f32 %v1704, %v745
        %v1718 = vsub.f32 %v1704, %v750
        %v1719 = vsub.f32 %v1704, %v755
        %v1720 = vsub.f32 %v1704, %v760
        %v1721 = vsub.f32 %v1704, %v765
        %v1722 = vpack.c.bf16 %v1707, %v1706
        %v1723 = vpack.c.bf16 %v1709, %v1708
        %v1724 = vpack.c.bf16 %v1711, %v1710
        %v1725 = vpack.c.bf16 %v1713, %v1712
        %v1726 = vpack.c.bf16 %v1715, %v1714
        %v1727 = vpack.c.bf16 %v1717, %v1716
        %v1728 = vpack.c.bf16 %v1719, %v1718
        %v1729 = vpack.c.bf16 %v1721, %v1720
        %s1730 = scalar_lea.vmem %s427, 192 [#allocation8]
        %1731 = vst [vmem:[%s1730] sm:$0xff] %v1722
        %1732 = vst [vmem:[%s1730 + $0x8] sm:$0xff] %v1723
        %1733 = vst [vmem:[%s1730 + $0x10] sm:$0xff] %v1724
        %1734 = vst [vmem:[%s1730 + $0x18] sm:$0xff] %v1725
        %1735 = vst [vmem:[%s1730 + $0x20] sm:$0xff] %v1726
        %1736 = vst [vmem:[%s1730 + $0x28] sm:$0xff] %v1727
        %1737 = vst [vmem:[%s1730 + $0x30] sm:$0xff] %v1728
        %1738 = vst [vmem:[%s1730 + $0x38] sm:$0xff] %v1729
        %v1739 = vmul.f32 %v1706, %v1706
        %v1740 = vmul.f32 %v1707, %v1707
        %v1741 = vmul.f32 %v1708, %v1708
        %v1742 = vmul.f32 %v1709, %v1709
        %v1743 = vmul.f32 %v1710, %v1710
        %v1744 = vmul.f32 %v1711, %v1711
        %v1745 = vmul.f32 %v1712, %v1712
        %v1746 = vmul.f32 %v1713, %v1713
        %v1747 = vmul.f32 %v1714, %v1714
        %v1748 = vmul.f32 %v1715, %v1715
        %v1749 = vmul.f32 %v1716, %v1716
        %v1750 = vmul.f32 %v1717, %v1717
        %v1751 = vmul.f32 %v1718, %v1718
        %v1752 = vmul.f32 %v1719, %v1719
        %v1753 = vmul.f32 %v1720, %v1720
        %v1754 = vmul.f32 %v1721, %v1721
        %v1755 = vadd.f32 %v1739, 0.0
        %v1756 = vadd.f32 %v1740, 0.0
        %v1757 = vadd.f32 %v1741, 0.0
        %v1758 = vadd.f32 %v1742, 0.0
        %v1759 = vadd.f32 %v1743, 0.0
        %v1760 = vadd.f32 %v1744, 0.0
        %v1761 = vadd.f32 %v1745, 0.0
        %v1762 = vadd.f32 %v1746, 0.0
        %v1763 = vadd.f32 %v1747, 0.0
        %v1764 = vadd.f32 %v1748, 0.0
        %v1765 = vadd.f32 %v1749, 0.0
        %v1766 = vadd.f32 %v1750, 0.0
        %v1767 = vadd.f32 %v1751, 0.0
        %v1768 = vadd.f32 %v1752, 0.0
        %v1769 = vadd.f32 %v1753, 0.0
        %v1770 = vadd.f32 %v1754, 0.0
        %s1771 = sld [smem:[#allocation2 + %s1687]]
        %s1772 = smul.f32 %s1771, %s652
        %s1773 = sld [smem:[#allocation2 + %s1690]]
        %s1774 = smul.f32 %s1773, %s658
        %s1775 = sadd.f32 %s1772, %s1774
        %s1776 = sld [smem:[#allocation2 + %s1694]]
        %s1777 = smul.f32 %s1776, %s664
        %s1778 = sadd.f32 %s1775, %s1777
        %v1779 = vstv %s1778
        %v1780 = vadd.f32 %v596, %v1779
        %v1782 = vlaneseq
        %v1783 = vshrl.u32 %v1782, 7
        %v1784 = vsub.s32 0, %v1783
        %v1785 = vrot.slane %v1780, %v1784
        %v1787 = vsub.f32 %v1785, %v850
        %v1788 = vsub.f32 %v1785, %v855
        %v1789 = vsub.f32 %v1785, %v860
        %v1790 = vsub.f32 %v1785, %v865
        %v1791 = vsub.f32 %v1785, %v870
        %v1792 = vsub.f32 %v1785, %v875
        %v1793 = vsub.f32 %v1785, %v880
        %v1794 = vsub.f32 %v1785, %v885
        %v1795 = vsub.f32 %v1785, %v890
        %v1796 = vsub.f32 %v1785, %v895
        %v1797 = vsub.f32 %v1785, %v900
        %v1798 = vsub.f32 %v1785, %v905
        %v1799 = vsub.f32 %v1785, %v910
        %v1800 = vsub.f32 %v1785, %v915
        %v1801 = vsub.f32 %v1785, %v920
        %v1802 = vsub.f32 %v1785, %v925
        %v1803 = vpack.c.bf16 %v1788, %v1787
        %v1804 = vpack.c.bf16 %v1790, %v1789
        %v1805 = vpack.c.bf16 %v1792, %v1791
        %v1806 = vpack.c.bf16 %v1794, %v1793
        %v1807 = vpack.c.bf16 %v1796, %v1795
        %v1808 = vpack.c.bf16 %v1798, %v1797
        %v1809 = vpack.c.bf16 %v1800, %v1799
        %v1810 = vpack.c.bf16 %v1802, %v1801
        %s1811 = scalar_lea.vmem %s427, 256 [#allocation8]
        %1812 = vst [vmem:[%s1811] sm:$0xff] %v1803
        %1813 = vst [vmem:[%s1811 + $0x8] sm:$0xff] %v1804
        %1814 = vst [vmem:[%s1811 + $0x10] sm:$0xff] %v1805
        %1815 = vst [vmem:[%s1811 + $0x18] sm:$0xff] %v1806
        %1816 = vst [vmem:[%s1811 + $0x20] sm:$0xff] %v1807
        %1817 = vst [vmem:[%s1811 + $0x28] sm:$0xff] %v1808
        %1818 = vst [vmem:[%s1811 + $0x30] sm:$0xff] %v1809
        %1819 = vst [vmem:[%s1811 + $0x38] sm:$0xff] %v1810
        %v1820 = vmul.f32 %v1787, %v1787
        %v1821 = vmul.f32 %v1788, %v1788
        %v1822 = vmul.f32 %v1789, %v1789
        %v1823 = vmul.f32 %v1790, %v1790
        %v1824 = vmul.f32 %v1791, %v1791
        %v1825 = vmul.f32 %v1792, %v1792
        %v1826 = vmul.f32 %v1793, %v1793
        %v1827 = vmul.f32 %v1794, %v1794
        %v1828 = vmul.f32 %v1795, %v1795
        %v1829 = vmul.f32 %v1796, %v1796
        %v1830 = vmul.f32 %v1797, %v1797
        %v1831 = vmul.f32 %v1798, %v1798
        %v1832 = vmul.f32 %v1799, %v1799
        %v1833 = vmul.f32 %v1800, %v1800
        %v1834 = vmul.f32 %v1801, %v1801
        %v1835 = vmul.f32 %v1802, %v1802
        %v1836 = vadd.f32 %v1755, %v1820
        %v1837 = vadd.f32 %v1756, %v1821
        %v1838 = vadd.f32 %v1757, %v1822
        %v1839 = vadd.f32 %v1758, %v1823
        %v1840 = vadd.f32 %v1759, %v1824
        %v1841 = vadd.f32 %v1760, %v1825
        %v1842 = vadd.f32 %v1761, %v1826
        %v1843 = vadd.f32 %v1762, %v1827
        %v1844 = vadd.f32 %v1763, %v1828
        %v1845 = vadd.f32 %v1764, %v1829
        %v1846 = vadd.f32 %v1765, %v1830
        %v1847 = vadd.f32 %v1766, %v1831
        %v1848 = vadd.f32 %v1767, %v1832
        %v1849 = vadd.f32 %v1768, %v1833
        %v1850 = vadd.f32 %v1769, %v1834
        %v1851 = vadd.f32 %v1770, %v1835
        %s1852 = sld [smem:[#allocation2 + %s1687]]
        %s1853 = smul.f32 %s1852, %s654
        %s1854 = sld [smem:[#allocation2 + %s1690]]
        %s1855 = smul.f32 %s1854, %s660
        %s1856 = sadd.f32 %s1853, %s1855
        %s1857 = sld [smem:[#allocation2 + %s1694]]
        %s1858 = smul.f32 %s1857, %s666
        %s1859 = sadd.f32 %s1856, %s1858
        %v1860 = vstv %s1859
        %v1861 = vadd.f32 %v598, %v1860
        %v1863 = vlaneseq
        %v1864 = vshrl.u32 %v1863, 7
        %v1865 = vsub.s32 0, %v1864
        %v1866 = vrot.slane %v1861, %v1865
        %v1868 = vsub.f32 %v1866, %v1011
        %v1869 = vsub.f32 %v1866, %v1016
        %v1870 = vsub.f32 %v1866, %v1021
        %v1871 = vsub.f32 %v1866, %v1026
        %v1872 = vsub.f32 %v1866, %v1031
        %v1873 = vsub.f32 %v1866, %v1036
        %v1874 = vsub.f32 %v1866, %v1041
        %v1875 = vsub.f32 %v1866, %v1046
        %v1876 = vsub.f32 %v1866, %v1051
        %v1877 = vsub.f32 %v1866, %v1056
        %v1878 = vsub.f32 %v1866, %v1061
        %v1879 = vsub.f32 %v1866, %v1066
        %v1880 = vsub.f32 %v1866, %v1071
        %v1881 = vsub.f32 %v1866, %v1076
        %v1882 = vsub.f32 %v1866, %v1081
        %v1883 = vsub.f32 %v1866, %v1086
        %v1884 = vpack.c.bf16 %v1869, %v1868
        %v1885 = vpack.c.bf16 %v1871, %v1870
        %v1886 = vpack.c.bf16 %v1873, %v1872
        %v1887 = vpack.c.bf16 %v1875, %v1874
        %v1888 = vpack.c.bf16 %v1877, %v1876
        %v1889 = vpack.c.bf16 %v1879, %v1878
        %v1890 = vpack.c.bf16 %v1881, %v1880
        %v1891 = vpack.c.bf16 %v1883, %v1882
        %s1892 = scalar_lea.vmem %s427, 320 [#allocation8]
        %1893 = vst [vmem:[%s1892] sm:$0xff] %v1884
        %1894 = vst [vmem:[%s1892 + $0x8] sm:$0xff] %v1885
        %1895 = vst [vmem:[%s1892 + $0x10] sm:$0xff] %v1886
        %1896 = vst [vmem:[%s1892 + $0x18] sm:$0xff] %v1887
        %1897 = vst [vmem:[%s1892 + $0x20] sm:$0xff] %v1888
        %1898 = vst [vmem:[%s1892 + $0x28] sm:$0xff] %v1889
        %1899 = vst [vmem:[%s1892 + $0x30] sm:$0xff] %v1890
        %1900 = vst [vmem:[%s1892 + $0x38] sm:$0xff] %v1891
        %v1901 = vmul.f32 %v1868, %v1868
        %v1902 = vmul.f32 %v1869, %v1869
        %v1903 = vmul.f32 %v1870, %v1870
        %v1904 = vmul.f32 %v1871, %v1871
        %v1905 = vmul.f32 %v1872, %v1872
        %v1906 = vmul.f32 %v1873, %v1873
        %v1907 = vmul.f32 %v1874, %v1874
        %v1908 = vmul.f32 %v1875, %v1875
        %v1909 = vmul.f32 %v1876, %v1876
        %v1910 = vmul.f32 %v1877, %v1877
        %v1911 = vmul.f32 %v1878, %v1878
        %v1912 = vmul.f32 %v1879, %v1879
        %v1913 = vmul.f32 %v1880, %v1880
        %v1914 = vmul.f32 %v1881, %v1881
        %v1915 = vmul.f32 %v1882, %v1882
        %v1916 = vmul.f32 %v1883, %v1883
        %v1917 = vadd.f32 %v1836, %v1901
        %v1918 = vadd.f32 %v1837, %v1902
        %v1919 = vadd.f32 %v1838, %v1903
        %v1920 = vadd.f32 %v1839, %v1904
        %v1921 = vadd.f32 %v1840, %v1905
        %v1922 = vadd.f32 %v1841, %v1906
        %v1923 = vadd.f32 %v1842, %v1907
        %v1924 = vadd.f32 %v1843, %v1908
        %v1925 = vadd.f32 %v1844, %v1909
        %v1926 = vadd.f32 %v1845, %v1910
        %v1927 = vadd.f32 %v1846, %v1911
        %v1928 = vadd.f32 %v1847, %v1912
        %v1929 = vadd.f32 %v1848, %v1913
        %v1930 = vadd.f32 %v1849, %v1914
        %v1931 = vadd.f32 %v1850, %v1915
        %v1932 = vadd.f32 %v1851, %v1916
        %s1933 = scalar_lea.vmem %s434, 128 [#allocation9]
        %1934 = vst [vmem:[%s1933] sm:$0xff] %v1917
        %1935 = vst [vmem:[%s1933 + $0x8] sm:$0xff] %v1918
        %1936 = vst [vmem:[%s1933 + $0x10] sm:$0xff] %v1919
        %1937 = vst [vmem:[%s1933 + $0x18] sm:$0xff] %v1920
        %1938 = vst [vmem:[%s1933 + $0x20] sm:$0xff] %v1921
        %1939 = vst [vmem:[%s1933 + $0x28] sm:$0xff] %v1922
        %1940 = vst [vmem:[%s1933 + $0x30] sm:$0xff] %v1923
        %1941 = vst [vmem:[%s1933 + $0x38] sm:$0xff] %v1924
        %1942 = vst [vmem:[%s1933 + $0x40] sm:$0xff] %v1925
        %1943 = vst [vmem:[%s1933 + $0x48] sm:$0xff] %v1926
        %1944 = vst [vmem:[%s1933 + $0x50] sm:$0xff] %v1927
        %1945 = vst [vmem:[%s1933 + $0x58] sm:$0xff] %v1928
        %1946 = vst [vmem:[%s1933 + $0x60] sm:$0xff] %v1929
        %1947 = vst [vmem:[%s1933 + $0x68] sm:$0xff] %v1930
        %1948 = vst [vmem:[%s1933 + $0x70] sm:$0xff] %v1931
        %1949 = vst [vmem:[%s1933 + $0x78] sm:$0xff] %v1932
        %s1950 = sld [smem:[#allocation5 + %s1686]]
        %p1951 = scmp.ne.s32.totalorder %s1950, 0
        %s1952 = scalar_select %p1951, 1, 0
        %v1953 = vstv %s1952
        %vm1954 = vcmp.eq.s32.totalorder %v1953, 1
        %vm1955 = vmand %vm578, %vm1954
        %vm1956 = vmand %vm579, %vm1954
        %vm1957 = vmand %vm580, %vm1954
        %vm1958 = vmand %vm581, %vm1954
        %vm1959 = vmand %vm582, %vm1954
        %vm1960 = vmand %vm583, %vm1954
        %vm1961 = vmand %vm584, %vm1954
        %vm1962 = vmand %vm585, %vm1954
        %vm1963 = vmand %vm586, %vm1954
        %vm1964 = vmand %vm587, %vm1954
        %vm1965 = vmand %vm588, %vm1954
        %vm1966 = vmand %vm589, %vm1954
        %vm1967 = vmand %vm590, %vm1954
        %vm1968 = vmand %vm591, %vm1954
        %vm1969 = vmand %vm592, %vm1954
        %vm1970 = vmand %vm593, %vm1954
        %v1971 = vsel %vm1955, 1e+30, %v1917
        %v1972 = vsel %vm1956, 1e+30, %v1918
        %v1973 = vsel %vm1957, 1e+30, %v1919
        %v1974 = vsel %vm1958, 1e+30, %v1920
        %v1975 = vsel %vm1959, 1e+30, %v1921
        %v1976 = vsel %vm1960, 1e+30, %v1922
        %v1977 = vsel %vm1961, 1e+30, %v1923
        %v1978 = vsel %vm1962, 1e+30, %v1924
        %v1979 = vsel %vm1963, 1e+30, %v1925
        %v1980 = vsel %vm1964, 1e+30, %v1926
        %v1981 = vsel %vm1965, 1e+30, %v1927
        %v1982 = vsel %vm1966, 1e+30, %v1928
        %v1983 = vsel %vm1967, 1e+30, %v1929
        %v1984 = vsel %vm1968, 1e+30, %v1930
        %v1985 = vsel %vm1969, 1e+30, %v1931
        %v1986 = vsel %vm1970, 1e+30, %v1932
        %vm1987 = vcmp.le.f32.partialorder %v1971, 4.0
        %vm1988 = vcmp.le.f32.partialorder %v1972, 4.0
        %vm1989 = vcmp.le.f32.partialorder %v1973, 4.0
        %vm1990 = vcmp.le.f32.partialorder %v1974, 4.0
        %vm1991 = vcmp.le.f32.partialorder %v1975, 4.0
        %vm1992 = vcmp.le.f32.partialorder %v1976, 4.0
        %vm1993 = vcmp.le.f32.partialorder %v1977, 4.0
        %vm1994 = vcmp.le.f32.partialorder %v1978, 4.0
        %vm1995 = vcmp.le.f32.partialorder %v1979, 4.0
        %vm1996 = vcmp.le.f32.partialorder %v1980, 4.0
        %vm1997 = vcmp.le.f32.partialorder %v1981, 4.0
        %vm1998 = vcmp.le.f32.partialorder %v1982, 4.0
        %vm1999 = vcmp.le.f32.partialorder %v1983, 4.0
        %vm2000 = vcmp.le.f32.partialorder %v1984, 4.0
        %vm2001 = vcmp.le.f32.partialorder %v1985, 4.0
        %vm2002 = vcmp.le.f32.partialorder %v1986, 4.0
        %v2003 = vsel %vm1987, 1, 0
        %v2004 = vsel %vm1988, 1, 0
        %v2005 = vsel %vm1989, 1, 0
        %v2006 = vsel %vm1990, 1, 0
        %v2007 = vsel %vm1991, 1, 0
        %v2008 = vsel %vm1992, 1, 0
        %v2009 = vsel %vm1993, 1, 0
        %v2010 = vsel %vm1994, 1, 0
        %v2011 = vsel %vm1995, 1, 0
        %v2012 = vsel %vm1996, 1, 0
        %v2013 = vsel %vm1997, 1, 0
        %v2014 = vsel %vm1998, 1, 0
        %v2015 = vsel %vm1999, 1, 0
        %v2016 = vsel %vm2000, 1, 0
        %v2017 = vsel %vm2001, 1, 0
        %v2018 = vsel %vm2002, 1, 0
        %v2019 = vand.u32 %v2003, 65535
        %v2020 = vshrl.u32 %v2003, 16
        %v2021 = vcvt.s32.f32 %v2019
        %v2022 = vcvt.s32.f32 %v2020
        %2023 = vadd.xlane.f32.xlu0 %v2021
        %v2024 = vpop.xlane.xlu0 %2023
        %2025 = vadd.xlane.f32.xlu0 %v2022
        %v2026 = vpop.xlane.xlu0 %2025
        %v2027 = vcvt.f32.s32 %v2024
        %v2028 = vcvt.f32.s32 %v2026
        %v2029 = vshll.u32 %v2028, 16
        %v2030 = vadd.s32 %v2029, %v2027
        %v2031 = vand.u32 %v2004, 65535
        %v2032 = vshrl.u32 %v2004, 16
        %v2033 = vcvt.s32.f32 %v2031
        %v2034 = vcvt.s32.f32 %v2032
        %2035 = vadd.xlane.f32.xlu0 %v2033
        %v2036 = vpop.xlane.xlu0 %2035
        %2037 = vadd.xlane.f32.xlu0 %v2034
        %v2038 = vpop.xlane.xlu0 %2037
        %v2039 = vcvt.f32.s32 %v2036
        %v2040 = vcvt.f32.s32 %v2038
        %v2041 = vshll.u32 %v2040, 16
        %v2042 = vadd.s32 %v2041, %v2039
        %v2043 = vand.u32 %v2005, 65535
        %v2044 = vshrl.u32 %v2005, 16
        %v2045 = vcvt.s32.f32 %v2043
        %v2046 = vcvt.s32.f32 %v2044
        %2047 = vadd.xlane.f32.xlu0 %v2045
        %v2048 = vpop.xlane.xlu0 %2047
        %2049 = vadd.xlane.f32.xlu0 %v2046
        %v2050 = vpop.xlane.xlu0 %2049
        %v2051 = vcvt.f32.s32 %v2048
        %v2052 = vcvt.f32.s32 %v2050
        %v2053 = vshll.u32 %v2052, 16
        %v2054 = vadd.s32 %v2053, %v2051
        %v2055 = vand.u32 %v2006, 65535
        %v2056 = vshrl.u32 %v2006, 16
        %v2057 = vcvt.s32.f32 %v2055
        %v2058 = vcvt.s32.f32 %v2056
        %2059 = vadd.xlane.f32.xlu0 %v2057
        %v2060 = vpop.xlane.xlu0 %2059
        %2061 = vadd.xlane.f32.xlu0 %v2058
        %v2062 = vpop.xlane.xlu0 %2061
        %v2063 = vcvt.f32.s32 %v2060
        %v2064 = vcvt.f32.s32 %v2062
        %v2065 = vshll.u32 %v2064, 16
        %v2066 = vadd.s32 %v2065, %v2063
        %v2067 = vand.u32 %v2007, 65535
        %v2068 = vshrl.u32 %v2007, 16
        %v2069 = vcvt.s32.f32 %v2067
        %v2070 = vcvt.s32.f32 %v2068
        %2071 = vadd.xlane.f32.xlu0 %v2069
        %v2072 = vpop.xlane.xlu0 %2071
        %2073 = vadd.xlane.f32.xlu0 %v2070
        %v2074 = vpop.xlane.xlu0 %2073
        %v2075 = vcvt.f32.s32 %v2072
        %v2076 = vcvt.f32.s32 %v2074
        %v2077 = vshll.u32 %v2076, 16
        %v2078 = vadd.s32 %v2077, %v2075
        %v2079 = vand.u32 %v2008, 65535
        %v2080 = vshrl.u32 %v2008, 16
        %v2081 = vcvt.s32.f32 %v2079
        %v2082 = vcvt.s32.f32 %v2080
        %2083 = vadd.xlane.f32.xlu0 %v2081
        %v2084 = vpop.xlane.xlu0 %2083
        %2085 = vadd.xlane.f32.xlu0 %v2082
        %v2086 = vpop.xlane.xlu0 %2085
        %v2087 = vcvt.f32.s32 %v2084
        %v2088 = vcvt.f32.s32 %v2086
        %v2089 = vshll.u32 %v2088, 16
        %v2090 = vadd.s32 %v2089, %v2087
        %v2091 = vand.u32 %v2009, 65535
        %v2092 = vshrl.u32 %v2009, 16
        %v2093 = vcvt.s32.f32 %v2091
        %v2094 = vcvt.s32.f32 %v2092
        %2095 = vadd.xlane.f32.xlu0 %v2093
        %v2096 = vpop.xlane.xlu0 %2095
        %2097 = vadd.xlane.f32.xlu0 %v2094
        %v2098 = vpop.xlane.xlu0 %2097
        %v2099 = vcvt.f32.s32 %v2096
        %v2100 = vcvt.f32.s32 %v2098
        %v2101 = vshll.u32 %v2100, 16
        %v2102 = vadd.s32 %v2101, %v2099
        %v2103 = vand.u32 %v2010, 65535
        %v2104 = vshrl.u32 %v2010, 16
        %v2105 = vcvt.s32.f32 %v2103
        %v2106 = vcvt.s32.f32 %v2104
        %2107 = vadd.xlane.f32.xlu0 %v2105
        %v2108 = vpop.xlane.xlu0 %2107
        %2109 = vadd.xlane.f32.xlu0 %v2106
        %v2110 = vpop.xlane.xlu0 %2109
        %v2111 = vcvt.f32.s32 %v2108
        %v2112 = vcvt.f32.s32 %v2110
        %v2113 = vshll.u32 %v2112, 16
        %v2114 = vadd.s32 %v2113, %v2111
        %v2115 = vand.u32 %v2011, 65535
        %v2116 = vshrl.u32 %v2011, 16
        %v2117 = vcvt.s32.f32 %v2115
        %v2118 = vcvt.s32.f32 %v2116
        %2119 = vadd.xlane.f32.xlu0 %v2117
        %v2120 = vpop.xlane.xlu0 %2119
        %2121 = vadd.xlane.f32.xlu0 %v2118
        %v2122 = vpop.xlane.xlu0 %2121
        %v2123 = vcvt.f32.s32 %v2120
        %v2124 = vcvt.f32.s32 %v2122
        %v2125 = vshll.u32 %v2124, 16
        %v2126 = vadd.s32 %v2125, %v2123
        %v2127 = vand.u32 %v2012, 65535
        %v2128 = vshrl.u32 %v2012, 16
        %v2129 = vcvt.s32.f32 %v2127
        %v2130 = vcvt.s32.f32 %v2128
        %2131 = vadd.xlane.f32.xlu0 %v2129
        %v2132 = vpop.xlane.xlu0 %2131
        %2133 = vadd.xlane.f32.xlu0 %v2130
        %v2134 = vpop.xlane.xlu0 %2133
        %v2135 = vcvt.f32.s32 %v2132
        %v2136 = vcvt.f32.s32 %v2134
        %v2137 = vshll.u32 %v2136, 16
        %v2138 = vadd.s32 %v2137, %v2135
        %v2139 = vand.u32 %v2013, 65535
        %v2140 = vshrl.u32 %v2013, 16
        %v2141 = vcvt.s32.f32 %v2139
        %v2142 = vcvt.s32.f32 %v2140
        %2143 = vadd.xlane.f32.xlu0 %v2141
        %v2144 = vpop.xlane.xlu0 %2143
        %2145 = vadd.xlane.f32.xlu0 %v2142
        %v2146 = vpop.xlane.xlu0 %2145
        %v2147 = vcvt.f32.s32 %v2144
        %v2148 = vcvt.f32.s32 %v2146
        %v2149 = vshll.u32 %v2148, 16
        %v2150 = vadd.s32 %v2149, %v2147
        %v2151 = vand.u32 %v2014, 65535
        %v2152 = vshrl.u32 %v2014, 16
        %v2153 = vcvt.s32.f32 %v2151
        %v2154 = vcvt.s32.f32 %v2152
        %2155 = vadd.xlane.f32.xlu0 %v2153
        %v2156 = vpop.xlane.xlu0 %2155
        %2157 = vadd.xlane.f32.xlu0 %v2154
        %v2158 = vpop.xlane.xlu0 %2157
        %v2159 = vcvt.f32.s32 %v2156
        %v2160 = vcvt.f32.s32 %v2158
        %v2161 = vshll.u32 %v2160, 16
        %v2162 = vadd.s32 %v2161, %v2159
        %v2163 = vand.u32 %v2015, 65535
        %v2164 = vshrl.u32 %v2015, 16
        %v2165 = vcvt.s32.f32 %v2163
        %v2166 = vcvt.s32.f32 %v2164
        %2167 = vadd.xlane.f32.xlu0 %v2165
        %v2168 = vpop.xlane.xlu0 %2167
        %2169 = vadd.xlane.f32.xlu0 %v2166
        %v2170 = vpop.xlane.xlu0 %2169
        %v2171 = vcvt.f32.s32 %v2168
        %v2172 = vcvt.f32.s32 %v2170
        %v2173 = vshll.u32 %v2172, 16
        %v2174 = vadd.s32 %v2173, %v2171
        %v2175 = vand.u32 %v2016, 65535
        %v2176 = vshrl.u32 %v2016, 16
        %v2177 = vcvt.s32.f32 %v2175
        %v2178 = vcvt.s32.f32 %v2176
        %2179 = vadd.xlane.f32.xlu0 %v2177
        %v2180 = vpop.xlane.xlu0 %2179
        %2181 = vadd.xlane.f32.xlu0 %v2178
        %v2182 = vpop.xlane.xlu0 %2181
        %v2183 = vcvt.f32.s32 %v2180
        %v2184 = vcvt.f32.s32 %v2182
        %v2185 = vshll.u32 %v2184, 16
        %v2186 = vadd.s32 %v2185, %v2183
        %v2187 = vand.u32 %v2017, 65535
        %v2188 = vshrl.u32 %v2017, 16
        %v2189 = vcvt.s32.f32 %v2187
        %v2190 = vcvt.s32.f32 %v2188
        %2191 = vadd.xlane.f32.xlu0 %v2189
        %v2192 = vpop.xlane.xlu0 %2191
        %2193 = vadd.xlane.f32.xlu0 %v2190
        %v2194 = vpop.xlane.xlu0 %2193
        %v2195 = vcvt.f32.s32 %v2192
        %v2196 = vcvt.f32.s32 %v2194
        %v2197 = vshll.u32 %v2196, 16
        %v2198 = vadd.s32 %v2197, %v2195
        %v2199 = vand.u32 %v2018, 65535
        %v2200 = vshrl.u32 %v2018, 16
        %v2201 = vcvt.s32.f32 %v2199
        %v2202 = vcvt.s32.f32 %v2200
        %2203 = vadd.xlane.f32.xlu0 %v2201
        %v2204 = vpop.xlane.xlu0 %2203
        %2205 = vadd.xlane.f32.xlu0 %v2202
        %v2206 = vpop.xlane.xlu0 %2205
        %v2207 = vcvt.f32.s32 %v2204
        %v2208 = vcvt.f32.s32 %v2206
        %v2209 = vshll.u32 %v2208, 16
        %v2210 = vadd.s32 %v2209, %v2207
        %v2211 = vadd.s32 %v1249, %v2030
        %v2212 = vadd.s32 %v1261, %v2042
        %v2213 = vadd.s32 %v1273, %v2054
        %v2214 = vadd.s32 %v1285, %v2066
        %v2215 = vadd.s32 %v1297, %v2078
        %v2216 = vadd.s32 %v1309, %v2090
        %v2217 = vadd.s32 %v1321, %v2102
        %v2218 = vadd.s32 %v1333, %v2114
        %v2219 = vadd.s32 %v1345, %v2126
        %v2220 = vadd.s32 %v1357, %v2138
        %v2221 = vadd.s32 %v1369, %v2150
        %v2222 = vadd.s32 %v1381, %v2162
        %v2223 = vadd.s32 %v1393, %v2174
        %v2224 = vadd.s32 %v1405, %v2186
        %v2225 = vadd.s32 %v1417, %v2198
        %v2226 = vadd.s32 %v1429, %v2210
        %vm2227 = vcmp.le.f32.partialorder %v1971, 12.25
        %vm2228 = vcmp.le.f32.partialorder %v1972, 12.25
        %vm2229 = vcmp.le.f32.partialorder %v1973, 12.25
        %vm2230 = vcmp.le.f32.partialorder %v1974, 12.25
        %vm2231 = vcmp.le.f32.partialorder %v1975, 12.25
        %vm2232 = vcmp.le.f32.partialorder %v1976, 12.25
        %vm2233 = vcmp.le.f32.partialorder %v1977, 12.25
        %vm2234 = vcmp.le.f32.partialorder %v1978, 12.25
        %vm2235 = vcmp.le.f32.partialorder %v1979, 12.25
        %vm2236 = vcmp.le.f32.partialorder %v1980, 12.25
        %vm2237 = vcmp.le.f32.partialorder %v1981, 12.25
        %vm2238 = vcmp.le.f32.partialorder %v1982, 12.25
        %vm2239 = vcmp.le.f32.partialorder %v1983, 12.25
        %vm2240 = vcmp.le.f32.partialorder %v1984, 12.25
        %vm2241 = vcmp.le.f32.partialorder %v1985, 12.25
        %vm2242 = vcmp.le.f32.partialorder %v1986, 12.25
        %v2243 = vsel %vm2227, 1, 0
        %v2244 = vsel %vm2228, 1, 0
        %v2245 = vsel %vm2229, 1, 0
        %v2246 = vsel %vm2230, 1, 0
        %v2247 = vsel %vm2231, 1, 0
        %v2248 = vsel %vm2232, 1, 0
        %v2249 = vsel %vm2233, 1, 0
        %v2250 = vsel %vm2234, 1, 0
        %v2251 = vsel %vm2235, 1, 0
        %v2252 = vsel %vm2236, 1, 0
        %v2253 = vsel %vm2237, 1, 0
        %v2254 = vsel %vm2238, 1, 0
        %v2255 = vsel %vm2239, 1, 0
        %v2256 = vsel %vm2240, 1, 0
        %v2257 = vsel %vm2241, 1, 0
        %v2258 = vsel %vm2242, 1, 0
        %v2259 = vadd.s32 %v2003, %v2243
        %v2260 = vadd.s32 %v2004, %v2244
        %v2261 = vadd.s32 %v2005, %v2245
        %v2262 = vadd.s32 %v2006, %v2246
        %v2263 = vadd.s32 %v2007, %v2247
        %v2264 = vadd.s32 %v2008, %v2248
        %v2265 = vadd.s32 %v2009, %v2249
        %v2266 = vadd.s32 %v2010, %v2250
        %v2267 = vadd.s32 %v2011, %v2251
        %v2268 = vadd.s32 %v2012, %v2252
        %v2269 = vadd.s32 %v2013, %v2253
        %v2270 = vadd.s32 %v2014, %v2254
        %v2271 = vadd.s32 %v2015, %v2255
        %v2272 = vadd.s32 %v2016, %v2256
        %v2273 = vadd.s32 %v2017, %v2257
        %v2274 = vadd.s32 %v2018, %v2258
        %v2275 = vand.u32 %v2243, 65535
        %v2276 = vshrl.u32 %v2243, 16
        %v2277 = vcvt.s32.f32 %v2275
        %v2278 = vcvt.s32.f32 %v2276
        %2279 = vadd.xlane.f32.xlu0 %v2277
        %v2280 = vpop.xlane.xlu0 %2279
        %2281 = vadd.xlane.f32.xlu0 %v2278
        %v2282 = vpop.xlane.xlu0 %2281
        %v2283 = vcvt.f32.s32 %v2280
        %v2284 = vcvt.f32.s32 %v2282
        %v2285 = vshll.u32 %v2284, 16
        %v2286 = vadd.s32 %v2285, %v2283
        %v2287 = vand.u32 %v2244, 65535
        %v2288 = vshrl.u32 %v2244, 16
        %v2289 = vcvt.s32.f32 %v2287
        %v2290 = vcvt.s32.f32 %v2288
        %2291 = vadd.xlane.f32.xlu0 %v2289
        %v2292 = vpop.xlane.xlu0 %2291
        %2293 = vadd.xlane.f32.xlu0 %v2290
        %v2294 = vpop.xlane.xlu0 %2293
        %v2295 = vcvt.f32.s32 %v2292
        %v2296 = vcvt.f32.s32 %v2294
        %v2297 = vshll.u32 %v2296, 16
        %v2298 = vadd.s32 %v2297, %v2295
        %v2299 = vand.u32 %v2245, 65535
        %v2300 = vshrl.u32 %v2245, 16
        %v2301 = vcvt.s32.f32 %v2299
        %v2302 = vcvt.s32.f32 %v2300
        %2303 = vadd.xlane.f32.xlu0 %v2301
        %v2304 = vpop.xlane.xlu0 %2303
        %2305 = vadd.xlane.f32.xlu0 %v2302
        %v2306 = vpop.xlane.xlu0 %2305
        %v2307 = vcvt.f32.s32 %v2304
        %v2308 = vcvt.f32.s32 %v2306
        %v2309 = vshll.u32 %v2308, 16
        %v2310 = vadd.s32 %v2309, %v2307
        %v2311 = vand.u32 %v2246, 65535
        %v2312 = vshrl.u32 %v2246, 16
        %v2313 = vcvt.s32.f32 %v2311
        %v2314 = vcvt.s32.f32 %v2312
        %2315 = vadd.xlane.f32.xlu0 %v2313
        %v2316 = vpop.xlane.xlu0 %2315
        %2317 = vadd.xlane.f32.xlu0 %v2314
        %v2318 = vpop.xlane.xlu0 %2317
        %v2319 = vcvt.f32.s32 %v2316
        %v2320 = vcvt.f32.s32 %v2318
        %v2321 = vshll.u32 %v2320, 16
        %v2322 = vadd.s32 %v2321, %v2319
        %v2323 = vand.u32 %v2247, 65535
        %v2324 = vshrl.u32 %v2247, 16
        %v2325 = vcvt.s32.f32 %v2323
        %v2326 = vcvt.s32.f32 %v2324
        %2327 = vadd.xlane.f32.xlu0 %v2325
        %v2328 = vpop.xlane.xlu0 %2327
        %2329 = vadd.xlane.f32.xlu0 %v2326
        %v2330 = vpop.xlane.xlu0 %2329
        %v2331 = vcvt.f32.s32 %v2328
        %v2332 = vcvt.f32.s32 %v2330
        %v2333 = vshll.u32 %v2332, 16
        %v2334 = vadd.s32 %v2333, %v2331
        %v2335 = vand.u32 %v2248, 65535
        %v2336 = vshrl.u32 %v2248, 16
        %v2337 = vcvt.s32.f32 %v2335
        %v2338 = vcvt.s32.f32 %v2336
        %2339 = vadd.xlane.f32.xlu0 %v2337
        %v2340 = vpop.xlane.xlu0 %2339
        %2341 = vadd.xlane.f32.xlu0 %v2338
        %v2342 = vpop.xlane.xlu0 %2341
        %v2343 = vcvt.f32.s32 %v2340
        %v2344 = vcvt.f32.s32 %v2342
        %v2345 = vshll.u32 %v2344, 16
        %v2346 = vadd.s32 %v2345, %v2343
        %v2347 = vand.u32 %v2249, 65535
        %v2348 = vshrl.u32 %v2249, 16
        %v2349 = vcvt.s32.f32 %v2347
        %v2350 = vcvt.s32.f32 %v2348
        %2351 = vadd.xlane.f32.xlu0 %v2349
        %v2352 = vpop.xlane.xlu0 %2351
        %2353 = vadd.xlane.f32.xlu0 %v2350
        %v2354 = vpop.xlane.xlu0 %2353
        %v2355 = vcvt.f32.s32 %v2352
        %v2356 = vcvt.f32.s32 %v2354
        %v2357 = vshll.u32 %v2356, 16
        %v2358 = vadd.s32 %v2357, %v2355
        %v2359 = vand.u32 %v2250, 65535
        %v2360 = vshrl.u32 %v2250, 16
        %v2361 = vcvt.s32.f32 %v2359
        %v2362 = vcvt.s32.f32 %v2360
        %2363 = vadd.xlane.f32.xlu0 %v2361
        %v2364 = vpop.xlane.xlu0 %2363
        %2365 = vadd.xlane.f32.xlu0 %v2362
        %v2366 = vpop.xlane.xlu0 %2365
        %v2367 = vcvt.f32.s32 %v2364
        %v2368 = vcvt.f32.s32 %v2366
        %v2369 = vshll.u32 %v2368, 16
        %v2370 = vadd.s32 %v2369, %v2367
        %v2371 = vand.u32 %v2251, 65535
        %v2372 = vshrl.u32 %v2251, 16
        %v2373 = vcvt.s32.f32 %v2371
        %v2374 = vcvt.s32.f32 %v2372
        %2375 = vadd.xlane.f32.xlu0 %v2373
        %v2376 = vpop.xlane.xlu0 %2375
        %2377 = vadd.xlane.f32.xlu0 %v2374
        %v2378 = vpop.xlane.xlu0 %2377
        %v2379 = vcvt.f32.s32 %v2376
        %v2380 = vcvt.f32.s32 %v2378
        %v2381 = vshll.u32 %v2380, 16
        %v2382 = vadd.s32 %v2381, %v2379
        %v2383 = vand.u32 %v2252, 65535
        %v2384 = vshrl.u32 %v2252, 16
        %v2385 = vcvt.s32.f32 %v2383
        %v2386 = vcvt.s32.f32 %v2384
        %2387 = vadd.xlane.f32.xlu0 %v2385
        %v2388 = vpop.xlane.xlu0 %2387
        %2389 = vadd.xlane.f32.xlu0 %v2386
        %v2390 = vpop.xlane.xlu0 %2389
        %v2391 = vcvt.f32.s32 %v2388
        %v2392 = vcvt.f32.s32 %v2390
        %v2393 = vshll.u32 %v2392, 16
        %v2394 = vadd.s32 %v2393, %v2391
        %v2395 = vand.u32 %v2253, 65535
        %v2396 = vshrl.u32 %v2253, 16
        %v2397 = vcvt.s32.f32 %v2395
        %v2398 = vcvt.s32.f32 %v2396
        %2399 = vadd.xlane.f32.xlu0 %v2397
        %v2400 = vpop.xlane.xlu0 %2399
        %2401 = vadd.xlane.f32.xlu0 %v2398
        %v2402 = vpop.xlane.xlu0 %2401
        %v2403 = vcvt.f32.s32 %v2400
        %v2404 = vcvt.f32.s32 %v2402
        %v2405 = vshll.u32 %v2404, 16
        %v2406 = vadd.s32 %v2405, %v2403
        %v2407 = vand.u32 %v2254, 65535
        %v2408 = vshrl.u32 %v2254, 16
        %v2409 = vcvt.s32.f32 %v2407
        %v2410 = vcvt.s32.f32 %v2408
        %2411 = vadd.xlane.f32.xlu0 %v2409
        %v2412 = vpop.xlane.xlu0 %2411
        %2413 = vadd.xlane.f32.xlu0 %v2410
        %v2414 = vpop.xlane.xlu0 %2413
        %v2415 = vcvt.f32.s32 %v2412
        %v2416 = vcvt.f32.s32 %v2414
        %v2417 = vshll.u32 %v2416, 16
        %v2418 = vadd.s32 %v2417, %v2415
        %v2419 = vand.u32 %v2255, 65535
        %v2420 = vshrl.u32 %v2255, 16
        %v2421 = vcvt.s32.f32 %v2419
        %v2422 = vcvt.s32.f32 %v2420
        %2423 = vadd.xlane.f32.xlu0 %v2421
        %v2424 = vpop.xlane.xlu0 %2423
        %2425 = vadd.xlane.f32.xlu0 %v2422
        %v2426 = vpop.xlane.xlu0 %2425
        %v2427 = vcvt.f32.s32 %v2424
        %v2428 = vcvt.f32.s32 %v2426
        %v2429 = vshll.u32 %v2428, 16
        %v2430 = vadd.s32 %v2429, %v2427
        %v2431 = vand.u32 %v2256, 65535
        %v2432 = vshrl.u32 %v2256, 16
        %v2433 = vcvt.s32.f32 %v2431
        %v2434 = vcvt.s32.f32 %v2432
        %2435 = vadd.xlane.f32.xlu0 %v2433
        %v2436 = vpop.xlane.xlu0 %2435
        %2437 = vadd.xlane.f32.xlu0 %v2434
        %v2438 = vpop.xlane.xlu0 %2437
        %v2439 = vcvt.f32.s32 %v2436
        %v2440 = vcvt.f32.s32 %v2438
        %v2441 = vshll.u32 %v2440, 16
        %v2442 = vadd.s32 %v2441, %v2439
        %v2443 = vand.u32 %v2257, 65535
        %v2444 = vshrl.u32 %v2257, 16
        %v2445 = vcvt.s32.f32 %v2443
        %v2446 = vcvt.s32.f32 %v2444
        %2447 = vadd.xlane.f32.xlu0 %v2445
        %v2448 = vpop.xlane.xlu0 %2447
        %2449 = vadd.xlane.f32.xlu0 %v2446
        %v2450 = vpop.xlane.xlu0 %2449
        %v2451 = vcvt.f32.s32 %v2448
        %v2452 = vcvt.f32.s32 %v2450
        %v2453 = vshll.u32 %v2452, 16
        %v2454 = vadd.s32 %v2453, %v2451
        %v2455 = vand.u32 %v2258, 65535
        %v2456 = vshrl.u32 %v2258, 16
        %v2457 = vcvt.s32.f32 %v2455
        %v2458 = vcvt.s32.f32 %v2456
        %2459 = vadd.xlane.f32.xlu0 %v2457
        %v2460 = vpop.xlane.xlu0 %2459
        %2461 = vadd.xlane.f32.xlu0 %v2458
        %v2462 = vpop.xlane.xlu0 %2461
        %v2463 = vcvt.f32.s32 %v2460
        %v2464 = vcvt.f32.s32 %v2462
        %v2465 = vshll.u32 %v2464, 16
        %v2466 = vadd.s32 %v2465, %v2463
        %v2467 = vadd.s32 %v1489, %v2286
        %v2468 = vadd.s32 %v1501, %v2298
        %v2469 = vadd.s32 %v1513, %v2310
        %v2470 = vadd.s32 %v1525, %v2322
        %v2471 = vadd.s32 %v1537, %v2334
        %v2472 = vadd.s32 %v1549, %v2346
        %v2473 = vadd.s32 %v1561, %v2358
        %v2474 = vadd.s32 %v1573, %v2370
        %v2475 = vadd.s32 %v1585, %v2382
        %v2476 = vadd.s32 %v1597, %v2394
        %v2477 = vadd.s32 %v1609, %v2406
        %v2478 = vadd.s32 %v1621, %v2418
        %v2479 = vadd.s32 %v1633, %v2430
        %v2480 = vadd.s32 %v1645, %v2442
        %v2481 = vadd.s32 %v1657, %v2454
        %v2482 = vadd.s32 %v1669, %v2466
        %v2483 = vpack.c.b16 %v2260, %v2259
        %v2484 = vpack.c.b16 %v2262, %v2261
        %v2485 = vpack.c.b8 %v2484, %v2483
        %v2486 = vpack.c.b16 %v2264, %v2263
        %v2487 = vpack.c.b16 %v2266, %v2265
        %v2488 = vpack.c.b8 %v2487, %v2486
        %v2489 = vpack.c.b16 %v2268, %v2267
        %v2490 = vpack.c.b16 %v2270, %v2269
        %v2491 = vpack.c.b8 %v2490, %v2489
        %v2492 = vpack.c.b16 %v2272, %v2271
        %v2493 = vpack.c.b16 %v2274, %v2273
        %v2494 = vpack.c.b8 %v2493, %v2492
        %s2495 = scalar_lea.vmem %s441, 32 [#allocation11]
        %2496 = vst [vmem:[%s2495] sm:$0xff] %v2485
        %2497 = vst [vmem:[%s2495 + $0x8] sm:$0xff] %v2488
        %2498 = vst [vmem:[%s2495 + $0x10] sm:$0xff] %v2491
        %2499 = vst [vmem:[%s2495 + $0x18] sm:$0xff] %v2494
        %s2500 = sadd.s32 %s667, 2
        %s2501 = smul.u32 %s2500, 3
        %s2502 = sld [smem:[#allocation2 + %s2501]]
        %s2503 = smul.f32 %s2502, %s650
        %s2504 = sadd.s32 %s2501, 1
        %s2505 = sld [smem:[#allocation2 + %s2504]]
        %s2506 = smul.f32 %s2505, %s656
        %s2507 = sadd.f32 %s2503, %s2506
        %s2508 = sadd.s32 %s2501, 2
        %s2509 = sld [smem:[#allocation2 + %s2508]]
        %s2510 = smul.f32 %s2509, %s662
        %s2511 = sadd.f32 %s2507, %s2510
        %v2512 = vstv %s2511
        %v2513 = vadd.f32 %v594, %v2512
        %v2515 = vlaneseq
        %v2516 = vshrl.u32 %v2515, 7
        %v2517 = vsub.s32 0, %v2516
        %v2518 = vrot.slane %v2513, %v2517
        %v2520 = vsub.f32 %v2518, %v690
        %v2521 = vsub.f32 %v2518, %v695
        %v2522 = vsub.f32 %v2518, %v700
        %v2523 = vsub.f32 %v2518, %v705
        %v2524 = vsub.f32 %v2518, %v710
        %v2525 = vsub.f32 %v2518, %v715
        %v2526 = vsub.f32 %v2518, %v720
        %v2527 = vsub.f32 %v2518, %v725
        %v2528 = vsub.f32 %v2518, %v730
        %v2529 = vsub.f32 %v2518, %v735
        %v2530 = vsub.f32 %v2518, %v740
        %v2531 = vsub.f32 %v2518, %v745
        %v2532 = vsub.f32 %v2518, %v750
        %v2533 = vsub.f32 %v2518, %v755
        %v2534 = vsub.f32 %v2518, %v760
        %v2535 = vsub.f32 %v2518, %v765
        %v2536 = vpack.c.bf16 %v2521, %v2520
        %v2537 = vpack.c.bf16 %v2523, %v2522
        %v2538 = vpack.c.bf16 %v2525, %v2524
        %v2539 = vpack.c.bf16 %v2527, %v2526
        %v2540 = vpack.c.bf16 %v2529, %v2528
        %v2541 = vpack.c.bf16 %v2531, %v2530
        %v2542 = vpack.c.bf16 %v2533, %v2532
        %v2543 = vpack.c.bf16 %v2535, %v2534
        %s2544 = scalar_lea.vmem %s427, 384 [#allocation8]
        %2545 = vst [vmem:[%s2544] sm:$0xff] %v2536
        %2546 = vst [vmem:[%s2544 + $0x8] sm:$0xff] %v2537
        %2547 = vst [vmem:[%s2544 + $0x10] sm:$0xff] %v2538
        %2548 = vst [vmem:[%s2544 + $0x18] sm:$0xff] %v2539
        %2549 = vst [vmem:[%s2544 + $0x20] sm:$0xff] %v2540
        %2550 = vst [vmem:[%s2544 + $0x28] sm:$0xff] %v2541
        %2551 = vst [vmem:[%s2544 + $0x30] sm:$0xff] %v2542
        %2552 = vst [vmem:[%s2544 + $0x38] sm:$0xff] %v2543
        %v2553 = vmul.f32 %v2520, %v2520
        %v2554 = vmul.f32 %v2521, %v2521
        %v2555 = vmul.f32 %v2522, %v2522
        %v2556 = vmul.f32 %v2523, %v2523
        %v2557 = vmul.f32 %v2524, %v2524
        %v2558 = vmul.f32 %v2525, %v2525
        %v2559 = vmul.f32 %v2526, %v2526
        %v2560 = vmul.f32 %v2527, %v2527
        %v2561 = vmul.f32 %v2528, %v2528
        %v2562 = vmul.f32 %v2529, %v2529
        %v2563 = vmul.f32 %v2530, %v2530
        %v2564 = vmul.f32 %v2531, %v2531
        %v2565 = vmul.f32 %v2532, %v2532
        %v2566 = vmul.f32 %v2533, %v2533
        %v2567 = vmul.f32 %v2534, %v2534
        %v2568 = vmul.f32 %v2535, %v2535
        %v2569 = vadd.f32 %v2553, 0.0
        %v2570 = vadd.f32 %v2554, 0.0
        %v2571 = vadd.f32 %v2555, 0.0
        %v2572 = vadd.f32 %v2556, 0.0
        %v2573 = vadd.f32 %v2557, 0.0
        %v2574 = vadd.f32 %v2558, 0.0
        %v2575 = vadd.f32 %v2559, 0.0
        %v2576 = vadd.f32 %v2560, 0.0
        %v2577 = vadd.f32 %v2561, 0.0
        %v2578 = vadd.f32 %v2562, 0.0
        %v2579 = vadd.f32 %v2563, 0.0
        %v2580 = vadd.f32 %v2564, 0.0
        %v2581 = vadd.f32 %v2565, 0.0
        %v2582 = vadd.f32 %v2566, 0.0
        %v2583 = vadd.f32 %v2567, 0.0
        %v2584 = vadd.f32 %v2568, 0.0
        %s2585 = sld [smem:[#allocation2 + %s2501]]
        %s2586 = smul.f32 %s2585, %s652
        %s2587 = sld [smem:[#allocation2 + %s2504]]
        %s2588 = smul.f32 %s2587, %s658
        %s2589 = sadd.f32 %s2586, %s2588
        %s2590 = sld [smem:[#allocation2 + %s2508]]
        %s2591 = smul.f32 %s2590, %s664
        %s2592 = sadd.f32 %s2589, %s2591
        %v2593 = vstv %s2592
        %v2594 = vadd.f32 %v596, %v2593
        %v2596 = vlaneseq
        %v2597 = vshrl.u32 %v2596, 7
        %v2598 = vsub.s32 0, %v2597
        %v2599 = vrot.slane %v2594, %v2598
        %v2601 = vsub.f32 %v2599, %v850
        %v2602 = vsub.f32 %v2599, %v855
        %v2603 = vsub.f32 %v2599, %v860
        %v2604 = vsub.f32 %v2599, %v865
        %v2605 = vsub.f32 %v2599, %v870
        %v2606 = vsub.f32 %v2599, %v875
        %v2607 = vsub.f32 %v2599, %v880
        %v2608 = vsub.f32 %v2599, %v885
        %v2609 = vsub.f32 %v2599, %v890
        %v2610 = vsub.f32 %v2599, %v895
        %v2611 = vsub.f32 %v2599, %v900
        %v2612 = vsub.f32 %v2599, %v905
        %v2613 = vsub.f32 %v2599, %v910
        %v2614 = vsub.f32 %v2599, %v915
        %v2615 = vsub.f32 %v2599, %v920
        %v2616 = vsub.f32 %v2599, %v925
        %v2617 = vpack.c.bf16 %v2602, %v2601
        %v2618 = vpack.c.bf16 %v2604, %v2603
        %v2619 = vpack.c.bf16 %v2606, %v2605
        %v2620 = vpack.c.bf16 %v2608, %v2607
        %v2621 = vpack.c.bf16 %v2610, %v2609
        %v2622 = vpack.c.bf16 %v2612, %v2611
        %v2623 = vpack.c.bf16 %v2614, %v2613
        %v2624 = vpack.c.bf16 %v2616, %v2615
        %s2625 = scalar_lea.vmem %s427, 448 [#allocation8]
        %2626 = vst [vmem:[%s2625] sm:$0xff] %v2617
        %2627 = vst [vmem:[%s2625 + $0x8] sm:$0xff] %v2618
        %2628 = vst [vmem:[%s2625 + $0x10] sm:$0xff] %v2619
        %2629 = vst [vmem:[%s2625 + $0x18] sm:$0xff] %v2620
        %2630 = vst [vmem:[%s2625 + $0x20] sm:$0xff] %v2621
        %2631 = vst [vmem:[%s2625 + $0x28] sm:$0xff] %v2622
        %2632 = vst [vmem:[%s2625 + $0x30] sm:$0xff] %v2623
        %2633 = vst [vmem:[%s2625 + $0x38] sm:$0xff] %v2624
        %v2634 = vmul.f32 %v2601, %v2601
        %v2635 = vmul.f32 %v2602, %v2602
        %v2636 = vmul.f32 %v2603, %v2603
        %v2637 = vmul.f32 %v2604, %v2604
        %v2638 = vmul.f32 %v2605, %v2605
        %v2639 = vmul.f32 %v2606, %v2606
        %v2640 = vmul.f32 %v2607, %v2607
        %v2641 = vmul.f32 %v2608, %v2608
        %v2642 = vmul.f32 %v2609, %v2609
        %v2643 = vmul.f32 %v2610, %v2610
        %v2644 = vmul.f32 %v2611, %v2611
        %v2645 = vmul.f32 %v2612, %v2612
        %v2646 = vmul.f32 %v2613, %v2613
        %v2647 = vmul.f32 %v2614, %v2614
        %v2648 = vmul.f32 %v2615, %v2615
        %v2649 = vmul.f32 %v2616, %v2616
        %v2650 = vadd.f32 %v2569, %v2634
        %v2651 = vadd.f32 %v2570, %v2635
        %v2652 = vadd.f32 %v2571, %v2636
        %v2653 = vadd.f32 %v2572, %v2637
        %v2654 = vadd.f32 %v2573, %v2638
        %v2655 = vadd.f32 %v2574, %v2639
        %v2656 = vadd.f32 %v2575, %v2640
        %v2657 = vadd.f32 %v2576, %v2641
        %v2658 = vadd.f32 %v2577, %v2642
        %v2659 = vadd.f32 %v2578, %v2643
        %v2660 = vadd.f32 %v2579, %v2644
        %v2661 = vadd.f32 %v2580, %v2645
        %v2662 = vadd.f32 %v2581, %v2646
        %v2663 = vadd.f32 %v2582, %v2647
        %v2664 = vadd.f32 %v2583, %v2648
        %v2665 = vadd.f32 %v2584, %v2649
        %s2666 = sld [smem:[#allocation2 + %s2501]]
        %s2667 = smul.f32 %s2666, %s654
        %s2668 = sld [smem:[#allocation2 + %s2504]]
        %s2669 = smul.f32 %s2668, %s660
        %s2670 = sadd.f32 %s2667, %s2669
        %s2671 = sld [smem:[#allocation2 + %s2508]]
        %s2672 = smul.f32 %s2671, %s666
        %s2673 = sadd.f32 %s2670, %s2672
        %v2674 = vstv %s2673
        %v2675 = vadd.f32 %v598, %v2674
        %v2677 = vlaneseq
        %v2678 = vshrl.u32 %v2677, 7
        %v2679 = vsub.s32 0, %v2678
        %v2680 = vrot.slane %v2675, %v2679
        %v2682 = vsub.f32 %v2680, %v1011
        %v2683 = vsub.f32 %v2680, %v1016
        %v2684 = vsub.f32 %v2680, %v1021
        %v2685 = vsub.f32 %v2680, %v1026
        %v2686 = vsub.f32 %v2680, %v1031
        %v2687 = vsub.f32 %v2680, %v1036
        %v2688 = vsub.f32 %v2680, %v1041
        %v2689 = vsub.f32 %v2680, %v1046
        %v2690 = vsub.f32 %v2680, %v1051
        %v2691 = vsub.f32 %v2680, %v1056
        %v2692 = vsub.f32 %v2680, %v1061
        %v2693 = vsub.f32 %v2680, %v1066
        %v2694 = vsub.f32 %v2680, %v1071
        %v2695 = vsub.f32 %v2680, %v1076
        %v2696 = vsub.f32 %v2680, %v1081
        %v2697 = vsub.f32 %v2680, %v1086
        %v2698 = vpack.c.bf16 %v2683, %v2682
        %v2699 = vpack.c.bf16 %v2685, %v2684
        %v2700 = vpack.c.bf16 %v2687, %v2686
        %v2701 = vpack.c.bf16 %v2689, %v2688
        %v2702 = vpack.c.bf16 %v2691, %v2690
        %v2703 = vpack.c.bf16 %v2693, %v2692
        %v2704 = vpack.c.bf16 %v2695, %v2694
        %v2705 = vpack.c.bf16 %v2697, %v2696
        %s2706 = scalar_lea.vmem %s427, 512 [#allocation8]
        %2707 = vst [vmem:[%s2706] sm:$0xff] %v2698
        %2708 = vst [vmem:[%s2706 + $0x8] sm:$0xff] %v2699
        %2709 = vst [vmem:[%s2706 + $0x10] sm:$0xff] %v2700
        %2710 = vst [vmem:[%s2706 + $0x18] sm:$0xff] %v2701
        %2711 = vst [vmem:[%s2706 + $0x20] sm:$0xff] %v2702
        %2712 = vst [vmem:[%s2706 + $0x28] sm:$0xff] %v2703
        %2713 = vst [vmem:[%s2706 + $0x30] sm:$0xff] %v2704
        %2714 = vst [vmem:[%s2706 + $0x38] sm:$0xff] %v2705
        %v2715 = vmul.f32 %v2682, %v2682
        %v2716 = vmul.f32 %v2683, %v2683
        %v2717 = vmul.f32 %v2684, %v2684
        %v2718 = vmul.f32 %v2685, %v2685
        %v2719 = vmul.f32 %v2686, %v2686
        %v2720 = vmul.f32 %v2687, %v2687
        %v2721 = vmul.f32 %v2688, %v2688
        %v2722 = vmul.f32 %v2689, %v2689
        %v2723 = vmul.f32 %v2690, %v2690
        %v2724 = vmul.f32 %v2691, %v2691
        %v2725 = vmul.f32 %v2692, %v2692
        %v2726 = vmul.f32 %v2693, %v2693
        %v2727 = vmul.f32 %v2694, %v2694
        %v2728 = vmul.f32 %v2695, %v2695
        %v2729 = vmul.f32 %v2696, %v2696
        %v2730 = vmul.f32 %v2697, %v2697
        %v2731 = vadd.f32 %v2650, %v2715
        %v2732 = vadd.f32 %v2651, %v2716
        %v2733 = vadd.f32 %v2652, %v2717
        %v2734 = vadd.f32 %v2653, %v2718
        %v2735 = vadd.f32 %v2654, %v2719
        %v2736 = vadd.f32 %v2655, %v2720
        %v2737 = vadd.f32 %v2656, %v2721
        %v2738 = vadd.f32 %v2657, %v2722
        %v2739 = vadd.f32 %v2658, %v2723
        %v2740 = vadd.f32 %v2659, %v2724
        %v2741 = vadd.f32 %v2660, %v2725
        %v2742 = vadd.f32 %v2661, %v2726
        %v2743 = vadd.f32 %v2662, %v2727
        %v2744 = vadd.f32 %v2663, %v2728
        %v2745 = vadd.f32 %v2664, %v2729
        %v2746 = vadd.f32 %v2665, %v2730
        %s2747 = scalar_lea.vmem %s434, 256 [#allocation9]
        %2748 = vst [vmem:[%s2747] sm:$0xff] %v2731
        %2749 = vst [vmem:[%s2747 + $0x8] sm:$0xff] %v2732
        %2750 = vst [vmem:[%s2747 + $0x10] sm:$0xff] %v2733
        %2751 = vst [vmem:[%s2747 + $0x18] sm:$0xff] %v2734
        %2752 = vst [vmem:[%s2747 + $0x20] sm:$0xff] %v2735
        %2753 = vst [vmem:[%s2747 + $0x28] sm:$0xff] %v2736
        %2754 = vst [vmem:[%s2747 + $0x30] sm:$0xff] %v2737
        %2755 = vst [vmem:[%s2747 + $0x38] sm:$0xff] %v2738
        %2756 = vst [vmem:[%s2747 + $0x40] sm:$0xff] %v2739
        %2757 = vst [vmem:[%s2747 + $0x48] sm:$0xff] %v2740
        %2758 = vst [vmem:[%s2747 + $0x50] sm:$0xff] %v2741
        %2759 = vst [vmem:[%s2747 + $0x58] sm:$0xff] %v2742
        %2760 = vst [vmem:[%s2747 + $0x60] sm:$0xff] %v2743
        %2761 = vst [vmem:[%s2747 + $0x68] sm:$0xff] %v2744
        %2762 = vst [vmem:[%s2747 + $0x70] sm:$0xff] %v2745
        %2763 = vst [vmem:[%s2747 + $0x78] sm:$0xff] %v2746
        %s2764 = sld [smem:[#allocation5 + %s2500]]
        %p2765 = scmp.ne.s32.totalorder %s2764, 0
        %s2766 = scalar_select %p2765, 1, 0
        %v2767 = vstv %s2766
        %vm2768 = vcmp.eq.s32.totalorder %v2767, 1
        %vm2769 = vmand %vm578, %vm2768
        %vm2770 = vmand %vm579, %vm2768
        %vm2771 = vmand %vm580, %vm2768
        %vm2772 = vmand %vm581, %vm2768
        %vm2773 = vmand %vm582, %vm2768
        %vm2774 = vmand %vm583, %vm2768
        %vm2775 = vmand %vm584, %vm2768
        %vm2776 = vmand %vm585, %vm2768
        %vm2777 = vmand %vm586, %vm2768
        %vm2778 = vmand %vm587, %vm2768
        %vm2779 = vmand %vm588, %vm2768
        %vm2780 = vmand %vm589, %vm2768
        %vm2781 = vmand %vm590, %vm2768
        %vm2782 = vmand %vm591, %vm2768
        %vm2783 = vmand %vm592, %vm2768
        %vm2784 = vmand %vm593, %vm2768
        %v2785 = vsel %vm2769, 1e+30, %v2731
        %v2786 = vsel %vm2770, 1e+30, %v2732
        %v2787 = vsel %vm2771, 1e+30, %v2733
        %v2788 = vsel %vm2772, 1e+30, %v2734
        %v2789 = vsel %vm2773, 1e+30, %v2735
        %v2790 = vsel %vm2774, 1e+30, %v2736
        %v2791 = vsel %vm2775, 1e+30, %v2737
        %v2792 = vsel %vm2776, 1e+30, %v2738
        %v2793 = vsel %vm2777, 1e+30, %v2739
        %v2794 = vsel %vm2778, 1e+30, %v2740
        %v2795 = vsel %vm2779, 1e+30, %v2741
        %v2796 = vsel %vm2780, 1e+30, %v2742
        %v2797 = vsel %vm2781, 1e+30, %v2743
        %v2798 = vsel %vm2782, 1e+30, %v2744
        %v2799 = vsel %vm2783, 1e+30, %v2745
        %v2800 = vsel %vm2784, 1e+30, %v2746
        %vm2801 = vcmp.le.f32.partialorder %v2785, 4.0
        %vm2802 = vcmp.le.f32.partialorder %v2786, 4.0
        %vm2803 = vcmp.le.f32.partialorder %v2787, 4.0
        %vm2804 = vcmp.le.f32.partialorder %v2788, 4.0
        %vm2805 = vcmp.le.f32.partialorder %v2789, 4.0
        %vm2806 = vcmp.le.f32.partialorder %v2790, 4.0
        %vm2807 = vcmp.le.f32.partialorder %v2791, 4.0
        %vm2808 = vcmp.le.f32.partialorder %v2792, 4.0
        %vm2809 = vcmp.le.f32.partialorder %v2793, 4.0
        %vm2810 = vcmp.le.f32.partialorder %v2794, 4.0
        %vm2811 = vcmp.le.f32.partialorder %v2795, 4.0
        %vm2812 = vcmp.le.f32.partialorder %v2796, 4.0
        %vm2813 = vcmp.le.f32.partialorder %v2797, 4.0
        %vm2814 = vcmp.le.f32.partialorder %v2798, 4.0
        %vm2815 = vcmp.le.f32.partialorder %v2799, 4.0
        %vm2816 = vcmp.le.f32.partialorder %v2800, 4.0
        %v2817 = vsel %vm2801, 1, 0
        %v2818 = vsel %vm2802, 1, 0
        %v2819 = vsel %vm2803, 1, 0
        %v2820 = vsel %vm2804, 1, 0
        %v2821 = vsel %vm2805, 1, 0
        %v2822 = vsel %vm2806, 1, 0
        %v2823 = vsel %vm2807, 1, 0
        %v2824 = vsel %vm2808, 1, 0
        %v2825 = vsel %vm2809, 1, 0
        %v2826 = vsel %vm2810, 1, 0
        %v2827 = vsel %vm2811, 1, 0
        %v2828 = vsel %vm2812, 1, 0
        %v2829 = vsel %vm2813, 1, 0
        %v2830 = vsel %vm2814, 1, 0
        %v2831 = vsel %vm2815, 1, 0
        %v2832 = vsel %vm2816, 1, 0
        %v2833 = vand.u32 %v2817, 65535
        %v2834 = vshrl.u32 %v2817, 16
        %v2835 = vcvt.s32.f32 %v2833
        %v2836 = vcvt.s32.f32 %v2834
        %2837 = vadd.xlane.f32.xlu0 %v2835
        %v2838 = vpop.xlane.xlu0 %2837
        %2839 = vadd.xlane.f32.xlu0 %v2836
        %v2840 = vpop.xlane.xlu0 %2839
        %v2841 = vcvt.f32.s32 %v2838
        %v2842 = vcvt.f32.s32 %v2840
        %v2843 = vshll.u32 %v2842, 16
        %v2844 = vadd.s32 %v2843, %v2841
        %v2845 = vand.u32 %v2818, 65535
        %v2846 = vshrl.u32 %v2818, 16
        %v2847 = vcvt.s32.f32 %v2845
        %v2848 = vcvt.s32.f32 %v2846
        %2849 = vadd.xlane.f32.xlu0 %v2847
        %v2850 = vpop.xlane.xlu0 %2849
        %2851 = vadd.xlane.f32.xlu0 %v2848
        %v2852 = vpop.xlane.xlu0 %2851
        %v2853 = vcvt.f32.s32 %v2850
        %v2854 = vcvt.f32.s32 %v2852
        %v2855 = vshll.u32 %v2854, 16
        %v2856 = vadd.s32 %v2855, %v2853
        %v2857 = vand.u32 %v2819, 65535
        %v2858 = vshrl.u32 %v2819, 16
        %v2859 = vcvt.s32.f32 %v2857
        %v2860 = vcvt.s32.f32 %v2858
        %2861 = vadd.xlane.f32.xlu0 %v2859
        %v2862 = vpop.xlane.xlu0 %2861
        %2863 = vadd.xlane.f32.xlu0 %v2860
        %v2864 = vpop.xlane.xlu0 %2863
        %v2865 = vcvt.f32.s32 %v2862
        %v2866 = vcvt.f32.s32 %v2864
        %v2867 = vshll.u32 %v2866, 16
        %v2868 = vadd.s32 %v2867, %v2865
        %v2869 = vand.u32 %v2820, 65535
        %v2870 = vshrl.u32 %v2820, 16
        %v2871 = vcvt.s32.f32 %v2869
        %v2872 = vcvt.s32.f32 %v2870
        %2873 = vadd.xlane.f32.xlu0 %v2871
        %v2874 = vpop.xlane.xlu0 %2873
        %2875 = vadd.xlane.f32.xlu0 %v2872
        %v2876 = vpop.xlane.xlu0 %2875
        %v2877 = vcvt.f32.s32 %v2874
        %v2878 = vcvt.f32.s32 %v2876
        %v2879 = vshll.u32 %v2878, 16
        %v2880 = vadd.s32 %v2879, %v2877
        %v2881 = vand.u32 %v2821, 65535
        %v2882 = vshrl.u32 %v2821, 16
        %v2883 = vcvt.s32.f32 %v2881
        %v2884 = vcvt.s32.f32 %v2882
        %2885 = vadd.xlane.f32.xlu0 %v2883
        %v2886 = vpop.xlane.xlu0 %2885
        %2887 = vadd.xlane.f32.xlu0 %v2884
        %v2888 = vpop.xlane.xlu0 %2887
        %v2889 = vcvt.f32.s32 %v2886
        %v2890 = vcvt.f32.s32 %v2888
        %v2891 = vshll.u32 %v2890, 16
        %v2892 = vadd.s32 %v2891, %v2889
        %v2893 = vand.u32 %v2822, 65535
        %v2894 = vshrl.u32 %v2822, 16
        %v2895 = vcvt.s32.f32 %v2893
        %v2896 = vcvt.s32.f32 %v2894
        %2897 = vadd.xlane.f32.xlu0 %v2895
        %v2898 = vpop.xlane.xlu0 %2897
        %2899 = vadd.xlane.f32.xlu0 %v2896
        %v2900 = vpop.xlane.xlu0 %2899
        %v2901 = vcvt.f32.s32 %v2898
        %v2902 = vcvt.f32.s32 %v2900
        %v2903 = vshll.u32 %v2902, 16
        %v2904 = vadd.s32 %v2903, %v2901
        %v2905 = vand.u32 %v2823, 65535
        %v2906 = vshrl.u32 %v2823, 16
        %v2907 = vcvt.s32.f32 %v2905
        %v2908 = vcvt.s32.f32 %v2906
        %2909 = vadd.xlane.f32.xlu0 %v2907
        %v2910 = vpop.xlane.xlu0 %2909
        %2911 = vadd.xlane.f32.xlu0 %v2908
        %v2912 = vpop.xlane.xlu0 %2911
        %v2913 = vcvt.f32.s32 %v2910
        %v2914 = vcvt.f32.s32 %v2912
        %v2915 = vshll.u32 %v2914, 16
        %v2916 = vadd.s32 %v2915, %v2913
        %v2917 = vand.u32 %v2824, 65535
        %v2918 = vshrl.u32 %v2824, 16
        %v2919 = vcvt.s32.f32 %v2917
        %v2920 = vcvt.s32.f32 %v2918
        %2921 = vadd.xlane.f32.xlu0 %v2919
        %v2922 = vpop.xlane.xlu0 %2921
        %2923 = vadd.xlane.f32.xlu0 %v2920
        %v2924 = vpop.xlane.xlu0 %2923
        %v2925 = vcvt.f32.s32 %v2922
        %v2926 = vcvt.f32.s32 %v2924
        %v2927 = vshll.u32 %v2926, 16
        %v2928 = vadd.s32 %v2927, %v2925
        %v2929 = vand.u32 %v2825, 65535
        %v2930 = vshrl.u32 %v2825, 16
        %v2931 = vcvt.s32.f32 %v2929
        %v2932 = vcvt.s32.f32 %v2930
        %2933 = vadd.xlane.f32.xlu0 %v2931
        %v2934 = vpop.xlane.xlu0 %2933
        %2935 = vadd.xlane.f32.xlu0 %v2932
        %v2936 = vpop.xlane.xlu0 %2935
        %v2937 = vcvt.f32.s32 %v2934
        %v2938 = vcvt.f32.s32 %v2936
        %v2939 = vshll.u32 %v2938, 16
        %v2940 = vadd.s32 %v2939, %v2937
        %v2941 = vand.u32 %v2826, 65535
        %v2942 = vshrl.u32 %v2826, 16
        %v2943 = vcvt.s32.f32 %v2941
        %v2944 = vcvt.s32.f32 %v2942
        %2945 = vadd.xlane.f32.xlu0 %v2943
        %v2946 = vpop.xlane.xlu0 %2945
        %2947 = vadd.xlane.f32.xlu0 %v2944
        %v2948 = vpop.xlane.xlu0 %2947
        %v2949 = vcvt.f32.s32 %v2946
        %v2950 = vcvt.f32.s32 %v2948
        %v2951 = vshll.u32 %v2950, 16
        %v2952 = vadd.s32 %v2951, %v2949
        %v2953 = vand.u32 %v2827, 65535
        %v2954 = vshrl.u32 %v2827, 16
        %v2955 = vcvt.s32.f32 %v2953
        %v2956 = vcvt.s32.f32 %v2954
        %2957 = vadd.xlane.f32.xlu0 %v2955
        %v2958 = vpop.xlane.xlu0 %2957
        %2959 = vadd.xlane.f32.xlu0 %v2956
        %v2960 = vpop.xlane.xlu0 %2959
        %v2961 = vcvt.f32.s32 %v2958
        %v2962 = vcvt.f32.s32 %v2960
        %v2963 = vshll.u32 %v2962, 16
        %v2964 = vadd.s32 %v2963, %v2961
        %v2965 = vand.u32 %v2828, 65535
        %v2966 = vshrl.u32 %v2828, 16
        %v2967 = vcvt.s32.f32 %v2965
        %v2968 = vcvt.s32.f32 %v2966
        %2969 = vadd.xlane.f32.xlu0 %v2967
        %v2970 = vpop.xlane.xlu0 %2969
        %2971 = vadd.xlane.f32.xlu0 %v2968
        %v2972 = vpop.xlane.xlu0 %2971
        %v2973 = vcvt.f32.s32 %v2970
        %v2974 = vcvt.f32.s32 %v2972
        %v2975 = vshll.u32 %v2974, 16
        %v2976 = vadd.s32 %v2975, %v2973
        %v2977 = vand.u32 %v2829, 65535
        %v2978 = vshrl.u32 %v2829, 16
        %v2979 = vcvt.s32.f32 %v2977
        %v2980 = vcvt.s32.f32 %v2978
        %2981 = vadd.xlane.f32.xlu0 %v2979
        %v2982 = vpop.xlane.xlu0 %2981
        %2983 = vadd.xlane.f32.xlu0 %v2980
        %v2984 = vpop.xlane.xlu0 %2983
        %v2985 = vcvt.f32.s32 %v2982
        %v2986 = vcvt.f32.s32 %v2984
        %v2987 = vshll.u32 %v2986, 16
        %v2988 = vadd.s32 %v2987, %v2985
        %v2989 = vand.u32 %v2830, 65535
        %v2990 = vshrl.u32 %v2830, 16
        %v2991 = vcvt.s32.f32 %v2989
        %v2992 = vcvt.s32.f32 %v2990
        %2993 = vadd.xlane.f32.xlu0 %v2991
        %v2994 = vpop.xlane.xlu0 %2993
        %2995 = vadd.xlane.f32.xlu0 %v2992
        %v2996 = vpop.xlane.xlu0 %2995
        %v2997 = vcvt.f32.s32 %v2994
        %v2998 = vcvt.f32.s32 %v2996
        %v2999 = vshll.u32 %v2998, 16
        %v3000 = vadd.s32 %v2999, %v2997
        %v3001 = vand.u32 %v2831, 65535
        %v3002 = vshrl.u32 %v2831, 16
        %v3003 = vcvt.s32.f32 %v3001
        %v3004 = vcvt.s32.f32 %v3002
        %3005 = vadd.xlane.f32.xlu0 %v3003
        %v3006 = vpop.xlane.xlu0 %3005
        %3007 = vadd.xlane.f32.xlu0 %v3004
        %v3008 = vpop.xlane.xlu0 %3007
        %v3009 = vcvt.f32.s32 %v3006
        %v3010 = vcvt.f32.s32 %v3008
        %v3011 = vshll.u32 %v3010, 16
        %v3012 = vadd.s32 %v3011, %v3009
        %v3013 = vand.u32 %v2832, 65535
        %v3014 = vshrl.u32 %v2832, 16
        %v3015 = vcvt.s32.f32 %v3013
        %v3016 = vcvt.s32.f32 %v3014
        %3017 = vadd.xlane.f32.xlu0 %v3015
        %v3018 = vpop.xlane.xlu0 %3017
        %3019 = vadd.xlane.f32.xlu0 %v3016
        %v3020 = vpop.xlane.xlu0 %3019
        %v3021 = vcvt.f32.s32 %v3018
        %v3022 = vcvt.f32.s32 %v3020
        %v3023 = vshll.u32 %v3022, 16
        %v3024 = vadd.s32 %v3023, %v3021
        %v3025 = vadd.s32 %v2211, %v2844
        %v3026 = vadd.s32 %v2212, %v2856
        %v3027 = vadd.s32 %v2213, %v2868
        %v3028 = vadd.s32 %v2214, %v2880
        %v3029 = vadd.s32 %v2215, %v2892
        %v3030 = vadd.s32 %v2216, %v2904
        %v3031 = vadd.s32 %v2217, %v2916
        %v3032 = vadd.s32 %v2218, %v2928
        %v3033 = vadd.s32 %v2219, %v2940
        %v3034 = vadd.s32 %v2220, %v2952
        %v3035 = vadd.s32 %v2221, %v2964
        %v3036 = vadd.s32 %v2222, %v2976
        %v3037 = vadd.s32 %v2223, %v2988
        %v3038 = vadd.s32 %v2224, %v3000
        %v3039 = vadd.s32 %v2225, %v3012
        %v3040 = vadd.s32 %v2226, %v3024
        %vm3041 = vcmp.le.f32.partialorder %v2785, 12.25
        %vm3042 = vcmp.le.f32.partialorder %v2786, 12.25
        %vm3043 = vcmp.le.f32.partialorder %v2787, 12.25
        %vm3044 = vcmp.le.f32.partialorder %v2788, 12.25
        %vm3045 = vcmp.le.f32.partialorder %v2789, 12.25
        %vm3046 = vcmp.le.f32.partialorder %v2790, 12.25
        %vm3047 = vcmp.le.f32.partialorder %v2791, 12.25
        %vm3048 = vcmp.le.f32.partialorder %v2792, 12.25
        %vm3049 = vcmp.le.f32.partialorder %v2793, 12.25
        %vm3050 = vcmp.le.f32.partialorder %v2794, 12.25
        %vm3051 = vcmp.le.f32.partialorder %v2795, 12.25
        %vm3052 = vcmp.le.f32.partialorder %v2796, 12.25
        %vm3053 = vcmp.le.f32.partialorder %v2797, 12.25
        %vm3054 = vcmp.le.f32.partialorder %v2798, 12.25
        %vm3055 = vcmp.le.f32.partialorder %v2799, 12.25
        %vm3056 = vcmp.le.f32.partialorder %v2800, 12.25
        %v3057 = vsel %vm3041, 1, 0
        %v3058 = vsel %vm3042, 1, 0
        %v3059 = vsel %vm3043, 1, 0
        %v3060 = vsel %vm3044, 1, 0
        %v3061 = vsel %vm3045, 1, 0
        %v3062 = vsel %vm3046, 1, 0
        %v3063 = vsel %vm3047, 1, 0
        %v3064 = vsel %vm3048, 1, 0
        %v3065 = vsel %vm3049, 1, 0
        %v3066 = vsel %vm3050, 1, 0
        %v3067 = vsel %vm3051, 1, 0
        %v3068 = vsel %vm3052, 1, 0
        %v3069 = vsel %vm3053, 1, 0
        %v3070 = vsel %vm3054, 1, 0
        %v3071 = vsel %vm3055, 1, 0
        %v3072 = vsel %vm3056, 1, 0
        %v3073 = vadd.s32 %v2817, %v3057
        %v3074 = vadd.s32 %v2818, %v3058
        %v3075 = vadd.s32 %v2819, %v3059
        %v3076 = vadd.s32 %v2820, %v3060
        %v3077 = vadd.s32 %v2821, %v3061
        %v3078 = vadd.s32 %v2822, %v3062
        %v3079 = vadd.s32 %v2823, %v3063
        %v3080 = vadd.s32 %v2824, %v3064
        %v3081 = vadd.s32 %v2825, %v3065
        %v3082 = vadd.s32 %v2826, %v3066
        %v3083 = vadd.s32 %v2827, %v3067
        %v3084 = vadd.s32 %v2828, %v3068
        %v3085 = vadd.s32 %v2829, %v3069
        %v3086 = vadd.s32 %v2830, %v3070
        %v3087 = vadd.s32 %v2831, %v3071
        %v3088 = vadd.s32 %v2832, %v3072
        %v3089 = vand.u32 %v3057, 65535
        %v3090 = vshrl.u32 %v3057, 16
        %v3091 = vcvt.s32.f32 %v3089
        %v3092 = vcvt.s32.f32 %v3090
        %3093 = vadd.xlane.f32.xlu0 %v3091
        %v3094 = vpop.xlane.xlu0 %3093
        %3095 = vadd.xlane.f32.xlu0 %v3092
        %v3096 = vpop.xlane.xlu0 %3095
        %v3097 = vcvt.f32.s32 %v3094
        %v3098 = vcvt.f32.s32 %v3096
        %v3099 = vshll.u32 %v3098, 16
        %v3100 = vadd.s32 %v3099, %v3097
        %v3101 = vand.u32 %v3058, 65535
        %v3102 = vshrl.u32 %v3058, 16
        %v3103 = vcvt.s32.f32 %v3101
        %v3104 = vcvt.s32.f32 %v3102
        %3105 = vadd.xlane.f32.xlu0 %v3103
        %v3106 = vpop.xlane.xlu0 %3105
        %3107 = vadd.xlane.f32.xlu0 %v3104
        %v3108 = vpop.xlane.xlu0 %3107
        %v3109 = vcvt.f32.s32 %v3106
        %v3110 = vcvt.f32.s32 %v3108
        %v3111 = vshll.u32 %v3110, 16
        %v3112 = vadd.s32 %v3111, %v3109
        %v3113 = vand.u32 %v3059, 65535
        %v3114 = vshrl.u32 %v3059, 16
        %v3115 = vcvt.s32.f32 %v3113
        %v3116 = vcvt.s32.f32 %v3114
        %3117 = vadd.xlane.f32.xlu0 %v3115
        %v3118 = vpop.xlane.xlu0 %3117
        %3119 = vadd.xlane.f32.xlu0 %v3116
        %v3120 = vpop.xlane.xlu0 %3119
        %v3121 = vcvt.f32.s32 %v3118
        %v3122 = vcvt.f32.s32 %v3120
        %v3123 = vshll.u32 %v3122, 16
        %v3124 = vadd.s32 %v3123, %v3121
        %v3125 = vand.u32 %v3060, 65535
        %v3126 = vshrl.u32 %v3060, 16
        %v3127 = vcvt.s32.f32 %v3125
        %v3128 = vcvt.s32.f32 %v3126
        %3129 = vadd.xlane.f32.xlu0 %v3127
        %v3130 = vpop.xlane.xlu0 %3129
        %3131 = vadd.xlane.f32.xlu0 %v3128
        %v3132 = vpop.xlane.xlu0 %3131
        %v3133 = vcvt.f32.s32 %v3130
        %v3134 = vcvt.f32.s32 %v3132
        %v3135 = vshll.u32 %v3134, 16
        %v3136 = vadd.s32 %v3135, %v3133
        %v3137 = vand.u32 %v3061, 65535
        %v3138 = vshrl.u32 %v3061, 16
        %v3139 = vcvt.s32.f32 %v3137
        %v3140 = vcvt.s32.f32 %v3138
        %3141 = vadd.xlane.f32.xlu0 %v3139
        %v3142 = vpop.xlane.xlu0 %3141
        %3143 = vadd.xlane.f32.xlu0 %v3140
        %v3144 = vpop.xlane.xlu0 %3143
        %v3145 = vcvt.f32.s32 %v3142
        %v3146 = vcvt.f32.s32 %v3144
        %v3147 = vshll.u32 %v3146, 16
        %v3148 = vadd.s32 %v3147, %v3145
        %v3149 = vand.u32 %v3062, 65535
        %v3150 = vshrl.u32 %v3062, 16
        %v3151 = vcvt.s32.f32 %v3149
        %v3152 = vcvt.s32.f32 %v3150
        %3153 = vadd.xlane.f32.xlu0 %v3151
        %v3154 = vpop.xlane.xlu0 %3153
        %3155 = vadd.xlane.f32.xlu0 %v3152
        %v3156 = vpop.xlane.xlu0 %3155
        %v3157 = vcvt.f32.s32 %v3154
        %v3158 = vcvt.f32.s32 %v3156
        %v3159 = vshll.u32 %v3158, 16
        %v3160 = vadd.s32 %v3159, %v3157
        %v3161 = vand.u32 %v3063, 65535
        %v3162 = vshrl.u32 %v3063, 16
        %v3163 = vcvt.s32.f32 %v3161
        %v3164 = vcvt.s32.f32 %v3162
        %3165 = vadd.xlane.f32.xlu0 %v3163
        %v3166 = vpop.xlane.xlu0 %3165
        %3167 = vadd.xlane.f32.xlu0 %v3164
        %v3168 = vpop.xlane.xlu0 %3167
        %v3169 = vcvt.f32.s32 %v3166
        %v3170 = vcvt.f32.s32 %v3168
        %v3171 = vshll.u32 %v3170, 16
        %v3172 = vadd.s32 %v3171, %v3169
        %v3173 = vand.u32 %v3064, 65535
        %v3174 = vshrl.u32 %v3064, 16
        %v3175 = vcvt.s32.f32 %v3173
        %v3176 = vcvt.s32.f32 %v3174
        %3177 = vadd.xlane.f32.xlu0 %v3175
        %v3178 = vpop.xlane.xlu0 %3177
        %3179 = vadd.xlane.f32.xlu0 %v3176
        %v3180 = vpop.xlane.xlu0 %3179
        %v3181 = vcvt.f32.s32 %v3178
        %v3182 = vcvt.f32.s32 %v3180
        %v3183 = vshll.u32 %v3182, 16
        %v3184 = vadd.s32 %v3183, %v3181
        %v3185 = vand.u32 %v3065, 65535
        %v3186 = vshrl.u32 %v3065, 16
        %v3187 = vcvt.s32.f32 %v3185
        %v3188 = vcvt.s32.f32 %v3186
        %3189 = vadd.xlane.f32.xlu0 %v3187
        %v3190 = vpop.xlane.xlu0 %3189
        %3191 = vadd.xlane.f32.xlu0 %v3188
        %v3192 = vpop.xlane.xlu0 %3191
        %v3193 = vcvt.f32.s32 %v3190
        %v3194 = vcvt.f32.s32 %v3192
        %v3195 = vshll.u32 %v3194, 16
        %v3196 = vadd.s32 %v3195, %v3193
        %v3197 = vand.u32 %v3066, 65535
        %v3198 = vshrl.u32 %v3066, 16
        %v3199 = vcvt.s32.f32 %v3197
        %v3200 = vcvt.s32.f32 %v3198
        %3201 = vadd.xlane.f32.xlu0 %v3199
        %v3202 = vpop.xlane.xlu0 %3201
        %3203 = vadd.xlane.f32.xlu0 %v3200
        %v3204 = vpop.xlane.xlu0 %3203
        %v3205 = vcvt.f32.s32 %v3202
        %v3206 = vcvt.f32.s32 %v3204
        %v3207 = vshll.u32 %v3206, 16
        %v3208 = vadd.s32 %v3207, %v3205
        %v3209 = vand.u32 %v3067, 65535
        %v3210 = vshrl.u32 %v3067, 16
        %v3211 = vcvt.s32.f32 %v3209
        %v3212 = vcvt.s32.f32 %v3210
        %3213 = vadd.xlane.f32.xlu0 %v3211
        %v3214 = vpop.xlane.xlu0 %3213
        %3215 = vadd.xlane.f32.xlu0 %v3212
        %v3216 = vpop.xlane.xlu0 %3215
        %v3217 = vcvt.f32.s32 %v3214
        %v3218 = vcvt.f32.s32 %v3216
        %v3219 = vshll.u32 %v3218, 16
        %v3220 = vadd.s32 %v3219, %v3217
        %v3221 = vand.u32 %v3068, 65535
        %v3222 = vshrl.u32 %v3068, 16
        %v3223 = vcvt.s32.f32 %v3221
        %v3224 = vcvt.s32.f32 %v3222
        %3225 = vadd.xlane.f32.xlu0 %v3223
        %v3226 = vpop.xlane.xlu0 %3225
        %3227 = vadd.xlane.f32.xlu0 %v3224
        %v3228 = vpop.xlane.xlu0 %3227
        %v3229 = vcvt.f32.s32 %v3226
        %v3230 = vcvt.f32.s32 %v3228
        %v3231 = vshll.u32 %v3230, 16
        %v3232 = vadd.s32 %v3231, %v3229
        %v3233 = vand.u32 %v3069, 65535
        %v3234 = vshrl.u32 %v3069, 16
        %v3235 = vcvt.s32.f32 %v3233
        %v3236 = vcvt.s32.f32 %v3234
        %3237 = vadd.xlane.f32.xlu0 %v3235
        %v3238 = vpop.xlane.xlu0 %3237
        %3239 = vadd.xlane.f32.xlu0 %v3236
        %v3240 = vpop.xlane.xlu0 %3239
        %v3241 = vcvt.f32.s32 %v3238
        %v3242 = vcvt.f32.s32 %v3240
        %v3243 = vshll.u32 %v3242, 16
        %v3244 = vadd.s32 %v3243, %v3241
        %v3245 = vand.u32 %v3070, 65535
        %v3246 = vshrl.u32 %v3070, 16
        %v3247 = vcvt.s32.f32 %v3245
        %v3248 = vcvt.s32.f32 %v3246
        %3249 = vadd.xlane.f32.xlu0 %v3247
        %v3250 = vpop.xlane.xlu0 %3249
        %3251 = vadd.xlane.f32.xlu0 %v3248
        %v3252 = vpop.xlane.xlu0 %3251
        %v3253 = vcvt.f32.s32 %v3250
        %v3254 = vcvt.f32.s32 %v3252
        %v3255 = vshll.u32 %v3254, 16
        %v3256 = vadd.s32 %v3255, %v3253
        %v3257 = vand.u32 %v3071, 65535
        %v3258 = vshrl.u32 %v3071, 16
        %v3259 = vcvt.s32.f32 %v3257
        %v3260 = vcvt.s32.f32 %v3258
        %3261 = vadd.xlane.f32.xlu0 %v3259
        %v3262 = vpop.xlane.xlu0 %3261
        %3263 = vadd.xlane.f32.xlu0 %v3260
        %v3264 = vpop.xlane.xlu0 %3263
        %v3265 = vcvt.f32.s32 %v3262
        %v3266 = vcvt.f32.s32 %v3264
        %v3267 = vshll.u32 %v3266, 16
        %v3268 = vadd.s32 %v3267, %v3265
        %v3269 = vand.u32 %v3072, 65535
        %v3270 = vshrl.u32 %v3072, 16
        %v3271 = vcvt.s32.f32 %v3269
        %v3272 = vcvt.s32.f32 %v3270
        %3273 = vadd.xlane.f32.xlu0 %v3271
        %v3274 = vpop.xlane.xlu0 %3273
        %3275 = vadd.xlane.f32.xlu0 %v3272
        %v3276 = vpop.xlane.xlu0 %3275
        %v3277 = vcvt.f32.s32 %v3274
        %v3278 = vcvt.f32.s32 %v3276
        %v3279 = vshll.u32 %v3278, 16
        %v3280 = vadd.s32 %v3279, %v3277
        %v3281 = vadd.s32 %v2467, %v3100
        %v3282 = vadd.s32 %v2468, %v3112
        %v3283 = vadd.s32 %v2469, %v3124
        %v3284 = vadd.s32 %v2470, %v3136
        %v3285 = vadd.s32 %v2471, %v3148
        %v3286 = vadd.s32 %v2472, %v3160
        %v3287 = vadd.s32 %v2473, %v3172
        %v3288 = vadd.s32 %v2474, %v3184
        %v3289 = vadd.s32 %v2475, %v3196
        %v3290 = vadd.s32 %v2476, %v3208
        %v3291 = vadd.s32 %v2477, %v3220
        %v3292 = vadd.s32 %v2478, %v3232
        %v3293 = vadd.s32 %v2479, %v3244
        %v3294 = vadd.s32 %v2480, %v3256
        %v3295 = vadd.s32 %v2481, %v3268
        %v3296 = vadd.s32 %v2482, %v3280
        %v3297 = vpack.c.b16 %v3074, %v3073
        %v3298 = vpack.c.b16 %v3076, %v3075
        %v3299 = vpack.c.b8 %v3298, %v3297
        %v3300 = vpack.c.b16 %v3078, %v3077
        %v3301 = vpack.c.b16 %v3080, %v3079
        %v3302 = vpack.c.b8 %v3301, %v3300
        %v3303 = vpack.c.b16 %v3082, %v3081
        %v3304 = vpack.c.b16 %v3084, %v3083
        %v3305 = vpack.c.b8 %v3304, %v3303
        %v3306 = vpack.c.b16 %v3086, %v3085
        %v3307 = vpack.c.b16 %v3088, %v3087
        %v3308 = vpack.c.b8 %v3307, %v3306
        %s3309 = scalar_lea.vmem %s441, 64 [#allocation11]
        %3310 = vst [vmem:[%s3309] sm:$0xff] %v3299
        %3311 = vst [vmem:[%s3309 + $0x8] sm:$0xff] %v3302
        %3312 = vst [vmem:[%s3309 + $0x10] sm:$0xff] %v3305
        %3313 = vst [vmem:[%s3309 + $0x18] sm:$0xff] %v3308
        %v3314 = vld [vmem:[%s492] sm:$0xff]
        %v3315 = vld [vmem:[%s492 + $0x8] sm:$0xff]
        %v3316 = vld [vmem:[%s492 + $0x10] sm:$0xff]
        %v3317 = vld [vmem:[%s492 + $0x18] sm:$0xff]
        %v3318 = vld [vmem:[%s492 + $0x20] sm:$0xff]
        %v3319 = vld [vmem:[%s492 + $0x28] sm:$0xff]
        %v3320 = vld [vmem:[%s492 + $0x30] sm:$0xff]
        %v3321 = vld [vmem:[%s492 + $0x38] sm:$0xff]
        %v3322 = vld [vmem:[%s492 + $0x40] sm:$0xff]
        %v3323 = vld [vmem:[%s492 + $0x48] sm:$0xff]
        %v3324 = vld [vmem:[%s492 + $0x50] sm:$0xff]
        %v3325 = vld [vmem:[%s492 + $0x58] sm:$0xff]
        %v3326 = vld [vmem:[%s492 + $0x60] sm:$0xff]
        %v3327 = vld [vmem:[%s492 + $0x68] sm:$0xff]
        %v3328 = vld [vmem:[%s492 + $0x70] sm:$0xff]
        %v3329 = vld [vmem:[%s492 + $0x78] sm:$0xff]
        %v3330 = vadd.s32 %v3314, %v3025
        %v3331 = vadd.s32 %v3315, %v3026
        %v3332 = vadd.s32 %v3316, %v3027
        %v3333 = vadd.s32 %v3317, %v3028
        %v3334 = vadd.s32 %v3318, %v3029
        %v3335 = vadd.s32 %v3319, %v3030
        %v3336 = vadd.s32 %v3320, %v3031
        %v3337 = vadd.s32 %v3321, %v3032
        %v3338 = vadd.s32 %v3322, %v3033
        %v3339 = vadd.s32 %v3323, %v3034
        %v3340 = vadd.s32 %v3324, %v3035
        %v3341 = vadd.s32 %v3325, %v3036
        %v3342 = vadd.s32 %v3326, %v3037
        %v3343 = vadd.s32 %v3327, %v3038
        %v3344 = vadd.s32 %v3328, %v3039
        %v3345 = vadd.s32 %v3329, %v3040
        %vm3346 = vcmask 7168
        %3347 = vst.msk [vmem:[%s492] sm:$0xff] %vm3346, %v3330
        %3348 = vst.msk [vmem:[%s492 + $0x8] sm:$0xff] %vm3346, %v3331
        %3349 = vst.msk [vmem:[%s492 + $0x10] sm:$0xff] %vm3346, %v3332
        %3350 = vst.msk [vmem:[%s492 + $0x18] sm:$0xff] %vm3346, %v3333
        %3351 = vst.msk [vmem:[%s492 + $0x20] sm:$0xff] %vm3346, %v3334
        %3352 = vst.msk [vmem:[%s492 + $0x28] sm:$0xff] %vm3346, %v3335
        %3353 = vst.msk [vmem:[%s492 + $0x30] sm:$0xff] %vm3346, %v3336
        %3354 = vst.msk [vmem:[%s492 + $0x38] sm:$0xff] %vm3346, %v3337
        %3355 = vst.msk [vmem:[%s492 + $0x40] sm:$0xff] %vm3346, %v3338
        %3356 = vst.msk [vmem:[%s492 + $0x48] sm:$0xff] %vm3346, %v3339
        %3357 = vst.msk [vmem:[%s492 + $0x50] sm:$0xff] %vm3346, %v3340
        %3358 = vst.msk [vmem:[%s492 + $0x58] sm:$0xff] %vm3346, %v3341
        %3359 = vst.msk [vmem:[%s492 + $0x60] sm:$0xff] %vm3346, %v3342
        %3360 = vst.msk [vmem:[%s492 + $0x68] sm:$0xff] %vm3346, %v3343
        %3361 = vst.msk [vmem:[%s492 + $0x70] sm:$0xff] %vm3346, %v3344
        %3362 = vst.msk [vmem:[%s492 + $0x78] sm:$0xff] %vm3346, %v3345
        %v3363 = vld [vmem:[%s502] sm:$0xff]
        %v3364 = vld [vmem:[%s502 + $0x8] sm:$0xff]
        %v3365 = vld [vmem:[%s502 + $0x10] sm:$0xff]
        %v3366 = vld [vmem:[%s502 + $0x18] sm:$0xff]
        %v3367 = vld [vmem:[%s502 + $0x20] sm:$0xff]
        %v3368 = vld [vmem:[%s502 + $0x28] sm:$0xff]
        %v3369 = vld [vmem:[%s502 + $0x30] sm:$0xff]
        %v3370 = vld [vmem:[%s502 + $0x38] sm:$0xff]
        %v3371 = vld [vmem:[%s502 + $0x40] sm:$0xff]
        %v3372 = vld [vmem:[%s502 + $0x48] sm:$0xff]
        %v3373 = vld [vmem:[%s502 + $0x50] sm:$0xff]
        %v3374 = vld [vmem:[%s502 + $0x58] sm:$0xff]
        %v3375 = vld [vmem:[%s502 + $0x60] sm:$0xff]
        %v3376 = vld [vmem:[%s502 + $0x68] sm:$0xff]
        %v3377 = vld [vmem:[%s502 + $0x70] sm:$0xff]
        %v3378 = vld [vmem:[%s502 + $0x78] sm:$0xff]
        %v3379 = vadd.s32 %v3363, %v3281
        %v3380 = vadd.s32 %v3364, %v3282
        %v3381 = vadd.s32 %v3365, %v3283
        %v3382 = vadd.s32 %v3366, %v3284
        %v3383 = vadd.s32 %v3367, %v3285
        %v3384 = vadd.s32 %v3368, %v3286
        %v3385 = vadd.s32 %v3369, %v3287
        %v3386 = vadd.s32 %v3370, %v3288
        %v3387 = vadd.s32 %v3371, %v3289
        %v3388 = vadd.s32 %v3372, %v3290
        %v3389 = vadd.s32 %v3373, %v3291
        %v3390 = vadd.s32 %v3374, %v3292
        %v3391 = vadd.s32 %v3375, %v3293
        %v3392 = vadd.s32 %v3376, %v3294
        %v3393 = vadd.s32 %v3377, %v3295
        %v3394 = vadd.s32 %v3378, %v3296
        %3395 = vst.msk [vmem:[%s502] sm:$0xff] %vm3346, %v3379
        %3396 = vst.msk [vmem:[%s502 + $0x8] sm:$0xff] %vm3346, %v3380
        %3397 = vst.msk [vmem:[%s502 + $0x10] sm:$0xff] %vm3346, %v3381
        %3398 = vst.msk [vmem:[%s502 + $0x18] sm:$0xff] %vm3346, %v3382
        %3399 = vst.msk [vmem:[%s502 + $0x20] sm:$0xff] %vm3346, %v3383
        %3400 = vst.msk [vmem:[%s502 + $0x28] sm:$0xff] %vm3346, %v3384
        %3401 = vst.msk [vmem:[%s502 + $0x30] sm:$0xff] %vm3346, %v3385
        %3402 = vst.msk [vmem:[%s502 + $0x38] sm:$0xff] %vm3346, %v3386
        %3403 = vst.msk [vmem:[%s502 + $0x40] sm:$0xff] %vm3346, %v3387
        %3404 = vst.msk [vmem:[%s502 + $0x48] sm:$0xff] %vm3346, %v3388
        %3405 = vst.msk [vmem:[%s502 + $0x50] sm:$0xff] %vm3346, %v3389
        %3406 = vst.msk [vmem:[%s502 + $0x58] sm:$0xff] %vm3346, %v3390
        %3407 = vst.msk [vmem:[%s502 + $0x60] sm:$0xff] %vm3346, %v3391
        %3408 = vst.msk [vmem:[%s502 + $0x68] sm:$0xff] %vm3346, %v3392
        %3409 = vst.msk [vmem:[%s502 + $0x70] sm:$0xff] %vm3346, %v3393
        %3410 = vst.msk [vmem:[%s502 + $0x78] sm:$0xff] %vm3346, %v3394
        %s3411 = sand.u32 %s177, 1
        %s3412 = scalar_lea.sflag [#allocation3], %s3411
        %s3413 = sand.u32 %s177, 1
        %s3414 = smul.addr %s3413, 576
        %s3415 = scalar_lea.vmem [#allocation8], %s3414
        %s3416 = sand.u32 %s29, 1
        %s3417 = scalar_lea.sflag [#allocation10], %s3416
        %s3418 = sand.u32 %s207, 1
        %s3419 = smul.addr %s3418, 384
        %s3420 = scalar_lea.vmem [#allocation9], %s3419
        %s3421 = sand.u32 %s29, 1
        %s3422 = scalar_lea.sflag [#allocation10], %s3421
        %s3423 = sand.u32 %s237, 1
        %s3424 = smul.addr %s3423, 96
        %s3425 = scalar_lea.vmem [#allocation11], %s3424
        %s3426 = smul.u32 16, %s35
        %p3427 = scmp.lt.s32.totalorder %s34, 1
        %s3428 = scalar_select %p3427, %s34, 1
        %p3429 = scmp.lt.s32.totalorder %s3426, 15
        %s3430 = scalar_select %p3429, %s3426, 15
        %s3431 = smul.addr %s3428, 16
        %s3432 = sadd.s32 %s3430, %s3431
        %s3433 = smul.addr %s3432, 8
        %s3434 = scalar_lea.vmem %s8, %s3433
        %s3435 = smul.u32 16, %s35
        %p3436 = scmp.lt.s32.totalorder %s34, 1
        %s3437 = scalar_select %p3436, %s34, 1
        %p3438 = scmp.lt.s32.totalorder %s3435, 15
        %s3439 = scalar_select %p3438, %s3435, 15
        %s3440 = smul.addr %s3437, 16
        %s3441 = sadd.s32 %s3439, %s3440
        %s3442 = smul.addr %s3441, 8
        %s3443 = scalar_lea.vmem %s9, %s3442
        // Predicated region
        $region57: #{tpu_custom_call.1} parent=39 // pred_check
          %p3444 = pneg %p187
        $region58: #{tpu_custom_call.1} parent=39 // pred_check_branch
          %3446 = sbr.rel (%p3444) target = $region60
        $region59: #{tpu_custom_call.1} parent=39 // pred_region
          %s3447 = smul.u32 3, %s36
          %s3448 = smul.u32 8, %s35
          %s3450 = ssub.s32 9216, 9216
          %3451 = vsyncadd %s3412, %s3450
          %s3452 = smul.addr %s3447, 24
          %s3453 = sadd.s32 %s3448, %s3452
          %s3454 = smul.addr %s34, 72
          %s3455 = sadd.s32 %s3453, %s3454
          %s3456 = smul.addr %s3455, 128
          %s3457 = scalar_lea.hbm %s5, %s3456
          %s3458 = sshll.u32 %s3415, 4
          %s3459 = int_to_ptr.vmem [resolvable:$true] %s3458
          %3464 = dma.vmem_to_hbm [thread:$0]  %s3459, 9216, %s3457, %s3412, 128, 128, 8
        $region60: #{tpu_custom_call.1} parent=39 // pred_fallthru
          _
        // Predicated region
        $region61: #{tpu_custom_call.1} parent=39 // pred_check
          %p3465 = pneg %p217
        $region62: #{tpu_custom_call.1} parent=39 // pred_check_branch
          %3467 = sbr.rel (%p3465) target = $region64
        $region63: #{tpu_custom_call.1} parent=39 // pred_region
          %s3468 = smul.u32 3, %s36
          %s3469 = smul.u32 16, %s35
          %s3471 = ssub.s32 6144, 6144
          %3472 = vsyncadd %s3417, %s3471
          %s3473 = smul.addr %s3468, 16
          %s3474 = sadd.s32 %s3469, %s3473
          %s3475 = smul.addr %s34, 48
          %s3476 = sadd.s32 %s3474, %s3475
          %s3477 = smul.addr %s3476, 128
          %s3478 = scalar_lea.hbm %s6, %s3477
          %s3479 = sshll.u32 %s3420, 4
          %s3480 = int_to_ptr.vmem [resolvable:$true] %s3479
          %3485 = dma.vmem_to_hbm [thread:$0]  %s3480, 6144, %s3478, %s3417, 128, 128, 8
        $region64: #{tpu_custom_call.1} parent=39 // pred_fallthru
          _
        // Predicated region
        $region65: #{tpu_custom_call.1} parent=39 // pred_check
          %p3486 = pneg %p247
        $region66: #{tpu_custom_call.1} parent=39 // pred_check_branch
          %3488 = sbr.rel (%p3486) target = $region68
        $region67: #{tpu_custom_call.1} parent=39 // pred_region
          %s3489 = smul.u32 3, %s36
          %s3490 = smul.u32 4, %s35
          %s3492 = ssub.s32 1536, 1536
          %3493 = vsyncadd %s3422, %s3492
          %s3494 = smul.addr %s3489, 4
          %s3495 = sadd.s32 %s3490, %s3494
          %s3496 = smul.addr %s34, 12
          %s3497 = sadd.s32 %s3495, %s3496
          %s3498 = smul.addr %s3497, 128
          %s3499 = scalar_lea.hbm %s7, %s3498
          %s3500 = sshll.u32 %s3425, 4
          %s3501 = int_to_ptr.vmem [resolvable:$true] %s3500
          %3506 = dma.vmem_to_hbm [thread:$0]  %s3501, 1536, %s3499, %s3422, 128, 128, 8
        $region68: #{tpu_custom_call.1} parent=39 // pred_fallthru
          _
        // Predicated region
        $region69: #{tpu_custom_call.1} parent=39 // pred_check
          %p3507 = pneg %p275
        $region70: #{tpu_custom_call.1} parent=39 // pred_check_branch
          %3509 = sbr.rel (%p3507) target = $region72
        $region71: #{tpu_custom_call.1} parent=39 // pred_region
          %s3510 = smul.u32 16, %s35
        $region72: #{tpu_custom_call.1} parent=39 // pred_fallthru
          _
        // Predicated region
        $region73: #{tpu_custom_call.1} parent=39 // pred_check
          %p3511 = pneg %p303
        $region74: #{tpu_custom_call.1} parent=39 // pred_check_branch
          %3513 = sbr.rel (%p3511) target = $region76
        $region75: #{tpu_custom_call.1} parent=39 // pred_region
          %s3514 = smul.u32 16, %s35
        $region76: #{tpu_custom_call.1} parent=39 // pred_fallthru
          _
      $region40: #{tpu_custom_call.1} parent=5 // pred_fallthru
        _
      %p3515 = scmp.le.s32.totalorder 2, %s24
      // Predicated region
      $region77: #{tpu_custom_call.1} parent=5 // pred_check
        %p3516 = pneg %p3515
      $region78: #{tpu_custom_call.1} parent=5 // pred_check_branch
        %3518 = sbr.rel (%p3516) target = $region80
      $region79: #{tpu_custom_call.1} parent=5 // pred_region
        %s3519 = ssub.s32 %s24, 2
        // Predicated region
        $region81: #{tpu_custom_call.1} parent=79 // pred_check
          %p3520 = pneg %p193
        $region82: #{tpu_custom_call.1} parent=79 // pred_check_branch
          %3522 = sbr.rel (%p3520) target = $region84
        $region83: #{tpu_custom_call.1} parent=79 // pred_region
          %s3523 = sand.u32 %s178, 1
          %s3524 = scalar_lea.sflag [#allocation3], %s3523
          %s3525 = sand.u32 %s178, 1
          %s3526 = smul.addr %s3525, 576
          %s3527 = scalar_lea.vmem [#allocation8], %s3526
          %3528 = dma.done %s3524, 9216
        $region84: #{tpu_custom_call.1} parent=79 // pred_fallthru
          _
        // Predicated region
        $region85: #{tpu_custom_call.1} parent=79 // pred_check
          %p3529 = pneg %p223
        $region86: #{tpu_custom_call.1} parent=79 // pred_check_branch
          %3531 = sbr.rel (%p3529) target = $region88
        $region87: #{tpu_custom_call.1} parent=79 // pred_region
          %s3532 = sand.u32 %s30, 1
          %s3533 = scalar_lea.sflag [#allocation10], %s3532
          %s3534 = sand.u32 %s208, 1
          %s3535 = smul.addr %s3534, 384
          %s3536 = scalar_lea.vmem [#allocation9], %s3535
          %3537 = dma.done %s3533, 6144
        $region88: #{tpu_custom_call.1} parent=79 // pred_fallthru
          _
        // Predicated region
        $region89: #{tpu_custom_call.1} parent=79 // pred_check
          %p3538 = pneg %p253
        $region90: #{tpu_custom_call.1} parent=79 // pred_check_branch
          %3540 = sbr.rel (%p3538) target = $region92
        $region91: #{tpu_custom_call.1} parent=79 // pred_region
          %s3541 = sand.u32 %s30, 1
          %s3542 = scalar_lea.sflag [#allocation10], %s3541
          %s3543 = sand.u32 %s238, 1
          %s3544 = smul.addr %s3543, 96
          %s3545 = scalar_lea.vmem [#allocation11], %s3544
          %3546 = dma.done %s3542, 1536
        $region92: #{tpu_custom_call.1} parent=79 // pred_fallthru
          _
        // Predicated region
        $region93: #{tpu_custom_call.1} parent=79 // pred_check
          %p3547 = pneg %p281
        $region94: #{tpu_custom_call.1} parent=79 // pred_check_branch
          %3549 = sbr.rel (%p3547) target = $region96
        $region95: #{tpu_custom_call.1} parent=79 // pred_region
          %s3550 = smul.u32 16, %s38
          %p3551 = scmp.lt.s32.totalorder %s37, 1
          %s3552 = scalar_select %p3551, %s37, 1
          %p3553 = scmp.lt.s32.totalorder %s3550, 15
          %s3554 = scalar_select %p3553, %s3550, 15
          %s3555 = smul.addr %s3552, 16
          %s3556 = sadd.s32 %s3554, %s3555
          %s3557 = smul.addr %s3556, 8
          %s3558 = scalar_lea.vmem %s8, %s3557
        $region96: #{tpu_custom_call.1} parent=79 // pred_fallthru
          _
        // Predicated region
        $region97: #{tpu_custom_call.1} parent=79 // pred_check
          %p3559 = pneg %p309
        $region98: #{tpu_custom_call.1} parent=79 // pred_check_branch
          %3561 = sbr.rel (%p3559) target = $region100
        $region99: #{tpu_custom_call.1} parent=79 // pred_region
          %s3562 = smul.u32 16, %s38
          %p3563 = scmp.lt.s32.totalorder %s37, 1
          %s3564 = scalar_select %p3563, %s37, 1
          %p3565 = scmp.lt.s32.totalorder %s3562, 15
          %s3566 = scalar_select %p3565, %s3562, 15
          %s3567 = smul.addr %s3564, 16
          %s3568 = sadd.s32 %s3566, %s3567
          %s3569 = smul.addr %s3568, 8
          %s3570 = scalar_lea.vmem %s9, %s3569
        $region100: #{tpu_custom_call.1} parent=79 // pred_fallthru
          _
      $region80: #{tpu_custom_call.1} parent=5 // pred_fallthru
        _
    $region6: #{tpu_custom_call.1} parent=1 // loop_footer
      %s28 = sadd.s32 1, %s24
    $region7: #{tpu_custom_call.1} parent=1 // loop_footer_branch
      %23 = sbr.rel target = $region3
    $region8: #{tpu_custom_call.1} parent=1 // loop_exit
      _
    %3571 = vsyncpa [#allocation3], 1
    %s3572 = scalar_lea.sflag [#allocation3], 1
    %3573 = vsyncpa %s3572, 1
    %3574 = vsyncpa [#allocation10], 1
    %s3575 = scalar_lea.sflag [#allocation10], 1
    %3576 = vsyncpa %s3575, 1
    %3577 = vsyncpa [#allocation4], 1
    %s3578 = scalar_lea.sflag [#allocation4], 1
    %3579 = vsyncpa %s3578, 1
    %3580 = vsyncpa [#allocation6], 1

</llo_original>
